<compile_context>
chip_gen: v6e
topology: v6e:2x2x1
jax: 0.10.0
libtpu: 0.0.40
codegen_flags: <defaults>
</compile_context>

<pallas_src>
import jax
import jax.numpy as jnp
from jax.experimental import pallas as pl
from jax.experimental.pallas import tpu as pltpu


DW_K = 5       # cv2 depthwise kernel size
DW_P = 2       # cv2 padding (autopad(5) == 2)
_LEFT = 8      # sublane-aligned left pad for the scratch interior store


def ghostconv_kernel(x_ref, w1_ref, s1_ref, b1_ref, dw_ref, s2_ref, b2_ref,
                     out_ref, ypad_ref):
    # x_ref:    (Bt, H, W, C1)        bf16 channels-last batch tile
    # w1_ref:   (C1, C_)              bf16 1x1 conv weight (transposed)
    # s1/b1:    (1, C_)               f32 folded BN of cv1
    # dw_ref:   (25, C_)              f32 depthwise 5x5 taps, row = dy*5 + dx
    # s2/b2:    (1, C_)               f32 folded BN of cv2
    # out_ref:  (Bt, H, W, 2*C_)      f32 concat([y, z], channel-last)
    # ypad_ref: (Bt, H+4, W+16, C_)   f32 scratch: zero-bordered copy of y
    Bt, H, W, C1 = x_ref.shape
    C_ = w1_ref.shape[1]

    # ---- cv1: 1x1 conv == per-pixel matmul on the MXU (bf16 in, f32 accumulate) ----
    x2d = x_ref[...].reshape(Bt * H * W, C1)
    y = jnp.dot(x2d, w1_ref[...], preferred_element_type=jnp.float32)   # (Bt*HW, C_)
    y = y * s1_ref[...] + b1_ref[...]            # folded BatchNorm (eval), f32
    y = y * jax.nn.sigmoid(y)                    # SiLU (sigmoid on EUP, mul on VPU)
    y4 = y.reshape(Bt, H, W, C_)
    out_ref[:, :, :, 0:C_] = y4.astype(out_ref.dtype)        # first half of the concat

    # ---- cv2: depthwise 5x5, stride 1, pad 2, on the VPU ----
    # Zero-bordered copy of y; the interior sits at sublane offset _LEFT so the
    # interior store below is aligned (unmasked vst).
    ypad_ref[...] = jnp.zeros_like(ypad_ref)
    ypad_ref[:, DW_P:DW_P + H, _LEFT:_LEFT + W, :] = y4
    yp = ypad_ref[...]                           # (Bt, H+4, W+16, C_)

    acc = jnp.zeros((Bt, H, W, C_), jnp.float32)
    for dy in range(DW_K):                       # 25 taps, statically unrolled
        for dx in range(DW_K):
            tap = dy * DW_K + dx
            w_tap = dw_ref[tap:tap + 1, :].reshape(1, 1, 1, C_)
            col0 = _LEFT - DW_P + dx             # 6..10
            acc = acc + yp[:, dy:dy + H, col0:col0 + W, :] * w_tap

    z = acc * s2_ref[...].reshape(1, 1, 1, C_) + b2_ref[...].reshape(1, 1, 1, C_)
    z = z * jax.nn.sigmoid(z)
    out_ref[:, :, :, C_:2 * C_] = z.astype(out_ref.dtype)    # second half of the concat


def _pick_batch_tile(B, target=8):
    """Images per grid step: amortize per-step overhead, keep >=2 grid steps when
    possible (v7x has 2 TensorCores), and keep the VMEM working set bounded."""
    bt = min(B, target)
    while B % bt != 0:
        bt -= 1
    if B // bt < 2 and bt > 1:
        bt = bt // 2
        while B % bt != 0:
            bt -= 1
    return max(bt, 1)


def ghostconv_forward(x_nchw,
                      cv1_w, bn1_gamma, bn1_beta, bn1_mean, bn1_var,
                      cv2_w, bn2_gamma, bn2_beta, bn2_mean, bn2_var,
                      eps=1e-5):
    """GhostConv(k=1, s=1) eval forward.  x_nchw: (B, C1, H, W) f32 -> (B, 2*C_, H, W) f32."""
    B, C1, H, W = x_nchw.shape
    C_ = cv1_w.shape[0]

    # Layout glue (plain XLA).  For best perf the producer should hand us
    # channels-last activations so this transpose copy disappears.
    x_nhwc = jnp.transpose(x_nchw, (0, 2, 3, 1)).astype(jnp.bfloat16)

    # 1x1 conv weight (C_, C1, 1, 1) -> (C1, C_), bf16 for the MXU.
    w1 = cv1_w.reshape(C_, C1).T.astype(jnp.bfloat16)

    # Fold eval-mode BatchNorm into per-channel scale/bias (kept f32).
    inv1 = bn1_gamma / jnp.sqrt(bn1_var + eps)
    s1 = inv1.reshape(1, C_).astype(jnp.float32)
    b1 = (bn1_beta - bn1_mean * inv1).reshape(1, C_).astype(jnp.float32)
    inv2 = bn2_gamma / jnp.sqrt(bn2_var + eps)
    s2 = inv2.reshape(1, C_).astype(jnp.float32)
    b2 = (bn2_beta - bn2_mean * inv2).reshape(1, C_).astype(jnp.float32)

    # Depthwise 5x5 weight (C_, 1, 5, 5) -> (25, C_), tap-major (dy*5 + dx).
    dw = cv2_w.reshape(C_, DW_K * DW_K).T.astype(jnp.float32)

    Bt = _pick_batch_tile(B)
    grid = (B // Bt,)

    out_nhwc = pl.pallas_call(
        ghostconv_kernel,
        out_shape=jax.ShapeDtypeStruct((B, H, W, 2 * C_), jnp.float32),
        grid_spec=pltpu.PrefetchScalarGridSpec(
            num_scalar_prefetch=0,
            grid=grid,
            in_specs=[
                pl.BlockSpec((Bt, H, W, C1), lambda b: (b, 0, 0, 0)),
                pl.BlockSpec((C1, C_), lambda b: (0, 0)),
                pl.BlockSpec((1, C_), lambda b: (0, 0)),
                pl.BlockSpec((1, C_), lambda b: (0, 0)),
                pl.BlockSpec((DW_K * DW_K, C_), lambda b: (0, 0)),
                pl.BlockSpec((1, C_), lambda b: (0, 0)),
                pl.BlockSpec((1, C_), lambda b: (0, 0)),
            ],
            out_specs=pl.BlockSpec((Bt, H, W, 2 * C_), lambda b: (b, 0, 0, 0)),
            scratch_shapes=[
                pltpu.VMEM((Bt, H + 2 * DW_P, W + 2 * _LEFT, C_), jnp.float32),
            ],
        ),
        compiler_params=pltpu.CompilerParams(
            dimension_semantics=("parallel",),
        ),
    )(x_nhwc, w1, s1, b1, dw, s2, b2)

    # Back to NCHW to match torch.cat((y, cv2(y)), dim=1) output layout (XLA glue).
    return jnp.transpose(out_nhwc, (0, 3, 1, 2))


def reference_forward(x_nchw,
                      cv1_w, bn1_gamma, bn1_beta, bn1_mean, bn1_var,
                      cv2_w, bn2_gamma, bn2_beta, bn2_mean, bn2_var,
                      eps=1e-5):
    """Pure-JAX f32 reference of the same eval-mode GhostConv forward."""
    C_ = cv1_w.shape[0]
    y = jax.lax.conv_general_dilated(
        x_nchw, cv1_w, window_strides=(1, 1), padding=[(0, 0), (0, 0)],
        dimension_numbers=("NCHW", "OIHW", "NCHW"))
    inv1 = bn1_gamma / jnp.sqrt(bn1_var + eps)
    y = y * inv1[None, :, None, None] + (bn1_beta - bn1_mean * inv1)[None, :, None, None]
    y = y * jax.nn.sigmoid(y)

    z = jax.lax.conv_general_dilated(
        y, cv2_w, window_strides=(1, 1), padding=[(DW_P, DW_P), (DW_P, DW_P)],
        dimension_numbers=("NCHW", "OIHW", "NCHW"), feature_group_count=C_)
    inv2 = bn2_gamma / jnp.sqrt(bn2_var + eps)
    z = z * inv2[None, :, None, None] + (bn2_beta - bn2_mean * inv2)[None, :, None, None]
    z = z * jax.nn.sigmoid(z)
    return jnp.concatenate([y, z], axis=1)


if __name__ == "__main__":
    # Small shapes consistent with GhostConv: x(B, c1, H, W) -> out(B, c2, H, W), c_ = c2 // 2
    B, C1, H, W = 2, 4, 16, 16
    C2 = 8
    C_ = C2 // 2

    key = jax.random.PRNGKey(0)
    ks = jax.random.split(key, 11)

    x = jax.random.normal(ks[0], (B, C1, H, W), dtype=jnp.float32)

    # cv1: Conv2d(C1, C_, 1, 1, 0, bias=False) + BN + SiLU
    cv1_w = 0.1 * jax.random.normal(ks[1], (C_, C1, 1, 1), dtype=jnp.float32)
    g1 = 1.0 + 0.1 * jax.random.normal(ks[2], (C_,), dtype=jnp.float32)
    be1 = 0.1 * jax.random.normal(ks[3], (C_,), dtype=jnp.float32)
    m1 = 0.1 * jax.random.normal(ks[4], (C_,), dtype=jnp.float32)
    v1 = jnp.abs(jax.random.normal(ks[5], (C_,), dtype=jnp.float32)) + 0.5

    # cv2: Conv2d(C_, C_, 5, 1, 2, groups=C_, bias=False) + BN + SiLU
    cv2_w = 0.1 * jax.random.normal(ks[6], (C_, 1, DW_K, DW_K), dtype=jnp.float32)
    g2 = 1.0 + 0.1 * jax.random.normal(ks[7], (C_,), dtype=jnp.float32)
    be2 = 0.1 * jax.random.normal(ks[8], (C_,), dtype=jnp.float32)
    m2 = 0.1 * jax.random.normal(ks[9], (C_,), dtype=jnp.float32)
    v2 = jnp.abs(jax.random.normal(ks[10], (C_,), dtype=jnp.float32)) + 0.5

    out = ghostconv_forward(x, cv1_w, g1, be1, m1, v1, cv2_w, g2, be2, m2, v2)
    out = jax.block_until_ready(out)

    ref = reference_forward(x, cv1_w, g1, be1, m1, v1, cv2_w, g2, be2, m2, v2)
    assert out.shape == (B, C2, H, W), out.shape
    # bf16 matmul operands with f32 accumulation vs f32 reference -> ~1e-2 tolerance.
    err = float(jnp.max(jnp.abs(out - ref)))
    assert jnp.allclose(out, ref, atol=3e-2, rtol=3e-2), err

    print("KERNEL_OK")
</pallas_src>

<mosaic_0001>
module attributes {stable_mosaic.version = 11 : i64} {
  func.func @ghostconv_kernel(%arg0: i32, %arg1: memref<1x16x16x4xbf16, #tpu.memory_space<vmem>>, %arg2: memref<4x4xbf16, #tpu.memory_space<vmem>>, %arg3: memref<1x4xf32, #tpu.memory_space<vmem>>, %arg4: memref<1x4xf32, #tpu.memory_space<vmem>>, %arg5: memref<25x4xf32, #tpu.memory_space<vmem>>, %arg6: memref<1x4xf32, #tpu.memory_space<vmem>>, %arg7: memref<1x4xf32, #tpu.memory_space<vmem>>, %arg8: memref<1x16x16x8xf32, #tpu.memory_space<vmem>>, %arg9: memref<1x20x32x4xf32, #tpu.memory_space<vmem>>) attributes {dimension_semantics = [#tpu.dimension_semantics<parallel>], iteration_bounds = array<i64: 2>, scalar_prefetch = 0 : i64, scratch_operands = 1 : i64, tpu.core_type = #tpu.core_type<tc>, window_params = [{transform_indices = @transform_0, window_bounds = array<i64: 1, 16, 16, 4>}, {pipeline_mode = #tpu.pipeline_mode<synchronous>, transform_indices = @transform_1, window_bounds = array<i64: 4, 4>}, {pipeline_mode = #tpu.pipeline_mode<synchronous>, transform_indices = @transform_2, window_bounds = array<i64: 1, 4>}, {pipeline_mode = #tpu.pipeline_mode<synchronous>, transform_indices = @transform_3, window_bounds = array<i64: 1, 4>}, {pipeline_mode = #tpu.pipeline_mode<synchronous>, transform_indices = @transform_4, window_bounds = array<i64: 25, 4>}, {pipeline_mode = #tpu.pipeline_mode<synchronous>, transform_indices = @transform_5, window_bounds = array<i64: 1, 4>}, {pipeline_mode = #tpu.pipeline_mode<synchronous>, transform_indices = @transform_6, window_bounds = array<i64: 1, 4>}, {transform_indices = @transform_7, window_bounds = array<i64: 1, 16, 16, 8>}]} {
    %c0 = arith.constant 0 : index
    %c0_0 = arith.constant 0 : index
    %c0_1 = arith.constant 0 : index
    %c0_2 = arith.constant 0 : index
    %0 = vector.load %arg1[%c0, %c0_0, %c0_1, %c0_2] : memref<1x16x16x4xbf16, #tpu.memory_space<vmem>>, vector<1x16x16x4xbf16>
    %1 = vector.shape_cast %0 : vector<1x16x16x4xbf16> to vector<256x4xbf16>
    %c0_3 = arith.constant 0 : index
    %c0_4 = arith.constant 0 : index
    %2 = vector.load %arg2[%c0_3, %c0_4] : memref<4x4xbf16, #tpu.memory_space<vmem>>, vector<4x4xbf16>
    %cst = arith.constant dense<0.000000e+00> : vector<256x4xf32>
    %3 = tpu.matmul %1, %2, %cst {dimension_numbers = #tpu.dot_dimension_numbers<[1], [0], [0], [1], [0, 0, 1, 1], [], []>} : vector<256x4xbf16>, vector<4x4xbf16>, vector<256x4xf32> -> vector<256x4xf32>
    %c0_5 = arith.constant 0 : index
    %c0_6 = arith.constant 0 : index
    %4 = vector.load %arg3[%c0_5, %c0_6] : memref<1x4xf32, #tpu.memory_space<vmem>>, vector<1x4xf32>
    %5 = vector.broadcast %4 : vector<1x4xf32> to vector<256x4xf32>
    %6 = arith.mulf %3, %5 : vector<256x4xf32>
    %c0_7 = arith.constant 0 : index
    %c0_8 = arith.constant 0 : index
    %7 = vector.load %arg4[%c0_7, %c0_8] : memref<1x4xf32, #tpu.memory_space<vmem>>, vector<1x4xf32>
    %8 = vector.broadcast %7 : vector<1x4xf32> to vector<256x4xf32>
    %9 = arith.addf %6, %8 : vector<256x4xf32>
    %10 = arith.negf %9 : vector<256x4xf32>
    %11 = math.exp %10 : vector<256x4xf32>
    %cst_9 = arith.constant 1.000000e+00 : f32
    %12 = vector.broadcast %cst_9 : f32 to vector<256x4xf32>
    %13 = arith.addf %12, %11 : vector<256x4xf32>
    %14 = arith.divf %12, %13 : vector<256x4xf32>
    %15 = arith.mulf %9, %14 : vector<256x4xf32>
    %16 = vector.shape_cast %15 : vector<256x4xf32> to vector<1x16x16x4xf32>
    %c0_10 = arith.constant 0 : index
    %c0_11 = arith.constant 0 : index
    %c0_12 = arith.constant 0 : index
    %c0_13 = arith.constant 0 : index
    %17 = vector.load %arg8[%c0_10, %c0_11, %c0_12, %c0_13] : memref<1x16x16x8xf32, #tpu.memory_space<vmem>>, vector<1x16x16x4xf32>
    tpu.vector_store %arg8[%c0_10, %c0_11, %c0_12, %c0_13], %16 {strides = array<i32>} : memref<1x16x16x8xf32, #tpu.memory_space<vmem>>, vector<1x16x16x4xf32>,
    %cst_14 = arith.constant 0.000000e+00 : f32
    %18 = vector.broadcast %cst_14 : f32 to vector<1x20x32x4xf32>
    %c0_15 = arith.constant 0 : index
    %c0_16 = arith.constant 0 : index
    %c0_17 = arith.constant 0 : index
    %c0_18 = arith.constant 0 : index
    %19 = vector.load %arg9[%c0_15, %c0_16, %c0_17, %c0_18] : memref<1x20x32x4xf32, #tpu.memory_space<vmem>>, vector<1x20x32x4xf32>
    tpu.vector_store %arg9[%c0_15, %c0_16, %c0_17, %c0_18], %18 {strides = array<i32>} : memref<1x20x32x4xf32, #tpu.memory_space<vmem>>, vector<1x20x32x4xf32>,
    %c0_19 = arith.constant 0 : index
    %c2 = arith.constant 2 : index
    %c8 = arith.constant 8 : index
    %c0_20 = arith.constant 0 : index
    %20 = vector.load %arg9[%c0_19, %c2, %c8, %c0_20] : memref<1x20x32x4xf32, #tpu.memory_space<vmem>>, vector<1x16x16x4xf32>
    tpu.vector_store %arg9[%c0_19, %c2, %c8, %c0_20], %16 {strides = array<i32>} : memref<1x20x32x4xf32, #tpu.memory_space<vmem>>, vector<1x16x16x4xf32>,
    %c0_21 = arith.constant 0 : index
    %c0_22 = arith.constant 0 : index
    %c0_23 = arith.constant 0 : index
    %c0_24 = arith.constant 0 : index
    %21 = vector.load %arg9[%c0_21, %c0_22, %c0_23, %c0_24] : memref<1x20x32x4xf32, #tpu.memory_space<vmem>>, vector<1x20x32x4xf32>
    %cst_25 = arith.constant 0.000000e+00 : f32
    %22 = vector.broadcast %cst_25 : f32 to vector<1x16x16x4xf32>
    %c0_26 = arith.constant 0 : index
    %c0_27 = arith.constant 0 : index
    %23 = vector.load %arg5[%c0_26, %c0_27] : memref<25x4xf32, #tpu.memory_space<vmem>>, vector<1x4xf32>
    %24 = vector.shape_cast %23 : vector<1x4xf32> to vector<1x1x1x4xf32>
    %25 = vector.extract_strided_slice %21 {offsets = [0, 0, 6, 0], sizes = [1, 16, 16, 4], strides = [1, 1, 1, 1]} : vector<1x20x32x4xf32> to vector<1x16x16x4xf32>
    %26 = vector.broadcast %24 : vector<1x1x1x4xf32> to vector<1x16x16x4xf32>
    %27 = arith.mulf %25, %26 : vector<1x16x16x4xf32>
    %28 = arith.addf %22, %27 : vector<1x16x16x4xf32>
    %c1 = arith.constant 1 : index
    %c0_28 = arith.constant 0 : index
    %29 = vector.load %arg5[%c1, %c0_28] : memref<25x4xf32, #tpu.memory_space<vmem>>, vector<1x4xf32>
    %30 = vector.shape_cast %29 : vector<1x4xf32> to vector<1x1x1x4xf32>
    %31 = vector.extract_strided_slice %21 {offsets = [0, 0, 7, 0], sizes = [1, 16, 16, 4], strides = [1, 1, 1, 1]} : vector<1x20x32x4xf32> to vector<1x16x16x4xf32>
    %32 = vector.broadcast %30 : vector<1x1x1x4xf32> to vector<1x16x16x4xf32>
    %33 = arith.mulf %31, %32 : vector<1x16x16x4xf32>
    %34 = arith.addf %28, %33 : vector<1x16x16x4xf32>
    %c2_29 = arith.constant 2 : index
    %c0_30 = arith.constant 0 : index
    %35 = vector.load %arg5[%c2_29, %c0_30] : memref<25x4xf32, #tpu.memory_space<vmem>>, vector<1x4xf32>
    %36 = vector.shape_cast %35 : vector<1x4xf32> to vector<1x1x1x4xf32>
    %37 = vector.extract_strided_slice %21 {offsets = [0, 0, 8, 0], sizes = [1, 16, 16, 4], strides = [1, 1, 1, 1]} : vector<1x20x32x4xf32> to vector<1x16x16x4xf32>
    %38 = vector.broadcast %36 : vector<1x1x1x4xf32> to vector<1x16x16x4xf32>
    %39 = arith.mulf %37, %38 : vector<1x16x16x4xf32>
    %40 = arith.addf %34, %39 : vector<1x16x16x4xf32>
    %c3 = arith.constant 3 : index
    %c0_31 = arith.constant 0 : index
    %41 = vector.load %arg5[%c3, %c0_31] : memref<25x4xf32, #tpu.memory_space<vmem>>, vector<1x4xf32>
    %42 = vector.shape_cast %41 : vector<1x4xf32> to vector<1x1x1x4xf32>
    %43 = vector.extract_strided_slice %21 {offsets = [0, 0, 9, 0], sizes = [1, 16, 16, 4], strides = [1, 1, 1, 1]} : vector<1x20x32x4xf32> to vector<1x16x16x4xf32>
    %44 = vector.broadcast %42 : vector<1x1x1x4xf32> to vector<1x16x16x4xf32>
    %45 = arith.mulf %43, %44 : vector<1x16x16x4xf32>
    %46 = arith.addf %40, %45 : vector<1x16x16x4xf32>
    %c4 = arith.constant 4 : index
    %c0_32 = arith.constant 0 : index
    %47 = vector.load %arg5[%c4, %c0_32] : memref<25x4xf32, #tpu.memory_space<vmem>>, vector<1x4xf32>
    %48 = vector.shape_cast %47 : vector<1x4xf32> to vector<1x1x1x4xf32>
    %49 = vector.extract_strided_slice %21 {offsets = [0, 0, 10, 0], sizes = [1, 16, 16, 4], strides = [1, 1, 1, 1]} : vector<1x20x32x4xf32> to vector<1x16x16x4xf32>
    %50 = vector.broadcast %48 : vector<1x1x1x4xf32> to vector<1x16x16x4xf32>
    %51 = arith.mulf %49, %50 : vector<1x16x16x4xf32>
    %52 = arith.addf %46, %51 : vector<1x16x16x4xf32>
    %c5 = arith.constant 5 : index
    %c0_33 = arith.constant 0 : index
    %53 = vector.load %arg5[%c5, %c0_33] : memref<25x4xf32, #tpu.memory_space<vmem>>, vector<1x4xf32>
    %54 = vector.shape_cast %53 : vector<1x4xf32> to vector<1x1x1x4xf32>
    %55 = vector.extract_strided_slice %21 {offsets = [0, 1, 6, 0], sizes = [1, 16, 16, 4], strides = [1, 1, 1, 1]} : vector<1x20x32x4xf32> to vector<1x16x16x4xf32>
    %56 = vector.broadcast %54 : vector<1x1x1x4xf32> to vector<1x16x16x4xf32>
    %57 = arith.mulf %55, %56 : vector<1x16x16x4xf32>
    %58 = arith.addf %52, %57 : vector<1x16x16x4xf32>
    %c6 = arith.constant 6 : index
    %c0_34 = arith.constant 0 : index
    %59 = vector.load %arg5[%c6, %c0_34] : memref<25x4xf32, #tpu.memory_space<vmem>>, vector<1x4xf32>
    %60 = vector.shape_cast %59 : vector<1x4xf32> to vector<1x1x1x4xf32>
    %61 = vector.extract_strided_slice %21 {offsets = [0, 1, 7, 0], sizes = [1, 16, 16, 4], strides = [1, 1, 1, 1]} : vector<1x20x32x4xf32> to vector<1x16x16x4xf32>
    %62 = vector.broadcast %60 : vector<1x1x1x4xf32> to vector<1x16x16x4xf32>
    %63 = arith.mulf %61, %62 : vector<1x16x16x4xf32>
    %64 = arith.addf %58, %63 : vector<1x16x16x4xf32>
    %c7 = arith.constant 7 : index
    %c0_35 = arith.constant 0 : index
    %65 = vector.load %arg5[%c7, %c0_35] : memref<25x4xf32, #tpu.memory_space<vmem>>, vector<1x4xf32>
    %66 = vector.shape_cast %65 : vector<1x4xf32> to vector<1x1x1x4xf32>
    %67 = vector.extract_strided_slice %21 {offsets = [0, 1, 8, 0], sizes = [1, 16, 16, 4], strides = [1, 1, 1, 1]} : vector<1x20x32x4xf32> to vector<1x16x16x4xf32>
    %68 = vector.broadcast %66 : vector<1x1x1x4xf32> to vector<1x16x16x4xf32>
    %69 = arith.mulf %67, %68 : vector<1x16x16x4xf32>
    %70 = arith.addf %64, %69 : vector<1x16x16x4xf32>
    %c8_36 = arith.constant 8 : index
    %c0_37 = arith.constant 0 : index
    %71 = vector.load %arg5[%c8_36, %c0_37] : memref<25x4xf32, #tpu.memory_space<vmem>>, vector<1x4xf32>
    %72 = vector.shape_cast %71 : vector<1x4xf32> to vector<1x1x1x4xf32>
    %73 = vector.extract_strided_slice %21 {offsets = [0, 1, 9, 0], sizes = [1, 16, 16, 4], strides = [1, 1, 1, 1]} : vector<1x20x32x4xf32> to vector<1x16x16x4xf32>
    %74 = vector.broadcast %72 : vector<1x1x1x4xf32> to vector<1x16x16x4xf32>
    %75 = arith.mulf %73, %74 : vector<1x16x16x4xf32>
    %76 = arith.addf %70, %75 : vector<1x16x16x4xf32>
    %c9 = arith.constant 9 : index
    %c0_38 = arith.constant 0 : index
    %77 = vector.load %arg5[%c9, %c0_38] : memref<25x4xf32, #tpu.memory_space<vmem>>, vector<1x4xf32>
    %78 = vector.shape_cast %77 : vector<1x4xf32> to vector<1x1x1x4xf32>
    %79 = vector.extract_strided_slice %21 {offsets = [0, 1, 10, 0], sizes = [1, 16, 16, 4], strides = [1, 1, 1, 1]} : vector<1x20x32x4xf32> to vector<1x16x16x4xf32>
    %80 = vector.broadcast %78 : vector<1x1x1x4xf32> to vector<1x16x16x4xf32>
    %81 = arith.mulf %79, %80 : vector<1x16x16x4xf32>
    %82 = arith.addf %76, %81 : vector<1x16x16x4xf32>
    %c10 = arith.constant 10 : index
    %c0_39 = arith.constant 0 : index
    %83 = vector.load %arg5[%c10, %c0_39] : memref<25x4xf32, #tpu.memory_space<vmem>>, vector<1x4xf32>
    %84 = vector.shape_cast %83 : vector<1x4xf32> to vector<1x1x1x4xf32>
    %85 = vector.extract_strided_slice %21 {offsets = [0, 2, 6, 0], sizes = [1, 16, 16, 4], strides = [1, 1, 1, 1]} : vector<1x20x32x4xf32> to vector<1x16x16x4xf32>
    %86 = vector.broadcast %84 : vector<1x1x1x4xf32> to vector<1x16x16x4xf32>
    %87 = arith.mulf %85, %86 : vector<1x16x16x4xf32>
    %88 = arith.addf %82, %87 : vector<1x16x16x4xf32>
    %c11 = arith.constant 11 : index
    %c0_40 = arith.constant 0 : index
    %89 = vector.load %arg5[%c11, %c0_40] : memref<25x4xf32, #tpu.memory_space<vmem>>, vector<1x4xf32>
    %90 = vector.shape_cast %89 : vector<1x4xf32> to vector<1x1x1x4xf32>
    %91 = vector.extract_strided_slice %21 {offsets = [0, 2, 7, 0], sizes = [1, 16, 16, 4], strides = [1, 1, 1, 1]} : vector<1x20x32x4xf32> to vector<1x16x16x4xf32>
    %92 = vector.broadcast %90 : vector<1x1x1x4xf32> to vector<1x16x16x4xf32>
    %93 = arith.mulf %91, %92 : vector<1x16x16x4xf32>
    %94 = arith.addf %88, %93 : vector<1x16x16x4xf32>
    %c12 = arith.constant 12 : index
    %c0_41 = arith.constant 0 : index
    %95 = vector.load %arg5[%c12, %c0_41] : memref<25x4xf32, #tpu.memory_space<vmem>>, vector<1x4xf32>
    %96 = vector.shape_cast %95 : vector<1x4xf32> to vector<1x1x1x4xf32>
    %97 = vector.extract_strided_slice %21 {offsets = [0, 2, 8, 0], sizes = [1, 16, 16, 4], strides = [1, 1, 1, 1]} : vector<1x20x32x4xf32> to vector<1x16x16x4xf32>
    %98 = vector.broadcast %96 : vector<1x1x1x4xf32> to vector<1x16x16x4xf32>
    %99 = arith.mulf %97, %98 : vector<1x16x16x4xf32>
    %100 = arith.addf %94, %99 : vector<1x16x16x4xf32>
    %c13 = arith.constant 13 : index
    %c0_42 = arith.constant 0 : index
    %101 = vector.load %arg5[%c13, %c0_42] : memref<25x4xf32, #tpu.memory_space<vmem>>, vector<1x4xf32>
    %102 = vector.shape_cast %101 : vector<1x4xf32> to vector<1x1x1x4xf32>
    %103 = vector.extract_strided_slice %21 {offsets = [0, 2, 9, 0], sizes = [1, 16, 16, 4], strides = [1, 1, 1, 1]} : vector<1x20x32x4xf32> to vector<1x16x16x4xf32>
    %104 = vector.broadcast %102 : vector<1x1x1x4xf32> to vector<1x16x16x4xf32>
    %105 = arith.mulf %103, %104 : vector<1x16x16x4xf32>
    %106 = arith.addf %100, %105 : vector<1x16x16x4xf32>
    %c14 = arith.constant 14 : index
    %c0_43 = arith.constant 0 : index
    %107 = vector.load %arg5[%c14, %c0_43] : memref<25x4xf32, #tpu.memory_space<vmem>>, vector<1x4xf32>
    %108 = vector.shape_cast %107 : vector<1x4xf32> to vector<1x1x1x4xf32>
    %109 = vector.extract_strided_slice %21 {offsets = [0, 2, 10, 0], sizes = [1, 16, 16, 4], strides = [1, 1, 1, 1]} : vector<1x20x32x4xf32> to vector<1x16x16x4xf32>
    %110 = vector.broadcast %108 : vector<1x1x1x4xf32> to vector<1x16x16x4xf32>
    %111 = arith.mulf %109, %110 : vector<1x16x16x4xf32>
    %112 = arith.addf %106, %111 : vector<1x16x16x4xf32>
    %c15 = arith.constant 15 : index
    %c0_44 = arith.constant 0 : index
    %113 = vector.load %arg5[%c15, %c0_44] : memref<25x4xf32, #tpu.memory_space<vmem>>, vector<1x4xf32>
    %114 = vector.shape_cast %113 : vector<1x4xf32> to vector<1x1x1x4xf32>
    %115 = vector.extract_strided_slice %21 {offsets = [0, 3, 6, 0], sizes = [1, 16, 16, 4], strides = [1, 1, 1, 1]} : vector<1x20x32x4xf32> to vector<1x16x16x4xf32>
    %116 = vector.broadcast %114 : vector<1x1x1x4xf32> to vector<1x16x16x4xf32>
    %117 = arith.mulf %115, %116 : vector<1x16x16x4xf32>
    %118 = arith.addf %112, %117 : vector<1x16x16x4xf32>
    %c16 = arith.constant 16 : index
    %c0_45 = arith.constant 0 : index
    %119 = vector.load %arg5[%c16, %c0_45] : memref<25x4xf32, #tpu.memory_space<vmem>>, vector<1x4xf32>
    %120 = vector.shape_cast %119 : vector<1x4xf32> to vector<1x1x1x4xf32>
    %121 = vector.extract_strided_slice %21 {offsets = [0, 3, 7, 0], sizes = [1, 16, 16, 4], strides = [1, 1, 1, 1]} : vector<1x20x32x4xf32> to vector<1x16x16x4xf32>
    %122 = vector.broadcast %120 : vector<1x1x1x4xf32> to vector<1x16x16x4xf32>
    %123 = arith.mulf %121, %122 : vector<1x16x16x4xf32>
    %124 = arith.addf %118, %123 : vector<1x16x16x4xf32>
    %c17 = arith.constant 17 : index
    %c0_46 = arith.constant 0 : index
    %125 = vector.load %arg5[%c17, %c0_46] : memref<25x4xf32, #tpu.memory_space<vmem>>, vector<1x4xf32>
    %126 = vector.shape_cast %125 : vector<1x4xf32> to vector<1x1x1x4xf32>
    %127 = vector.extract_strided_slice %21 {offsets = [0, 3, 8, 0], sizes = [1, 16, 16, 4], strides = [1, 1, 1, 1]} : vector<1x20x32x4xf32> to vector<1x16x16x4xf32>
    %128 = vector.broadcast %126 : vector<1x1x1x4xf32> to vector<1x16x16x4xf32>
    %129 = arith.mulf %127, %128 : vector<1x16x16x4xf32>
    %130 = arith.addf %124, %129 : vector<1x16x16x4xf32>
    %c18 = arith.constant 18 : index
    %c0_47 = arith.constant 0 : index
    %131 = vector.load %arg5[%c18, %c0_47] : memref<25x4xf32, #tpu.memory_space<vmem>>, vector<1x4xf32>
    %132 = vector.shape_cast %131 : vector<1x4xf32> to vector<1x1x1x4xf32>
    %133 = vector.extract_strided_slice %21 {offsets = [0, 3, 9, 0], sizes = [1, 16, 16, 4], strides = [1, 1, 1, 1]} : vector<1x20x32x4xf32> to vector<1x16x16x4xf32>
    %134 = vector.broadcast %132 : vector<1x1x1x4xf32> to vector<1x16x16x4xf32>
    %135 = arith.mulf %133, %134 : vector<1x16x16x4xf32>
    %136 = arith.addf %130, %135 : vector<1x16x16x4xf32>
    %c19 = arith.constant 19 : index
    %c0_48 = arith.constant 0 : index
    %137 = vector.load %arg5[%c19, %c0_48] : memref<25x4xf32, #tpu.memory_space<vmem>>, vector<1x4xf32>
    %138 = vector.shape_cast %137 : vector<1x4xf32> to vector<1x1x1x4xf32>
    %139 = vector.extract_strided_slice %21 {offsets = [0, 3, 10, 0], sizes = [1, 16, 16, 4], strides = [1, 1, 1, 1]} : vector<1x20x32x4xf32> to vector<1x16x16x4xf32>
    %140 = vector.broadcast %138 : vector<1x1x1x4xf32> to vector<1x16x16x4xf32>
    %141 = arith.mulf %139, %140 : vector<1x16x16x4xf32>
    %142 = arith.addf %136, %141 : vector<1x16x16x4xf32>
    %c20 = arith.constant 20 : index
    %c0_49 = arith.constant 0 : index
    %143 = vector.load %arg5[%c20, %c0_49] : memref<25x4xf32, #tpu.memory_space<vmem>>, vector<1x4xf32>
    %144 = vector.shape_cast %143 : vector<1x4xf32> to vector<1x1x1x4xf32>
    %145 = vector.extract_strided_slice %21 {offsets = [0, 4, 6, 0], sizes = [1, 16, 16, 4], strides = [1, 1, 1, 1]} : vector<1x20x32x4xf32> to vector<1x16x16x4xf32>
    %146 = vector.broadcast %144 : vector<1x1x1x4xf32> to vector<1x16x16x4xf32>
    %147 = arith.mulf %145, %146 : vector<1x16x16x4xf32>
    %148 = arith.addf %142, %147 : vector<1x16x16x4xf32>
    %c21 = arith.constant 21 : index
    %c0_50 = arith.constant 0 : index
    %149 = vector.load %arg5[%c21, %c0_50] : memref<25x4xf32, #tpu.memory_space<vmem>>, vector<1x4xf32>
    %150 = vector.shape_cast %149 : vector<1x4xf32> to vector<1x1x1x4xf32>
    %151 = vector.extract_strided_slice %21 {offsets = [0, 4, 7, 0], sizes = [1, 16, 16, 4], strides = [1, 1, 1, 1]} : vector<1x20x32x4xf32> to vector<1x16x16x4xf32>
    %152 = vector.broadcast %150 : vector<1x1x1x4xf32> to vector<1x16x16x4xf32>
    %153 = arith.mulf %151, %152 : vector<1x16x16x4xf32>
    %154 = arith.addf %148, %153 : vector<1x16x16x4xf32>
    %c22 = arith.constant 22 : index
    %c0_51 = arith.constant 0 : index
    %155 = vector.load %arg5[%c22, %c0_51] : memref<25x4xf32, #tpu.memory_space<vmem>>, vector<1x4xf32>
    %156 = vector.shape_cast %155 : vector<1x4xf32> to vector<1x1x1x4xf32>
    %157 = vector.extract_strided_slice %21 {offsets = [0, 4, 8, 0], sizes = [1, 16, 16, 4], strides = [1, 1, 1, 1]} : vector<1x20x32x4xf32> to vector<1x16x16x4xf32>
    %158 = vector.broadcast %156 : vector<1x1x1x4xf32> to vector<1x16x16x4xf32>
    %159 = arith.mulf %157, %158 : vector<1x16x16x4xf32>
    %160 = arith.addf %154, %159 : vector<1x16x16x4xf32>
    %c23 = arith.constant 23 : index
    %c0_52 = arith.constant 0 : index
    %161 = vector.load %arg5[%c23, %c0_52] : memref<25x4xf32, #tpu.memory_space<vmem>>, vector<1x4xf32>
    %162 = vector.shape_cast %161 : vector<1x4xf32> to vector<1x1x1x4xf32>
    %163 = vector.extract_strided_slice %21 {offsets = [0, 4, 9, 0], sizes = [1, 16, 16, 4], strides = [1, 1, 1, 1]} : vector<1x20x32x4xf32> to vector<1x16x16x4xf32>
    %164 = vector.broadcast %162 : vector<1x1x1x4xf32> to vector<1x16x16x4xf32>
    %165 = arith.mulf %163, %164 : vector<1x16x16x4xf32>
    %166 = arith.addf %160, %165 : vector<1x16x16x4xf32>
    %c24 = arith.constant 24 : index
    %c0_53 = arith.constant 0 : index
    %167 = vector.load %arg5[%c24, %c0_53] : memref<25x4xf32, #tpu.memory_space<vmem>>, vector<1x4xf32>
    %168 = vector.shape_cast %167 : vector<1x4xf32> to vector<1x1x1x4xf32>
    %169 = vector.extract_strided_slice %21 {offsets = [0, 4, 10, 0], sizes = [1, 16, 16, 4], strides = [1, 1, 1, 1]} : vector<1x20x32x4xf32> to vector<1x16x16x4xf32>
    %170 = vector.broadcast %168 : vector<1x1x1x4xf32> to vector<1x16x16x4xf32>
    %171 = arith.mulf %169, %170 : vector<1x16x16x4xf32>
    %172 = arith.addf %166, %171 : vector<1x16x16x4xf32>
    %c0_54 = arith.constant 0 : index
    %c0_55 = arith.constant 0 : index
    %173 = vector.load %arg6[%c0_54, %c0_55] : memref<1x4xf32, #tpu.memory_space<vmem>>, vector<1x4xf32>
    %174 = vector.shape_cast %173 : vector<1x4xf32> to vector<1x1x1x4xf32>
    %175 = vector.broadcast %174 : vector<1x1x1x4xf32> to vector<1x16x16x4xf32>
    %176 = arith.mulf %172, %175 : vector<1x16x16x4xf32>
    %c0_56 = arith.constant 0 : index
    %c0_57 = arith.constant 0 : index
    %177 = vector.load %arg7[%c0_56, %c0_57] : memref<1x4xf32, #tpu.memory_space<vmem>>, vector<1x4xf32>
    %178 = vector.shape_cast %177 : vector<1x4xf32> to vector<1x1x1x4xf32>
    %179 = vector.broadcast %178 : vector<1x1x1x4xf32> to vector<1x16x16x4xf32>
    %180 = arith.addf %176, %179 : vector<1x16x16x4xf32>
    %181 = arith.negf %180 : vector<1x16x16x4xf32>
    %182 = math.exp %181 : vector<1x16x16x4xf32>
    %cst_58 = arith.constant 1.000000e+00 : f32
    %183 = vector.broadcast %cst_58 : f32 to vector<1x16x16x4xf32>
    %184 = arith.addf %183, %182 : vector<1x16x16x4xf32>
    %185 = arith.divf %183, %184 : vector<1x16x16x4xf32>
    %186 = arith.mulf %180, %185 : vector<1x16x16x4xf32>
    %c0_59 = arith.constant 0 : index
    %c0_60 = arith.constant 0 : index
    %c0_61 = arith.constant 0 : index
    %c4_62 = arith.constant 4 : index
    %187 = vector.load %arg8[%c0_59, %c0_60, %c0_61, %c4_62] : memref<1x16x16x8xf32, #tpu.memory_space<vmem>>, vector<1x16x16x4xf32>
    tpu.vector_store %arg8[%c0_59, %c0_60, %c0_61, %c4_62], %186 {strides = array<i32>} : memref<1x16x16x8xf32, #tpu.memory_space<vmem>>, vector<1x16x16x4xf32>,
    return
  }
  func.func @transform_0(%arg0: i32) -> (i32, i32, i32, i32) {
    %c0_i32 = arith.constant 0 : i32
    %c0_i32_0 = arith.constant 0 : i32
    %c0_i32_1 = arith.constant 0 : i32
    %c0_i32_2 = arith.constant 0 : i32
    return %arg0, %c0_i32, %c0_i32_0, %c0_i32_1 : i32, i32, i32, i32
  }
  func.func @transform_1(%arg0: i32) -> (i32, i32) {
    %c0_i32 = arith.constant 0 : i32
    %c0_i32_0 = arith.constant 0 : i32
    %c0_i32_1 = arith.constant 0 : i32
    return %c0_i32, %c0_i32_0 : i32, i32
  }
  func.func @transform_2(%arg0: i32) -> (i32, i32) {
    %c0_i32 = arith.constant 0 : i32
    %c0_i32_0 = arith.constant 0 : i32
    %c0_i32_1 = arith.constant 0 : i32
    return %c0_i32, %c0_i32_0 : i32, i32
  }
  func.func @transform_3(%arg0: i32) -> (i32, i32) {
    %c0_i32 = arith.constant 0 : i32
    %c0_i32_0 = arith.constant 0 : i32
    %c0_i32_1 = arith.constant 0 : i32
    return %c0_i32, %c0_i32_0 : i32, i32
  }
  func.func @transform_4(%arg0: i32) -> (i32, i32) {
    %c0_i32 = arith.constant 0 : i32
    %c0_i32_0 = arith.constant 0 : i32
    %c0_i32_1 = arith.constant 0 : i32
    return %c0_i32, %c0_i32_0 : i32, i32
  }
  func.func @transform_5(%arg0: i32) -> (i32, i32) {
    %c0_i32 = arith.constant 0 : i32
    %c0_i32_0 = arith.constant 0 : i32
    %c0_i32_1 = arith.constant 0 : i32
    return %c0_i32, %c0_i32_0 : i32, i32
  }
  func.func @transform_6(%arg0: i32) -> (i32, i32) {
    %c0_i32 = arith.constant 0 : i32
    %c0_i32_0 = arith.constant 0 : i32
    %c0_i32_1 = arith.constant 0 : i32
    return %c0_i32, %c0_i32_0 : i32, i32
  }
  func.func @transform_7(%arg0: i32) -> (i32, i32, i32, i32) {
    %c0_i32 = arith.constant 0 : i32
    %c0_i32_0 = arith.constant 0 : i32
    %c0_i32_1 = arith.constant 0 : i32
    %c0_i32_2 = arith.constant 0 : i32
    return %arg0, %c0_i32, %c0_i32_0, %c0_i32_1 : i32, i32, i32, i32
  }
}

</mosaic_0001>

<llo_original>
// kernel: tpu_custom_call.1
$region0: #{tpu_custom_call.1}
  #allocation0 [shape = 'u32[]', space=smem, size = 0x4, offset = 0x4, fixed_abs, tag = 'smem constant byte address 0x4 - core index']
  #allocation1 [shape = 'u32[144,128]{1,0:T(1,128)}', space=vmem, size = 0x12000, scoped, tag = 'internal scratch']
  #allocation2 [shape = 'f32[1,20,32,4]{3,2,1,0:T(8,128)}', space=vmem, size = 0x50000, scoped, tag = 'scratch operand']
  %s0 = inlined_call_operand.vmem [shape: bf16[2,16,16,4], index: 0, kind: input, shape index: {}]
  %s1 = inlined_call_operand.vmem [shape: bf16[4,4], index: 1, kind: input, shape index: {}]
  %s2 = inlined_call_operand.vmem [shape: f32[1,4], index: 2, kind: input, shape index: {}]
  %s3 = inlined_call_operand.vmem [shape: f32[1,4], index: 3, kind: input, shape index: {}]
  %s4 = inlined_call_operand.vmem [shape: f32[25,4], index: 4, kind: input, shape index: {}]
  %s5 = inlined_call_operand.vmem [shape: f32[1,4], index: 5, kind: input, shape index: {}]
  %s6 = inlined_call_operand.vmem [shape: f32[1,4], index: 6, kind: input, shape index: {}]
  %s7 = inlined_call_operand.vmem [shape: f32[2,16,16,8], index: 7, kind: output, shape index: {}]
  %s8 = sld [smem:[#allocation0]]
  $region61: #{tpu_custom_call.1} parent=0
    _
  %s10 = ssub.s32 1, %s8
  %s11 = scalar_select 0, %s10, %s8
  loop: start=0, step=1, limit=4
  $region2: #{tpu_custom_call.1} parent=0 // loop_pre_header
    _
  $region3: #{tpu_custom_call.1} parent=0 // loop_header
    %s13 = sphi 0, %s17
    %p14 = scmp.ge.s32.totalorder %s13, 4
    %s23 = sphi 0, %s25
    %s26 = sphi 0, %s23
    %s27 = sphi 0, %s26
    %s43 = sphi 0, %s27
    %s47 = sphi 0, %s47
    %s49 = sphi 0, %s47
    %s50 = sphi 0, %s49
    %s64 = sphi 0, %s50
    %s68 = sphi 0, %s68
    %s70 = sphi 0, %s68
    %s71 = sphi 0, %s70
    %s85 = sphi 0, %s71
    %s89 = sphi 0, %s89
    %s91 = sphi 0, %s89
    %s92 = sphi 0, %s91
    %s106 = sphi 0, %s92
    %s110 = sphi 0, %s110
    %s112 = sphi 0, %s110
    %s113 = sphi 0, %s112
    %s127 = sphi 0, %s113
    %s131 = sphi 0, %s131
    %s133 = sphi 0, %s131
    %s134 = sphi 0, %s133
    %s148 = sphi 0, %s134
    %s152 = sphi 0, %s152
    %s154 = sphi 0, %s152
    %s155 = sphi 0, %s154
    %s169 = sphi 0, %s155
    %s175 = sphi 0, %s177
    %s178 = sphi 0, %s175
    %s179 = sphi 0, %s178
    %s195 = sphi 0, %s179
  $region4: #{tpu_custom_call.1} parent=0 // loop_header_branch
    %16 = sbr.rel (%p14) target = $region8
  $region5: #{tpu_custom_call.1} parent=0 // loop_body
    %s18 = ssub.s32 %s13, 1
    %s19 = ssub.s32 %s13, 2
    %s20 = sadd.s32 %s13, 1
    %s21 = ssub.s32 %s13, %s20
    %p22 = scmp.eq.s32.totalorder %s21, 0
    %s24 = sadd.s32 %s23, 1
    %s25 = scalar_select %p22, %s23, %s24
    %p28 = pneg %p22
    %p29 = scmp.eq.s32.totalorder %s13, 1
    %p30 = por %p28, %p29
    %p31 = scmp.ne.s32.totalorder %s23, %s26
    %p32 = scmp.eq.s32.totalorder %s13, 0
    %p33 = por %p31, %p32
    %p34 = scmp.ne.s32.totalorder %s23, %s26
    %p35 = scmp.eq.s32.totalorder %s18, 1
    %p36 = por %p34, %p35
    %p37 = scmp.ne.s32.totalorder %s26, %s27
    %p38 = scmp.eq.s32.totalorder %s18, 0
    %p39 = por %p37, %p38
    %p40 = scmp.ne.s32.totalorder %s26, %s27
    %p41 = scmp.eq.s32.totalorder %s19, 1
    %p42 = por %p40, %p41
    %p44 = scmp.ne.s32.totalorder %s27, %s43
    %p45 = scmp.eq.s32.totalorder %s19, 0
    %p46 = por %p44, %p45
    %s48 = sadd.s32 %s47, 1
    %p51 = scmp.eq.s32.totalorder %s13, 1
    %p52 = scmp.ne.s32.totalorder %s47, %s49
    %p53 = scmp.eq.s32.totalorder %s13, 0
    %p54 = por %p52, %p53
    %p55 = scmp.ne.s32.totalorder %s47, %s49
    %p56 = scmp.eq.s32.totalorder %s18, 1
    %p57 = por %p55, %p56
    %p58 = scmp.ne.s32.totalorder %s49, %s50
    %p59 = scmp.eq.s32.totalorder %s18, 0
    %p60 = por %p58, %p59
    %p61 = scmp.ne.s32.totalorder %s49, %s50
    %p62 = scmp.eq.s32.totalorder %s19, 1
    %p63 = por %p61, %p62
    %p65 = scmp.ne.s32.totalorder %s50, %s64
    %p66 = scmp.eq.s32.totalorder %s19, 0
    %p67 = por %p65, %p66
    %s69 = sadd.s32 %s68, 1
    %p72 = scmp.eq.s32.totalorder %s13, 1
    %p73 = scmp.ne.s32.totalorder %s68, %s70
    %p74 = scmp.eq.s32.totalorder %s13, 0
    %p75 = por %p73, %p74
    %p76 = scmp.ne.s32.totalorder %s68, %s70
    %p77 = scmp.eq.s32.totalorder %s18, 1
    %p78 = por %p76, %p77
    %p79 = scmp.ne.s32.totalorder %s70, %s71
    %p80 = scmp.eq.s32.totalorder %s18, 0
    %p81 = por %p79, %p80
    %p82 = scmp.ne.s32.totalorder %s70, %s71
    %p83 = scmp.eq.s32.totalorder %s19, 1
    %p84 = por %p82, %p83
    %p86 = scmp.ne.s32.totalorder %s71, %s85
    %p87 = scmp.eq.s32.totalorder %s19, 0
    %p88 = por %p86, %p87
    %s90 = sadd.s32 %s89, 1
    %p93 = scmp.eq.s32.totalorder %s13, 1
    %p94 = scmp.ne.s32.totalorder %s89, %s91
    %p95 = scmp.eq.s32.totalorder %s13, 0
    %p96 = por %p94, %p95
    %p97 = scmp.ne.s32.totalorder %s89, %s91
    %p98 = scmp.eq.s32.totalorder %s18, 1
    %p99 = por %p97, %p98
    %p100 = scmp.ne.s32.totalorder %s91, %s92
    %p101 = scmp.eq.s32.totalorder %s18, 0
    %p102 = por %p100, %p101
    %p103 = scmp.ne.s32.totalorder %s91, %s92
    %p104 = scmp.eq.s32.totalorder %s19, 1
    %p105 = por %p103, %p104
    %p107 = scmp.ne.s32.totalorder %s92, %s106
    %p108 = scmp.eq.s32.totalorder %s19, 0
    %p109 = por %p107, %p108
    %s111 = sadd.s32 %s110, 1
    %p114 = scmp.eq.s32.totalorder %s13, 1
    %p115 = scmp.ne.s32.totalorder %s110, %s112
    %p116 = scmp.eq.s32.totalorder %s13, 0
    %p117 = por %p115, %p116
    %p118 = scmp.ne.s32.totalorder %s110, %s112
    %p119 = scmp.eq.s32.totalorder %s18, 1
    %p120 = por %p118, %p119
    %p121 = scmp.ne.s32.totalorder %s112, %s113
    %p122 = scmp.eq.s32.totalorder %s18, 0
    %p123 = por %p121, %p122
    %p124 = scmp.ne.s32.totalorder %s112, %s113
    %p125 = scmp.eq.s32.totalorder %s19, 1
    %p126 = por %p124, %p125
    %p128 = scmp.ne.s32.totalorder %s113, %s127
    %p129 = scmp.eq.s32.totalorder %s19, 0
    %p130 = por %p128, %p129
    %s132 = sadd.s32 %s131, 1
    %p135 = scmp.eq.s32.totalorder %s13, 1
    %p136 = scmp.ne.s32.totalorder %s131, %s133
    %p137 = scmp.eq.s32.totalorder %s13, 0
    %p138 = por %p136, %p137
    %p139 = scmp.ne.s32.totalorder %s131, %s133
    %p140 = scmp.eq.s32.totalorder %s18, 1
    %p141 = por %p139, %p140
    %p142 = scmp.ne.s32.totalorder %s133, %s134
    %p143 = scmp.eq.s32.totalorder %s18, 0
    %p144 = por %p142, %p143
    %p145 = scmp.ne.s32.totalorder %s133, %s134
    %p146 = scmp.eq.s32.totalorder %s19, 1
    %p147 = por %p145, %p146
    %p149 = scmp.ne.s32.totalorder %s134, %s148
    %p150 = scmp.eq.s32.totalorder %s19, 0
    %p151 = por %p149, %p150
    %s153 = sadd.s32 %s152, 1
    %p156 = scmp.eq.s32.totalorder %s13, 1
    %p157 = scmp.ne.s32.totalorder %s152, %s154
    %p158 = scmp.eq.s32.totalorder %s13, 0
    %p159 = por %p157, %p158
    %p160 = scmp.ne.s32.totalorder %s152, %s154
    %p161 = scmp.eq.s32.totalorder %s18, 1
    %p162 = por %p160, %p161
    %p163 = scmp.ne.s32.totalorder %s154, %s155
    %p164 = scmp.eq.s32.totalorder %s18, 0
    %p165 = por %p163, %p164
    %p166 = scmp.ne.s32.totalorder %s154, %s155
    %p167 = scmp.eq.s32.totalorder %s19, 1
    %p168 = por %p166, %p167
    %p170 = scmp.ne.s32.totalorder %s155, %s169
    %p171 = scmp.eq.s32.totalorder %s19, 0
    %p172 = por %p170, %p171
    %s173 = ssub.s32 %s13, %s20
    %p174 = scmp.eq.s32.totalorder %s173, 0
    %s176 = sadd.s32 %s175, 1
    %s177 = scalar_select %p174, %s175, %s176
    %p180 = pneg %p174
    %p181 = scmp.eq.s32.totalorder %s13, 1
    %p182 = por %p180, %p181
    %p183 = scmp.ne.s32.totalorder %s175, %s178
    %p184 = scmp.eq.s32.totalorder %s13, 0
    %p185 = por %p183, %p184
    %p186 = scmp.ne.s32.totalorder %s175, %s178
    %p187 = scmp.eq.s32.totalorder %s18, 1
    %p188 = por %p186, %p187
    %p189 = scmp.ne.s32.totalorder %s178, %s179
    %p190 = scmp.eq.s32.totalorder %s18, 0
    %p191 = por %p189, %p190
    %p192 = scmp.ne.s32.totalorder %s178, %s179
    %p193 = scmp.eq.s32.totalorder %s19, 1
    %p194 = por %p192, %p193
    %p196 = scmp.ne.s32.totalorder %s179, %s195
    %p197 = scmp.eq.s32.totalorder %s19, 0
    %p198 = por %p196, %p197
    %p199 = scmp.le.s32.totalorder 1, %s13
    %p200 = scmp.lt.s32.totalorder %s13, 3
    %p201 = pnand %p199, %p200
    %p202 = pneg %p201
    // Predicated region
    $region9: #{tpu_custom_call.1} parent=5 // pred_check
      _
    $region10: #{tpu_custom_call.1} parent=5 // pred_check_branch
      %204 = sbr.rel (%p201) target = $region12
    $region11: #{tpu_custom_call.1} parent=5 // pred_region
      %s205 = ssub.s32 %s13, 1
      // Predicated region
      $region13: #{tpu_custom_call.1} parent=11 // pred_check
        %p206 = pneg %p60
      $region14: #{tpu_custom_call.1} parent=11 // pred_check_branch
        %208 = sbr.rel (%p206) target = $region16
      $region15: #{tpu_custom_call.1} parent=11 // pred_region
        _
      $region16: #{tpu_custom_call.1} parent=11 // pred_fallthru
        _
      // Predicated region
      $region17: #{tpu_custom_call.1} parent=11 // pred_check
        %p209 = pneg %p81
      $region18: #{tpu_custom_call.1} parent=11 // pred_check_branch
        %211 = sbr.rel (%p209) target = $region20
      $region19: #{tpu_custom_call.1} parent=11 // pred_region
        _
      $region20: #{tpu_custom_call.1} parent=11 // pred_fallthru
        _
      // Predicated region
      $region21: #{tpu_custom_call.1} parent=11 // pred_check
        %p212 = pneg %p102
      $region22: #{tpu_custom_call.1} parent=11 // pred_check_branch
        %214 = sbr.rel (%p212) target = $region24
      $region23: #{tpu_custom_call.1} parent=11 // pred_region
        _
      $region24: #{tpu_custom_call.1} parent=11 // pred_fallthru
        _
      // Predicated region
      $region25: #{tpu_custom_call.1} parent=11 // pred_check
        %p215 = pneg %p123
      $region26: #{tpu_custom_call.1} parent=11 // pred_check_branch
        %217 = sbr.rel (%p215) target = $region28
      $region27: #{tpu_custom_call.1} parent=11 // pred_region
        _
      $region28: #{tpu_custom_call.1} parent=11 // pred_fallthru
        _
      // Predicated region
      $region29: #{tpu_custom_call.1} parent=11 // pred_check
        %p218 = pneg %p144
      $region30: #{tpu_custom_call.1} parent=11 // pred_check_branch
        %220 = sbr.rel (%p218) target = $region32
      $region31: #{tpu_custom_call.1} parent=11 // pred_region
        _
      $region32: #{tpu_custom_call.1} parent=11 // pred_fallthru
        _
      // Predicated region
      $region33: #{tpu_custom_call.1} parent=11 // pred_check
        %p221 = pneg %p165
      $region34: #{tpu_custom_call.1} parent=11 // pred_check_branch
        %223 = sbr.rel (%p221) target = $region36
      $region35: #{tpu_custom_call.1} parent=11 // pred_region
        _
      $region36: #{tpu_custom_call.1} parent=11 // pred_fallthru
        _
    $region12: #{tpu_custom_call.1} parent=5 // pred_fallthru
      _
    %p224 = scmp.lt.s32.totalorder %s13, 2
    // Predicated region
    $region37: #{tpu_custom_call.1} parent=5 // pred_check
      %p225 = pneg %p224
    $region38: #{tpu_custom_call.1} parent=5 // pred_check_branch
      %227 = sbr.rel (%p225) target = $region40
    $region39: #{tpu_custom_call.1} parent=5 // pred_region
      // Predicated region
      $region41: #{tpu_custom_call.1} parent=39 // pred_check
        %p228 = pneg %p33
      $region42: #{tpu_custom_call.1} parent=39 // pred_check_branch
        %230 = sbr.rel (%p228) target = $region44
      $region43: #{tpu_custom_call.1} parent=39 // pred_region
        %p231 = scmp.lt.s32.totalorder %s13, 1
        %s232 = scalar_select %p231, %s13, 1
        %s233 = smul.addr %s232, 32
        %s234 = smul.addr %s233, 4
        %s235 = scalar_lea.vmem %s0, %s234
      $region44: #{tpu_custom_call.1} parent=39 // pred_fallthru
        _
    $region40: #{tpu_custom_call.1} parent=5 // pred_fallthru
      _
    %p236 = scmp.le.s32.totalorder 1, %s13
    %p237 = scmp.lt.s32.totalorder %s13, 3
    %p238 = pnand %p236, %p237
    %p239 = pneg %p238
    // Predicated region
    $region45: #{tpu_custom_call.1} parent=5 // pred_check
      _
    $region46: #{tpu_custom_call.1} parent=5 // pred_check_branch
      %241 = sbr.rel (%p238) target = $region48
    $region47: #{tpu_custom_call.1} parent=5 // pred_region
      %s242 = ssub.s32 %s13, 1
      %p243 = scmp.lt.s32.totalorder %s18, 1
      %s244 = scalar_select %p243, %s18, 1
      %s245 = smul.addr %s244, 32
      %s246 = smul.addr %s245, 4
      %s247 = scalar_lea.vmem %s0, %s246
      %p248 = pneg %p39
      %p249 = pneg %p36
      %p250 = pneg %p60
      %p251 = pneg %p57
      %p252 = pneg %p81
      %p253 = pneg %p78
      %p254 = pneg %p102
      %p255 = pneg %p99
      %p256 = pneg %p123
      %p257 = pneg %p120
      %p258 = pneg %p144
      %p259 = pneg %p141
      %p260 = pneg %p165
      %p261 = pneg %p162
      %p262 = pneg %p191
      %p263 = pneg %p188
      %p264 = scmp.lt.s32.totalorder %s18, 1
      %s265 = scalar_select %p264, %s18, 1
      %s266 = smul.addr %s265, 32
      %s267 = smul.addr %s266, 8
      %s268 = scalar_lea.vmem %s7, %s267
      %p269 = scmp.lt.s32.totalorder %s18, 1
      %s270 = scalar_select %p269, %s18, 1
      %s271 = smul.addr %s270, 32
      %s272 = smul.addr %s271, 4
      %s273 = scalar_lea.vmem %s0, %s272
      %p274 = scmp.lt.s32.totalorder %s18, 1
      %s275 = scalar_select %p274, %s18, 1
      %s276 = smul.addr %s275, 32
      %s277 = smul.addr %s276, 8
      %s278 = scalar_lea.vmem %s7, %s277
      %v280 = vld [vmem:[%s273] sm:$0xf]
      %v281 = vld [vmem:[%s273 + $0x4] sm:$0xf]
      %v282 = vld [vmem:[%s273 + $0x8] sm:$0xf]
      %v283 = vld [vmem:[%s273 + $0xc] sm:$0xf]
      %v284 = vld [vmem:[%s273 + $0x10] sm:$0xf]
      %v285 = vld [vmem:[%s273 + $0x14] sm:$0xf]
      %v286 = vld [vmem:[%s273 + $0x18] sm:$0xf]
      %v287 = vld [vmem:[%s273 + $0x1c] sm:$0xf]
      %v288 = vld [vmem:[%s273 + $0x20] sm:$0xf]
      %v289 = vld [vmem:[%s273 + $0x24] sm:$0xf]
      %v290 = vld [vmem:[%s273 + $0x28] sm:$0xf]
      %v291 = vld [vmem:[%s273 + $0x2c] sm:$0xf]
      %v292 = vld [vmem:[%s273 + $0x30] sm:$0xf]
      %v293 = vld [vmem:[%s273 + $0x34] sm:$0xf]
      %v294 = vld [vmem:[%s273 + $0x38] sm:$0xf]
      %v295 = vld [vmem:[%s273 + $0x3c] sm:$0xf]
      %v296 = vld [vmem:[%s273 + $0x40] sm:$0xf]
      %v297 = vld [vmem:[%s273 + $0x44] sm:$0xf]
      %v298 = vld [vmem:[%s273 + $0x48] sm:$0xf]
      %v299 = vld [vmem:[%s273 + $0x4c] sm:$0xf]
      %v300 = vld [vmem:[%s273 + $0x50] sm:$0xf]
      %v301 = vld [vmem:[%s273 + $0x54] sm:$0xf]
      %v302 = vld [vmem:[%s273 + $0x58] sm:$0xf]
      %v303 = vld [vmem:[%s273 + $0x5c] sm:$0xf]
      %v304 = vld [vmem:[%s273 + $0x60] sm:$0xf]
      %v305 = vld [vmem:[%s273 + $0x64] sm:$0xf]
      %v306 = vld [vmem:[%s273 + $0x68] sm:$0xf]
      %v307 = vld [vmem:[%s273 + $0x6c] sm:$0xf]
      %v308 = vld [vmem:[%s273 + $0x70] sm:$0xf]
      %v309 = vld [vmem:[%s273 + $0x74] sm:$0xf]
      %v310 = vld [vmem:[%s273 + $0x78] sm:$0xf]
      %v311 = vld [vmem:[%s273 + $0x7c] sm:$0xf]
      %v312 = vld [vmem:[%s1] sm:$0x3]
      %v345 = vunpack.c.l.b16 %v280
      %v346 = vunpack.c.l.b16 %v281
      %v347 = vunpack.c.l.b16 %v282
      %v348 = vunpack.c.l.b16 %v283
      %v349 = vunpack.c.l.b16 %v284
      %v350 = vunpack.c.l.b16 %v285
      %v351 = vunpack.c.l.b16 %v286
      %v352 = vunpack.c.l.b16 %v287
      %v353 = vunpack.c.l.b16 %v288
      %v354 = vunpack.c.l.b16 %v289
      %v355 = vunpack.c.l.b16 %v290
      %v356 = vunpack.c.l.b16 %v291
      %v357 = vunpack.c.l.b16 %v292
      %v358 = vunpack.c.l.b16 %v293
      %v359 = vunpack.c.l.b16 %v294
      %v360 = vunpack.c.l.b16 %v295
      %v361 = vunpack.c.l.b16 %v296
      %v362 = vunpack.c.l.b16 %v297
      %v363 = vunpack.c.l.b16 %v298
      %v364 = vunpack.c.l.b16 %v299
      %v365 = vunpack.c.l.b16 %v300
      %v366 = vunpack.c.l.b16 %v301
      %v367 = vunpack.c.l.b16 %v302
      %v368 = vunpack.c.l.b16 %v303
      %v369 = vunpack.c.l.b16 %v304
      %v370 = vunpack.c.l.b16 %v305
      %v371 = vunpack.c.l.b16 %v306
      %v372 = vunpack.c.l.b16 %v307
      %v373 = vunpack.c.l.b16 %v308
      %v374 = vunpack.c.l.b16 %v309
      %v375 = vunpack.c.l.b16 %v310
      %v376 = vunpack.c.l.b16 %v311
      %v377 = vpack.c.b16 %v346, %v345
      %v378 = vpack.c.b16 %v348, %v347
      %v379 = vpack.c.b16 %v350, %v349
      %v380 = vpack.c.b16 %v352, %v351
      %v381 = vpack.c.b16 %v354, %v353
      %v382 = vpack.c.b16 %v356, %v355
      %v383 = vpack.c.b16 %v358, %v357
      %v384 = vpack.c.b16 %v360, %v359
      %v385 = vpack.c.b16 %v362, %v361
      %v386 = vpack.c.b16 %v364, %v363
      %v387 = vpack.c.b16 %v366, %v365
      %v388 = vpack.c.b16 %v368, %v367
      %v389 = vpack.c.b16 %v370, %v369
      %v390 = vpack.c.b16 %v372, %v371
      %v391 = vpack.c.b16 %v374, %v373
      %v392 = vpack.c.b16 %v376, %v375
      %vm393 = vcmask 31744
      %v395 = vsel %vm393, %v377, 0
      %v398 = vsel %vm393, %v378, 0
      %v401 = vsel %vm393, %v379, 0
      %v404 = vsel %vm393, %v380, 0
      %v407 = vsel %vm393, %v381, 0
      %v410 = vsel %vm393, %v382, 0
      %v413 = vsel %vm393, %v383, 0
      %v416 = vsel %vm393, %v384, 0
      %v419 = vsel %vm393, %v385, 0
      %v422 = vsel %vm393, %v386, 0
      %v425 = vsel %vm393, %v387, 0
      %v428 = vsel %vm393, %v388, 0
      %v431 = vsel %vm393, %v389, 0
      %v434 = vsel %vm393, %v390, 0
      %v437 = vsel %vm393, %v391, 0
      %v440 = vsel %vm393, %v392, 0
      %vm442 = vcmask 1041408
      %v444 = vsel %vm442, %v312, 0
      %446 = vmatprep.subr.bf16.mxu0 0
      %447 = vmatpush1.bf16.msra.mxu0 0
      %448 = vmatprep.subr.bf16.mxu0 0
      %449 = vmatpush1.bf16.msra.mxu0 0
      %450 = vmatprep.subr.bf16.mxu0 0
      %451 = vmatpush1.bf16.msra.mxu0 0
      %452 = vmatprep.subr.bf16.mxu0 0
      %453 = vmatpush1.bf16.msra.mxu0 0
      %454 = vmatprep.subr.bf16.mxu0 0
      %455 = vmatpush1.bf16.msra.mxu0 0
      %456 = vmatprep.subr.bf16.mxu0 0
      %457 = vmatpush1.bf16.msra.mxu0 0
      %458 = vmatprep.subr.bf16.mxu0 0
      %459 = vmatpush1.bf16.msra.mxu0 0
      %460 = vmatprep.subr.bf16.mxu0 0
      %461 = vmatpush1.bf16.msra.mxu0 %v444
      %462 = vmatprep.subr.bf16.mxu0 0
      %463 = vmatpush2.bf16.msra.mxu0 0
      %464 = vmatprep.subr.bf16.mxu0 0
      %465 = vmatpush2.bf16.msra.mxu0 0
      %466 = vmatprep.subr.bf16.mxu0 0
      %467 = vmatpush2.bf16.msra.mxu0 0
      %468 = vmatprep.subr.bf16.mxu0 0
      %469 = vmatpush2.bf16.msra.mxu0 0
      %470 = vmatprep.subr.bf16.mxu0 0
      %471 = vmatpush2.bf16.msra.mxu0 0
      %472 = vmatprep.subr.bf16.mxu0 0
      %473 = vmatpush2.bf16.msra.mxu0 0
      %474 = vmatprep.subr.bf16.mxu0 0
      %475 = vmatpush2.bf16.msra.mxu0 0
      %476 = vmatprep.subr.bf16.mxu0 0
      %477 = vmatpush2.bf16.msra.mxu0 0
      %478 = vmatprep.mubr.bf16.mxu0 0
      %479 = vmatmul.mubr.bf16.gmra.mxu0 %v395
      %v480 = vpop.f32.mrf.mxu0
      %v481 = vadd.f32 0.0, %v480
      %v482 = vpop.f32.mrf.mxu0
      %v483 = vpop.f32.mrf.mxu0
      %v484 = vadd.f32 0.0, %v483
      %v485 = vpop.f32.mrf.mxu0
      %486 = vmatprep.mubr.bf16.mxu0 0
      %487 = vmatmul.mubr.bf16.gmra.mxu0 %v398
      %v488 = vpop.f32.mrf.mxu0
      %v489 = vadd.f32 0.0, %v488
      %v490 = vpop.f32.mrf.mxu0
      %v491 = vpop.f32.mrf.mxu0
      %v492 = vadd.f32 0.0, %v491
      %v493 = vpop.f32.mrf.mxu0
      %494 = vmatprep.mubr.bf16.mxu0 0
      %495 = vmatmul.mubr.bf16.gmra.mxu0 %v401
      %v496 = vpop.f32.mrf.mxu0
      %v497 = vadd.f32 0.0, %v496
      %v498 = vpop.f32.mrf.mxu0
      %v499 = vpop.f32.mrf.mxu0
      %v500 = vadd.f32 0.0, %v499
      %v501 = vpop.f32.mrf.mxu0
      %502 = vmatprep.mubr.bf16.mxu0 0
      %503 = vmatmul.mubr.bf16.gmra.mxu0 %v404
      %v504 = vpop.f32.mrf.mxu0
      %v505 = vadd.f32 0.0, %v504
      %v506 = vpop.f32.mrf.mxu0
      %v507 = vpop.f32.mrf.mxu0
      %v508 = vadd.f32 0.0, %v507
      %v509 = vpop.f32.mrf.mxu0
      %510 = vmatprep.mubr.bf16.mxu0 0
      %511 = vmatmul.mubr.bf16.gmra.mxu0 %v407
      %v512 = vpop.f32.mrf.mxu0
      %v513 = vadd.f32 0.0, %v512
      %v514 = vpop.f32.mrf.mxu0
      %v515 = vpop.f32.mrf.mxu0
      %v516 = vadd.f32 0.0, %v515
      %v517 = vpop.f32.mrf.mxu0
      %518 = vmatprep.mubr.bf16.mxu0 0
      %519 = vmatmul.mubr.bf16.gmra.mxu0 %v410
      %v520 = vpop.f32.mrf.mxu0
      %v521 = vadd.f32 0.0, %v520
      %v522 = vpop.f32.mrf.mxu0
      %v523 = vpop.f32.mrf.mxu0
      %v524 = vadd.f32 0.0, %v523
      %v525 = vpop.f32.mrf.mxu0
      %526 = vmatprep.mubr.bf16.mxu0 0
      %527 = vmatmul.mubr.bf16.gmra.mxu0 %v413
      %v528 = vpop.f32.mrf.mxu0
      %v529 = vadd.f32 0.0, %v528
      %v530 = vpop.f32.mrf.mxu0
      %v531 = vpop.f32.mrf.mxu0
      %v532 = vadd.f32 0.0, %v531
      %v533 = vpop.f32.mrf.mxu0
      %534 = vmatprep.mubr.bf16.mxu0 0
      %535 = vmatmul.mubr.bf16.gmra.mxu0 %v416
      %v536 = vpop.f32.mrf.mxu0
      %v537 = vadd.f32 0.0, %v536
      %v538 = vpop.f32.mrf.mxu0
      %v539 = vpop.f32.mrf.mxu0
      %v540 = vadd.f32 0.0, %v539
      %v541 = vpop.f32.mrf.mxu0
      %542 = vmatprep.mubr.bf16.mxu0 0
      %543 = vmatmul.mubr.bf16.gmra.mxu0 %v419
      %v544 = vpop.f32.mrf.mxu0
      %v545 = vadd.f32 0.0, %v544
      %v546 = vpop.f32.mrf.mxu0
      %v547 = vpop.f32.mrf.mxu0
      %v548 = vadd.f32 0.0, %v547
      %v549 = vpop.f32.mrf.mxu0
      %550 = vmatprep.mubr.bf16.mxu0 0
      %551 = vmatmul.mubr.bf16.gmra.mxu0 %v422
      %v552 = vpop.f32.mrf.mxu0
      %v553 = vadd.f32 0.0, %v552
      %v554 = vpop.f32.mrf.mxu0
      %v555 = vpop.f32.mrf.mxu0
      %v556 = vadd.f32 0.0, %v555
      %v557 = vpop.f32.mrf.mxu0
      %558 = vmatprep.mubr.bf16.mxu0 0
      %559 = vmatmul.mubr.bf16.gmra.mxu0 %v425
      %v560 = vpop.f32.mrf.mxu0
      %v561 = vadd.f32 0.0, %v560
      %v562 = vpop.f32.mrf.mxu0
      %v563 = vpop.f32.mrf.mxu0
      %v564 = vadd.f32 0.0, %v563
      %v565 = vpop.f32.mrf.mxu0
      %566 = vmatprep.mubr.bf16.mxu0 0
      %567 = vmatmul.mubr.bf16.gmra.mxu0 %v428
      %v568 = vpop.f32.mrf.mxu0
      %v569 = vadd.f32 0.0, %v568
      %v570 = vpop.f32.mrf.mxu0
      %v571 = vpop.f32.mrf.mxu0
      %v572 = vadd.f32 0.0, %v571
      %v573 = vpop.f32.mrf.mxu0
      %574 = vmatprep.mubr.bf16.mxu0 0
      %575 = vmatmul.mubr.bf16.gmra.mxu0 %v431
      %v576 = vpop.f32.mrf.mxu0
      %v577 = vadd.f32 0.0, %v576
      %v578 = vpop.f32.mrf.mxu0
      %v579 = vpop.f32.mrf.mxu0
      %v580 = vadd.f32 0.0, %v579
      %v581 = vpop.f32.mrf.mxu0
      %582 = vmatprep.mubr.bf16.mxu0 0
      %583 = vmatmul.mubr.bf16.gmra.mxu0 %v434
      %v584 = vpop.f32.mrf.mxu0
      %v585 = vadd.f32 0.0, %v584
      %v586 = vpop.f32.mrf.mxu0
      %v587 = vpop.f32.mrf.mxu0
      %v588 = vadd.f32 0.0, %v587
      %v589 = vpop.f32.mrf.mxu0
      %590 = vmatprep.mubr.bf16.mxu0 0
      %591 = vmatmul.mubr.bf16.gmra.mxu0 %v437
      %v592 = vpop.f32.mrf.mxu0
      %v593 = vadd.f32 0.0, %v592
      %v594 = vpop.f32.mrf.mxu0
      %v595 = vpop.f32.mrf.mxu0
      %v596 = vadd.f32 0.0, %v595
      %v597 = vpop.f32.mrf.mxu0
      %598 = vmatprep.mubr.bf16.mxu0 0
      %599 = vmatmul.mubr.bf16.gmra.mxu0 %v440
      %v600 = vpop.f32.mrf.mxu0
      %v601 = vadd.f32 0.0, %v600
      %v602 = vpop.f32.mrf.mxu0
      %v603 = vpop.f32.mrf.mxu0
      %v604 = vadd.f32 0.0, %v603
      %v605 = vpop.f32.mrf.mxu0
      %606 = vdwg.mxu0
      %v607 = vld [vmem:[%s2] sm:$0x1]
      %v609 = vlaneseq
      %v610 = vshrl.u32 %v609, 7
      %v611 = vsub.s32 0, %v610
      %v612 = vrot.slane %v607, %v611
      %v614 = vmul.f32 %v481, %v612
      %v615 = vmul.f32 %v484, %v612
      %v616 = vmul.f32 %v489, %v612
      %v617 = vmul.f32 %v492, %v612
      %v618 = vmul.f32 %v497, %v612
      %v619 = vmul.f32 %v500, %v612
      %v620 = vmul.f32 %v505, %v612
      %v621 = vmul.f32 %v508, %v612
      %v622 = vmul.f32 %v513, %v612
      %v623 = vmul.f32 %v516, %v612
      %v624 = vmul.f32 %v521, %v612
      %v625 = vmul.f32 %v524, %v612
      %v626 = vmul.f32 %v529, %v612
      %v627 = vmul.f32 %v532, %v612
      %v628 = vmul.f32 %v537, %v612
      %v629 = vmul.f32 %v540, %v612
      %v630 = vmul.f32 %v545, %v612
      %v631 = vmul.f32 %v548, %v612
      %v632 = vmul.f32 %v553, %v612
      %v633 = vmul.f32 %v556, %v612
      %v634 = vmul.f32 %v561, %v612
      %v635 = vmul.f32 %v564, %v612
      %v636 = vmul.f32 %v569, %v612
      %v637 = vmul.f32 %v572, %v612
      %v638 = vmul.f32 %v577, %v612
      %v639 = vmul.f32 %v580, %v612
      %v640 = vmul.f32 %v585, %v612
      %v641 = vmul.f32 %v588, %v612
      %v642 = vmul.f32 %v593, %v612
      %v643 = vmul.f32 %v596, %v612
      %v644 = vmul.f32 %v601, %v612
      %v645 = vmul.f32 %v604, %v612
      %v646 = vld [vmem:[%s3] sm:$0x1]
      %v648 = vlaneseq
      %v649 = vshrl.u32 %v648, 7
      %v650 = vsub.s32 0, %v649
      %v651 = vrot.slane %v646, %v650
      %v653 = vadd.f32 %v614, %v651
      %v654 = vadd.f32 %v615, %v651
      %v655 = vadd.f32 %v616, %v651
      %v656 = vadd.f32 %v617, %v651
      %v657 = vadd.f32 %v618, %v651
      %v658 = vadd.f32 %v619, %v651
      %v659 = vadd.f32 %v620, %v651
      %v660 = vadd.f32 %v621, %v651
      %v661 = vadd.f32 %v622, %v651
      %v662 = vadd.f32 %v623, %v651
      %v663 = vadd.f32 %v624, %v651
      %v664 = vadd.f32 %v625, %v651
      %v665 = vadd.f32 %v626, %v651
      %v666 = vadd.f32 %v627, %v651
      %v667 = vadd.f32 %v628, %v651
      %v668 = vadd.f32 %v629, %v651
      %v669 = vadd.f32 %v630, %v651
      %v670 = vadd.f32 %v631, %v651
      %v671 = vadd.f32 %v632, %v651
      %v672 = vadd.f32 %v633, %v651
      %v673 = vadd.f32 %v634, %v651
      %v674 = vadd.f32 %v635, %v651
      %v675 = vadd.f32 %v636, %v651
      %v676 = vadd.f32 %v637, %v651
      %v677 = vadd.f32 %v638, %v651
      %v678 = vadd.f32 %v639, %v651
      %v679 = vadd.f32 %v640, %v651
      %v680 = vadd.f32 %v641, %v651
      %v681 = vadd.f32 %v642, %v651
      %v682 = vadd.f32 %v643, %v651
      %v683 = vadd.f32 %v644, %v651
      %v684 = vadd.f32 %v645, %v651
      %v685 = vxor.u32 %v653, 2147483648
      %v686 = vxor.u32 %v654, 2147483648
      %v687 = vxor.u32 %v655, 2147483648
      %v688 = vxor.u32 %v656, 2147483648
      %v689 = vxor.u32 %v657, 2147483648
      %v690 = vxor.u32 %v658, 2147483648
      %v691 = vxor.u32 %v659, 2147483648
      %v692 = vxor.u32 %v660, 2147483648
      %v693 = vxor.u32 %v661, 2147483648
      %v694 = vxor.u32 %v662, 2147483648
      %v695 = vxor.u32 %v663, 2147483648
      %v696 = vxor.u32 %v664, 2147483648
      %v697 = vxor.u32 %v665, 2147483648
      %v698 = vxor.u32 %v666, 2147483648
      %v699 = vxor.u32 %v667, 2147483648
      %v700 = vxor.u32 %v668, 2147483648
      %v701 = vxor.u32 %v669, 2147483648
      %v702 = vxor.u32 %v670, 2147483648
      %v703 = vxor.u32 %v671, 2147483648
      %v704 = vxor.u32 %v672, 2147483648
      %v705 = vxor.u32 %v673, 2147483648
      %v706 = vxor.u32 %v674, 2147483648
      %v707 = vxor.u32 %v675, 2147483648
      %v708 = vxor.u32 %v676, 2147483648
      %v709 = vxor.u32 %v677, 2147483648
      %v710 = vxor.u32 %v678, 2147483648
      %v711 = vxor.u32 %v679, 2147483648
      %v712 = vxor.u32 %v680, 2147483648
      %v713 = vxor.u32 %v681, 2147483648
      %v714 = vxor.u32 %v682, 2147483648
      %v715 = vxor.u32 %v683, 2147483648
      %v716 = vxor.u32 %v684, 2147483648
      %v717 = vmul.f32 %v685, 1.442695
      %v718 = vpow.pop %v717
      %v719 = vmul.f32 %v686, 1.442695
      %v720 = vpow.pop %v719
      %v721 = vmul.f32 %v687, 1.442695
      %v722 = vpow.pop %v721
      %v723 = vmul.f32 %v688, 1.442695
      %v724 = vpow.pop %v723
      %v725 = vmul.f32 %v689, 1.442695
      %v726 = vpow.pop %v725
      %v727 = vmul.f32 %v690, 1.442695
      %v728 = vpow.pop %v727
      %v729 = vmul.f32 %v691, 1.442695
      %v730 = vpow.pop %v729
      %v731 = vmul.f32 %v692, 1.442695
      %v732 = vpow.pop %v731
      %v733 = vmul.f32 %v693, 1.442695
      %v734 = vpow.pop %v733
      %v735 = vmul.f32 %v694, 1.442695
      %v736 = vpow.pop %v735
      %v737 = vmul.f32 %v695, 1.442695
      %v738 = vpow.pop %v737
      %v739 = vmul.f32 %v696, 1.442695
      %v740 = vpow.pop %v739
      %v741 = vmul.f32 %v697, 1.442695
      %v742 = vpow.pop %v741
      %v743 = vmul.f32 %v698, 1.442695
      %v744 = vpow.pop %v743
      %v745 = vmul.f32 %v699, 1.442695
      %v746 = vpow.pop %v745
      %v747 = vmul.f32 %v700, 1.442695
      %v748 = vpow.pop %v747
      %v749 = vmul.f32 %v701, 1.442695
      %v750 = vpow.pop %v749
      %v751 = vmul.f32 %v702, 1.442695
      %v752 = vpow.pop %v751
      %v753 = vmul.f32 %v703, 1.442695
      %v754 = vpow.pop %v753
      %v755 = vmul.f32 %v704, 1.442695
      %v756 = vpow.pop %v755
      %v757 = vmul.f32 %v705, 1.442695
      %v758 = vpow.pop %v757
      %v759 = vmul.f32 %v706, 1.442695
      %v760 = vpow.pop %v759
      %v761 = vmul.f32 %v707, 1.442695
      %v762 = vpow.pop %v761
      %v763 = vmul.f32 %v708, 1.442695
      %v764 = vpow.pop %v763
      %v765 = vmul.f32 %v709, 1.442695
      %v766 = vpow.pop %v765
      %v767 = vmul.f32 %v710, 1.442695
      %v768 = vpow.pop %v767
      %v769 = vmul.f32 %v711, 1.442695
      %v770 = vpow.pop %v769
      %v771 = vmul.f32 %v712, 1.442695
      %v772 = vpow.pop %v771
      %v773 = vmul.f32 %v713, 1.442695
      %v774 = vpow.pop %v773
      %v775 = vmul.f32 %v714, 1.442695
      %v776 = vpow.pop %v775
      %v777 = vmul.f32 %v715, 1.442695
      %v778 = vpow.pop %v777
      %v779 = vmul.f32 %v716, 1.442695
      %v780 = vpow.pop %v779
      %v781 = vadd.f32 %v718, 1.0
      %v782 = vadd.f32 %v720, 1.0
      %v783 = vadd.f32 %v722, 1.0
      %v784 = vadd.f32 %v724, 1.0
      %v785 = vadd.f32 %v726, 1.0
      %v786 = vadd.f32 %v728, 1.0
      %v787 = vadd.f32 %v730, 1.0
      %v788 = vadd.f32 %v732, 1.0
      %v789 = vadd.f32 %v734, 1.0
      %v790 = vadd.f32 %v736, 1.0
      %v791 = vadd.f32 %v738, 1.0
      %v792 = vadd.f32 %v740, 1.0
      %v793 = vadd.f32 %v742, 1.0
      %v794 = vadd.f32 %v744, 1.0
      %v795 = vadd.f32 %v746, 1.0
      %v796 = vadd.f32 %v748, 1.0
      %v797 = vadd.f32 %v750, 1.0
      %v798 = vadd.f32 %v752, 1.0
      %v799 = vadd.f32 %v754, 1.0
      %v800 = vadd.f32 %v756, 1.0
      %v801 = vadd.f32 %v758, 1.0
      %v802 = vadd.f32 %v760, 1.0
      %v803 = vadd.f32 %v762, 1.0
      %v804 = vadd.f32 %v764, 1.0
      %v805 = vadd.f32 %v766, 1.0
      %v806 = vadd.f32 %v768, 1.0
      %v807 = vadd.f32 %v770, 1.0
      %v808 = vadd.f32 %v772, 1.0
      %v809 = vadd.f32 %v774, 1.0
      %v810 = vadd.f32 %v776, 1.0
      %v811 = vadd.f32 %v778, 1.0
      %v812 = vadd.f32 %v780, 1.0
      %v813 = vrcp.pop %v781
      %v814 = vmul.f32 1.0, %v813
      %v815 = vrcp.pop %v782
      %v816 = vmul.f32 1.0, %v815
      %v817 = vrcp.pop %v783
      %v818 = vmul.f32 1.0, %v817
      %v819 = vrcp.pop %v784
      %v820 = vmul.f32 1.0, %v819
      %v821 = vrcp.pop %v785
      %v822 = vmul.f32 1.0, %v821
      %v823 = vrcp.pop %v786
      %v824 = vmul.f32 1.0, %v823
      %v825 = vrcp.pop %v787
      %v826 = vmul.f32 1.0, %v825
      %v827 = vrcp.pop %v788
      %v828 = vmul.f32 1.0, %v827
      %v829 = vrcp.pop %v789
      %v830 = vmul.f32 1.0, %v829
      %v831 = vrcp.pop %v790
      %v832 = vmul.f32 1.0, %v831
      %v833 = vrcp.pop %v791
      %v834 = vmul.f32 1.0, %v833
      %v835 = vrcp.pop %v792
      %v836 = vmul.f32 1.0, %v835
      %v837 = vrcp.pop %v793
      %v838 = vmul.f32 1.0, %v837
      %v839 = vrcp.pop %v794
      %v840 = vmul.f32 1.0, %v839
      %v841 = vrcp.pop %v795
      %v842 = vmul.f32 1.0, %v841
      %v843 = vrcp.pop %v796
      %v844 = vmul.f32 1.0, %v843
      %v845 = vrcp.pop %v797
      %v846 = vmul.f32 1.0, %v845
      %v847 = vrcp.pop %v798
      %v848 = vmul.f32 1.0, %v847
      %v849 = vrcp.pop %v799
      %v850 = vmul.f32 1.0, %v849
      %v851 = vrcp.pop %v800
      %v852 = vmul.f32 1.0, %v851
      %v853 = vrcp.pop %v801
      %v854 = vmul.f32 1.0, %v853
      %v855 = vrcp.pop %v802
      %v856 = vmul.f32 1.0, %v855
      %v857 = vrcp.pop %v803
      %v858 = vmul.f32 1.0, %v857
      %v859 = vrcp.pop %v804
      %v860 = vmul.f32 1.0, %v859
      %v861 = vrcp.pop %v805
      %v862 = vmul.f32 1.0, %v861
      %v863 = vrcp.pop %v806
      %v864 = vmul.f32 1.0, %v863
      %v865 = vrcp.pop %v807
      %v866 = vmul.f32 1.0, %v865
      %v867 = vrcp.pop %v808
      %v868 = vmul.f32 1.0, %v867
      %v869 = vrcp.pop %v809
      %v870 = vmul.f32 1.0, %v869
      %v871 = vrcp.pop %v810
      %v872 = vmul.f32 1.0, %v871
      %v873 = vrcp.pop %v811
      %v874 = vmul.f32 1.0, %v873
      %v875 = vrcp.pop %v812
      %v876 = vmul.f32 1.0, %v875
      %v877 = vmul.f32 %v653, %v814
      %v878 = vmul.f32 %v654, %v816
      %v879 = vmul.f32 %v655, %v818
      %v880 = vmul.f32 %v656, %v820
      %v881 = vmul.f32 %v657, %v822
      %v882 = vmul.f32 %v658, %v824
      %v883 = vmul.f32 %v659, %v826
      %v884 = vmul.f32 %v660, %v828
      %v885 = vmul.f32 %v661, %v830
      %v886 = vmul.f32 %v662, %v832
      %v887 = vmul.f32 %v663, %v834
      %v888 = vmul.f32 %v664, %v836
      %v889 = vmul.f32 %v665, %v838
      %v890 = vmul.f32 %v666, %v840
      %v891 = vmul.f32 %v667, %v842
      %v892 = vmul.f32 %v668, %v844
      %v893 = vmul.f32 %v669, %v846
      %v894 = vmul.f32 %v670, %v848
      %v895 = vmul.f32 %v671, %v850
      %v896 = vmul.f32 %v672, %v852
      %v897 = vmul.f32 %v673, %v854
      %v898 = vmul.f32 %v674, %v856
      %v899 = vmul.f32 %v675, %v858
      %v900 = vmul.f32 %v676, %v860
      %v901 = vmul.f32 %v677, %v862
      %v902 = vmul.f32 %v678, %v864
      %v903 = vmul.f32 %v679, %v866
      %v904 = vmul.f32 %v680, %v868
      %v905 = vmul.f32 %v681, %v870
      %v906 = vmul.f32 %v682, %v872
      %v907 = vmul.f32 %v683, %v874
      %v908 = vmul.f32 %v684, %v876
      %909 = vst.msk [vmem:[%s278] sm:$0xff] %vm393, %v877
      %910 = vst.msk [vmem:[%s278 + $0x8] sm:$0xff] %vm393, %v878
      %911 = vst.msk [vmem:[%s278 + $0x10] sm:$0xff] %vm393, %v879
      %912 = vst.msk [vmem:[%s278 + $0x18] sm:$0xff] %vm393, %v880
      %913 = vst.msk [vmem:[%s278 + $0x20] sm:$0xff] %vm393, %v881
      %914 = vst.msk [vmem:[%s278 + $0x28] sm:$0xff] %vm393, %v882
      %915 = vst.msk [vmem:[%s278 + $0x30] sm:$0xff] %vm393, %v883
      %916 = vst.msk [vmem:[%s278 + $0x38] sm:$0xff] %vm393, %v884
      %917 = vst.msk [vmem:[%s278 + $0x40] sm:$0xff] %vm393, %v885
      %918 = vst.msk [vmem:[%s278 + $0x48] sm:$0xff] %vm393, %v886
      %919 = vst.msk [vmem:[%s278 + $0x50] sm:$0xff] %vm393, %v887
      %920 = vst.msk [vmem:[%s278 + $0x58] sm:$0xff] %vm393, %v888
      %921 = vst.msk [vmem:[%s278 + $0x60] sm:$0xff] %vm393, %v889
      %922 = vst.msk [vmem:[%s278 + $0x68] sm:$0xff] %vm393, %v890
      %923 = vst.msk [vmem:[%s278 + $0x70] sm:$0xff] %vm393, %v891
      %924 = vst.msk [vmem:[%s278 + $0x78] sm:$0xff] %vm393, %v892
      %925 = vst.msk [vmem:[%s278 + $0x80] sm:$0xff] %vm393, %v893
      %926 = vst.msk [vmem:[%s278 + $0x88] sm:$0xff] %vm393, %v894
      %927 = vst.msk [vmem:[%s278 + $0x90] sm:$0xff] %vm393, %v895
      %928 = vst.msk [vmem:[%s278 + $0x98] sm:$0xff] %vm393, %v896
      %929 = vst.msk [vmem:[%s278 + $0xa0] sm:$0xff] %vm393, %v897
      %930 = vst.msk [vmem:[%s278 + $0xa8] sm:$0xff] %vm393, %v898
      %931 = vst.msk [vmem:[%s278 + $0xb0] sm:$0xff] %vm393, %v899
      %932 = vst.msk [vmem:[%s278 + $0xb8] sm:$0xff] %vm393, %v900
      %933 = vst.msk [vmem:[%s278 + $0xc0] sm:$0xff] %vm393, %v901
      %934 = vst.msk [vmem:[%s278 + $0xc8] sm:$0xff] %vm393, %v902
      %935 = vst.msk [vmem:[%s278 + $0xd0] sm:$0xff] %vm393, %v903
      %936 = vst.msk [vmem:[%s278 + $0xd8] sm:$0xff] %vm393, %v904
      %937 = vst.msk [vmem:[%s278 + $0xe0] sm:$0xff] %vm393, %v905
      %938 = vst.msk [vmem:[%s278 + $0xe8] sm:$0xff] %vm393, %v906
      %939 = vst.msk [vmem:[%s278 + $0xf0] sm:$0xff] %vm393, %v907
      %940 = vst.msk [vmem:[%s278 + $0xf8] sm:$0xff] %vm393, %v908
      %941 = vst.msk [vmem:[#allocation2] sm:$0xff] %vm393, 0.0
      %942 = vst.msk [vmem:[#allocation2 + $0x8] sm:$0xff] %vm393, 0.0
      %943 = vst.msk [vmem:[#allocation2 + $0x10] sm:$0xff] %vm393, 0.0
      %944 = vst.msk [vmem:[#allocation2 + $0x18] sm:$0xff] %vm393, 0.0
      %945 = vst.msk [vmem:[#allocation2 + $0x20] sm:$0xff] %vm393, 0.0
      %946 = vst.msk [vmem:[#allocation2 + $0x28] sm:$0xff] %vm393, 0.0
      %947 = vst.msk [vmem:[#allocation2 + $0x30] sm:$0xff] %vm393, 0.0
      %948 = vst.msk [vmem:[#allocation2 + $0x38] sm:$0xff] %vm393, 0.0
      %949 = vst.msk [vmem:[#allocation2 + $0x40] sm:$0xff] %vm393, 0.0
      %950 = vst.msk [vmem:[#allocation2 + $0x48] sm:$0xff] %vm393, 0.0
      %951 = vst.msk [vmem:[#allocation2 + $0x50] sm:$0xff] %vm393, 0.0
      %952 = vst.msk [vmem:[#allocation2 + $0x58] sm:$0xff] %vm393, 0.0
      %953 = vst.msk [vmem:[#allocation2 + $0x60] sm:$0xff] %vm393, 0.0
      %954 = vst.msk [vmem:[#allocation2 + $0x68] sm:$0xff] %vm393, 0.0
      %955 = vst.msk [vmem:[#allocation2 + $0x70] sm:$0xff] %vm393, 0.0
      %956 = vst.msk [vmem:[#allocation2 + $0x78] sm:$0xff] %vm393, 0.0
      %957 = vst.msk [vmem:[#allocation2 + $0x80] sm:$0xff] %vm393, 0.0
      %958 = vst.msk [vmem:[#allocation2 + $0x88] sm:$0xff] %vm393, 0.0
      %959 = vst.msk [vmem:[#allocation2 + $0x90] sm:$0xff] %vm393, 0.0
      %960 = vst.msk [vmem:[#allocation2 + $0x98] sm:$0xff] %vm393, 0.0
      %961 = vst.msk [vmem:[#allocation2 + $0xa0] sm:$0xff] %vm393, 0.0
      %962 = vst.msk [vmem:[#allocation2 + $0xa8] sm:$0xff] %vm393, 0.0
      %963 = vst.msk [vmem:[#allocation2 + $0xb0] sm:$0xff] %vm393, 0.0
      %964 = vst.msk [vmem:[#allocation2 + $0xb8] sm:$0xff] %vm393, 0.0
      %965 = vst.msk [vmem:[#allocation2 + $0xc0] sm:$0xff] %vm393, 0.0
      %966 = vst.msk [vmem:[#allocation2 + $0xc8] sm:$0xff] %vm393, 0.0
      %967 = vst.msk [vmem:[#allocation2 + $0xd0] sm:$0xff] %vm393, 0.0
      %968 = vst.msk [vmem:[#allocation2 + $0xd8] sm:$0xff] %vm393, 0.0
      %969 = vst.msk [vmem:[#allocation2 + $0xe0] sm:$0xff] %vm393, 0.0
      %970 = vst.msk [vmem:[#allocation2 + $0xe8] sm:$0xff] %vm393, 0.0
      %971 = vst.msk [vmem:[#allocation2 + $0xf0] sm:$0xff] %vm393, 0.0
      %972 = vst.msk [vmem:[#allocation2 + $0xf8] sm:$0xff] %vm393, 0.0
      %973 = vst.msk [vmem:[#allocation2 + $0x100] sm:$0xff] %vm393, 0.0
      %974 = vst.msk [vmem:[#allocation2 + $0x108] sm:$0xff] %vm393, 0.0
      %975 = vst.msk [vmem:[#allocation2 + $0x110] sm:$0xff] %vm393, 0.0
      %976 = vst.msk [vmem:[#allocation2 + $0x118] sm:$0xff] %vm393, 0.0
      %977 = vst.msk [vmem:[#allocation2 + $0x120] sm:$0xff] %vm393, 0.0
      %978 = vst.msk [vmem:[#allocation2 + $0x128] sm:$0xff] %vm393, 0.0
      %979 = vst.msk [vmem:[#allocation2 + $0x130] sm:$0xff] %vm393, 0.0
      %980 = vst.msk [vmem:[#allocation2 + $0x138] sm:$0xff] %vm393, 0.0
      %981 = vst.msk [vmem:[#allocation2 + $0x140] sm:$0xff] %vm393, 0.0
      %982 = vst.msk [vmem:[#allocation2 + $0x148] sm:$0xff] %vm393, 0.0
      %983 = vst.msk [vmem:[#allocation2 + $0x150] sm:$0xff] %vm393, 0.0
      %984 = vst.msk [vmem:[#allocation2 + $0x158] sm:$0xff] %vm393, 0.0
      %985 = vst.msk [vmem:[#allocation2 + $0x160] sm:$0xff] %vm393, 0.0
      %986 = vst.msk [vmem:[#allocation2 + $0x168] sm:$0xff] %vm393, 0.0
      %987 = vst.msk [vmem:[#allocation2 + $0x170] sm:$0xff] %vm393, 0.0
      %988 = vst.msk [vmem:[#allocation2 + $0x178] sm:$0xff] %vm393, 0.0
      %989 = vst.msk [vmem:[#allocation2 + $0x180] sm:$0xff] %vm393, 0.0
      %990 = vst.msk [vmem:[#allocation2 + $0x188] sm:$0xff] %vm393, 0.0
      %991 = vst.msk [vmem:[#allocation2 + $0x190] sm:$0xff] %vm393, 0.0
      %992 = vst.msk [vmem:[#allocation2 + $0x198] sm:$0xff] %vm393, 0.0
      %993 = vst.msk [vmem:[#allocation2 + $0x1a0] sm:$0xff] %vm393, 0.0
      %994 = vst.msk [vmem:[#allocation2 + $0x1a8] sm:$0xff] %vm393, 0.0
      %995 = vst.msk [vmem:[#allocation2 + $0x1b0] sm:$0xff] %vm393, 0.0
      %996 = vst.msk [vmem:[#allocation2 + $0x1b8] sm:$0xff] %vm393, 0.0
      %997 = vst.msk [vmem:[#allocation2 + $0x1c0] sm:$0xff] %vm393, 0.0
      %998 = vst.msk [vmem:[#allocation2 + $0x1c8] sm:$0xff] %vm393, 0.0
      %999 = vst.msk [vmem:[#allocation2 + $0x1d0] sm:$0xff] %vm393, 0.0
      %1000 = vst.msk [vmem:[#allocation2 + $0x1d8] sm:$0xff] %vm393, 0.0
      %1001 = vst.msk [vmem:[#allocation2 + $0x1e0] sm:$0xff] %vm393, 0.0
      %1002 = vst.msk [vmem:[#allocation2 + $0x1e8] sm:$0xff] %vm393, 0.0
      %1003 = vst.msk [vmem:[#allocation2 + $0x1f0] sm:$0xff] %vm393, 0.0
      %1004 = vst.msk [vmem:[#allocation2 + $0x1f8] sm:$0xff] %vm393, 0.0
      %1005 = vst.msk [vmem:[#allocation2 + $0x200] sm:$0xff] %vm393, 0.0
      %1006 = vst.msk [vmem:[#allocation2 + $0x208] sm:$0xff] %vm393, 0.0
      %1007 = vst.msk [vmem:[#allocation2 + $0x210] sm:$0xff] %vm393, 0.0
      %1008 = vst.msk [vmem:[#allocation2 + $0x218] sm:$0xff] %vm393, 0.0
      %1009 = vst.msk [vmem:[#allocation2 + $0x220] sm:$0xff] %vm393, 0.0
      %1010 = vst.msk [vmem:[#allocation2 + $0x228] sm:$0xff] %vm393, 0.0
      %1011 = vst.msk [vmem:[#allocation2 + $0x230] sm:$0xff] %vm393, 0.0
      %1012 = vst.msk [vmem:[#allocation2 + $0x238] sm:$0xff] %vm393, 0.0
      %1013 = vst.msk [vmem:[#allocation2 + $0x240] sm:$0xff] %vm393, 0.0
      %1014 = vst.msk [vmem:[#allocation2 + $0x248] sm:$0xff] %vm393, 0.0
      %1015 = vst.msk [vmem:[#allocation2 + $0x250] sm:$0xff] %vm393, 0.0
      %1016 = vst.msk [vmem:[#allocation2 + $0x258] sm:$0xff] %vm393, 0.0
      %1017 = vst.msk [vmem:[#allocation2 + $0x260] sm:$0xff] %vm393, 0.0
      %1018 = vst.msk [vmem:[#allocation2 + $0x268] sm:$0xff] %vm393, 0.0
      %1019 = vst.msk [vmem:[#allocation2 + $0x270] sm:$0xff] %vm393, 0.0
      %1020 = vst.msk [vmem:[#allocation2 + $0x278] sm:$0xff] %vm393, 0.0
      %s1021 = scalar_lea.vmem [#allocation2], 64
      %1022 = vst.msk [vmem:[%s1021 + $0x8] sm:$0xff] %vm393, %v877
      %1023 = vst.msk [vmem:[%s1021 + $0x10] sm:$0xff] %vm393, %v878
      %1024 = vst.msk [vmem:[%s1021 + $0x28] sm:$0xff] %vm393, %v879
      %1025 = vst.msk [vmem:[%s1021 + $0x30] sm:$0xff] %vm393, %v880
      %1026 = vst.msk [vmem:[%s1021 + $0x48] sm:$0xff] %vm393, %v881
      %1027 = vst.msk [vmem:[%s1021 + $0x50] sm:$0xff] %vm393, %v882
      %1028 = vst.msk [vmem:[%s1021 + $0x68] sm:$0xff] %vm393, %v883
      %1029 = vst.msk [vmem:[%s1021 + $0x70] sm:$0xff] %vm393, %v884
      %1030 = vst.msk [vmem:[%s1021 + $0x88] sm:$0xff] %vm393, %v885
      %1031 = vst.msk [vmem:[%s1021 + $0x90] sm:$0xff] %vm393, %v886
      %1032 = vst.msk [vmem:[%s1021 + $0xa8] sm:$0xff] %vm393, %v887
      %1033 = vst.msk [vmem:[%s1021 + $0xb0] sm:$0xff] %vm393, %v888
      %1034 = vst.msk [vmem:[%s1021 + $0xc8] sm:$0xff] %vm393, %v889
      %1035 = vst.msk [vmem:[%s1021 + $0xd0] sm:$0xff] %vm393, %v890
      %1036 = vst.msk [vmem:[%s1021 + $0xe8] sm:$0xff] %vm393, %v891
      %1037 = vst.msk [vmem:[%s1021 + $0xf0] sm:$0xff] %vm393, %v892
      %1038 = vst.msk [vmem:[%s1021 + $0x108] sm:$0xff] %vm393, %v893
      %1039 = vst.msk [vmem:[%s1021 + $0x110] sm:$0xff] %vm393, %v894
      %1040 = vst.msk [vmem:[%s1021 + $0x128] sm:$0xff] %vm393, %v895
      %1041 = vst.msk [vmem:[%s1021 + $0x130] sm:$0xff] %vm393, %v896
      %1042 = vst.msk [vmem:[%s1021 + $0x148] sm:$0xff] %vm393, %v897
      %1043 = vst.msk [vmem:[%s1021 + $0x150] sm:$0xff] %vm393, %v898
      %1044 = vst.msk [vmem:[%s1021 + $0x168] sm:$0xff] %vm393, %v899
      %1045 = vst.msk [vmem:[%s1021 + $0x170] sm:$0xff] %vm393, %v900
      %1046 = vst.msk [vmem:[%s1021 + $0x188] sm:$0xff] %vm393, %v901
      %1047 = vst.msk [vmem:[%s1021 + $0x190] sm:$0xff] %vm393, %v902
      %1048 = vst.msk [vmem:[%s1021 + $0x1a8] sm:$0xff] %vm393, %v903
      %1049 = vst.msk [vmem:[%s1021 + $0x1b0] sm:$0xff] %vm393, %v904
      %1050 = vst.msk [vmem:[%s1021 + $0x1c8] sm:$0xff] %vm393, %v905
      %1051 = vst.msk [vmem:[%s1021 + $0x1d0] sm:$0xff] %vm393, %v906
      %1052 = vst.msk [vmem:[%s1021 + $0x1e8] sm:$0xff] %vm393, %v907
      %1053 = vst.msk [vmem:[%s1021 + $0x1f0] sm:$0xff] %vm393, %v908
      %v1054 = vld [vmem:[#allocation2] sm:$0xff]
      %v1055 = vld [vmem:[#allocation2 + $0x8] sm:$0xff]
      %v1056 = vld [vmem:[#allocation2 + $0x10] sm:$0xff]
      %v1057 = vld [vmem:[#allocation2 + $0x18] sm:$0xff]
      %v1058 = vld [vmem:[#allocation2 + $0x20] sm:$0xff]
      %v1059 = vld [vmem:[#allocation2 + $0x28] sm:$0xff]
      %v1060 = vld [vmem:[#allocation2 + $0x30] sm:$0xff]
      %v1061 = vld [vmem:[#allocation2 + $0x38] sm:$0xff]
      %v1062 = vld [vmem:[#allocation2 + $0x40] sm:$0xff]
      %v1063 = vld [vmem:[#allocation2 + $0x48] sm:$0xff]
      %v1064 = vld [vmem:[#allocation2 + $0x50] sm:$0xff]
      %v1065 = vld [vmem:[#allocation2 + $0x58] sm:$0xff]
      %v1066 = vld [vmem:[#allocation2 + $0x60] sm:$0xff]
      %v1067 = vld [vmem:[#allocation2 + $0x68] sm:$0xff]
      %v1068 = vld [vmem:[#allocation2 + $0x70] sm:$0xff]
      %v1069 = vld [vmem:[#allocation2 + $0x78] sm:$0xff]
      %v1070 = vld [vmem:[#allocation2 + $0x80] sm:$0xff]
      %v1071 = vld [vmem:[#allocation2 + $0x88] sm:$0xff]
      %v1072 = vld [vmem:[#allocation2 + $0x90] sm:$0xff]
      %v1073 = vld [vmem:[#allocation2 + $0x98] sm:$0xff]
      %v1074 = vld [vmem:[#allocation2 + $0xa0] sm:$0xff]
      %v1075 = vld [vmem:[#allocation2 + $0xa8] sm:$0xff]
      %v1076 = vld [vmem:[#allocation2 + $0xb0] sm:$0xff]
      %v1077 = vld [vmem:[#allocation2 + $0xb8] sm:$0xff]
      %v1078 = vld [vmem:[#allocation2 + $0xc0] sm:$0xff]
      %v1079 = vld [vmem:[#allocation2 + $0xc8] sm:$0xff]
      %v1080 = vld [vmem:[#allocation2 + $0xd0] sm:$0xff]
      %v1081 = vld [vmem:[#allocation2 + $0xd8] sm:$0xff]
      %v1082 = vld [vmem:[#allocation2 + $0xe0] sm:$0xff]
      %v1083 = vld [vmem:[#allocation2 + $0xe8] sm:$0xff]
      %v1084 = vld [vmem:[#allocation2 + $0xf0] sm:$0xff]
      %v1085 = vld [vmem:[#allocation2 + $0xf8] sm:$0xff]
      %v1086 = vld [vmem:[#allocation2 + $0x100] sm:$0xff]
      %v1087 = vld [vmem:[#allocation2 + $0x108] sm:$0xff]
      %v1088 = vld [vmem:[#allocation2 + $0x110] sm:$0xff]
      %v1089 = vld [vmem:[#allocation2 + $0x118] sm:$0xff]
      %v1090 = vld [vmem:[#allocation2 + $0x120] sm:$0xff]
      %v1091 = vld [vmem:[#allocation2 + $0x128] sm:$0xff]
      %v1092 = vld [vmem:[#allocation2 + $0x130] sm:$0xff]
      %v1093 = vld [vmem:[#allocation2 + $0x138] sm:$0xff]
      %v1094 = vld [vmem:[#allocation2 + $0x140] sm:$0xff]
      %v1095 = vld [vmem:[#allocation2 + $0x148] sm:$0xff]
      %v1096 = vld [vmem:[#allocation2 + $0x150] sm:$0xff]
      %v1097 = vld [vmem:[#allocation2 + $0x158] sm:$0xff]
      %v1098 = vld [vmem:[#allocation2 + $0x160] sm:$0xff]
      %v1099 = vld [vmem:[#allocation2 + $0x168] sm:$0xff]
      %v1100 = vld [vmem:[#allocation2 + $0x170] sm:$0xff]
      %v1101 = vld [vmem:[#allocation2 + $0x178] sm:$0xff]
      %v1102 = vld [vmem:[#allocation2 + $0x180] sm:$0xff]
      %v1103 = vld [vmem:[#allocation2 + $0x188] sm:$0xff]
      %v1104 = vld [vmem:[#allocation2 + $0x190] sm:$0xff]
      %v1105 = vld [vmem:[#allocation2 + $0x198] sm:$0xff]
      %v1106 = vld [vmem:[#allocation2 + $0x1a0] sm:$0xff]
      %v1107 = vld [vmem:[#allocation2 + $0x1a8] sm:$0xff]
      %v1108 = vld [vmem:[#allocation2 + $0x1b0] sm:$0xff]
      %v1109 = vld [vmem:[#allocation2 + $0x1b8] sm:$0xff]
      %v1110 = vld [vmem:[#allocation2 + $0x1c0] sm:$0xff]
      %v1111 = vld [vmem:[#allocation2 + $0x1c8] sm:$0xff]
      %v1112 = vld [vmem:[#allocation2 + $0x1d0] sm:$0xff]
      %v1113 = vld [vmem:[#allocation2 + $0x1d8] sm:$0xff]
      %v1114 = vld [vmem:[#allocation2 + $0x1e0] sm:$0xff]
      %v1115 = vld [vmem:[#allocation2 + $0x1e8] sm:$0xff]
      %v1116 = vld [vmem:[#allocation2 + $0x1f0] sm:$0xff]
      %v1117 = vld [vmem:[#allocation2 + $0x1f8] sm:$0xff]
      %v1118 = vld [vmem:[#allocation2 + $0x200] sm:$0xff]
      %v1119 = vld [vmem:[#allocation2 + $0x208] sm:$0xff]
      %v1120 = vld [vmem:[#allocation2 + $0x210] sm:$0xff]
      %v1121 = vld [vmem:[#allocation2 + $0x218] sm:$0xff]
      %v1122 = vld [vmem:[#allocation2 + $0x220] sm:$0xff]
      %v1123 = vld [vmem:[#allocation2 + $0x228] sm:$0xff]
      %v1124 = vld [vmem:[#allocation2 + $0x230] sm:$0xff]
      %v1125 = vld [vmem:[#allocation2 + $0x238] sm:$0xff]
      %v1126 = vld [vmem:[#allocation2 + $0x240] sm:$0xff]
      %v1127 = vld [vmem:[#allocation2 + $0x248] sm:$0xff]
      %v1128 = vld [vmem:[#allocation2 + $0x250] sm:$0xff]
      %v1129 = vld [vmem:[#allocation2 + $0x258] sm:$0xff]
      %v1130 = vld [vmem:[#allocation2 + $0x260] sm:$0xff]
      %v1131 = vld [vmem:[#allocation2 + $0x268] sm:$0xff]
      %v1132 = vld [vmem:[#allocation2 + $0x270] sm:$0xff]
      %v1133 = vld [vmem:[#allocation2 + $0x278] sm:$0xff]
      %v1134 = vld [vmem:[%s4] sm:$0x1]
      %v1135 = vlaneseq
      %v1136 = vshrl.u32 %v1135, 7
      %v1137 = vsub.s32 0, %v1136
      %v1138 = vrot.slane %v1134, %v1137
      %v1139 = vmul.f32 %v1054, %v1138
      %v1140 = vmul.f32 %v1055, %v1138
      %v1141 = vmul.f32 %v1056, %v1138
      %v1142 = vmul.f32 %v1058, %v1138
      %v1143 = vmul.f32 %v1059, %v1138
      %v1144 = vmul.f32 %v1060, %v1138
      %v1145 = vmul.f32 %v1062, %v1138
      %v1146 = vmul.f32 %v1063, %v1138
      %v1147 = vmul.f32 %v1064, %v1138
      %v1148 = vmul.f32 %v1066, %v1138
      %v1149 = vmul.f32 %v1067, %v1138
      %v1150 = vmul.f32 %v1068, %v1138
      %v1151 = vmul.f32 %v1070, %v1138
      %v1152 = vmul.f32 %v1071, %v1138
      %v1153 = vmul.f32 %v1072, %v1138
      %v1154 = vmul.f32 %v1074, %v1138
      %v1155 = vmul.f32 %v1075, %v1138
      %v1156 = vmul.f32 %v1076, %v1138
      %v1157 = vmul.f32 %v1078, %v1138
      %v1158 = vmul.f32 %v1079, %v1138
      %v1159 = vmul.f32 %v1080, %v1138
      %v1160 = vmul.f32 %v1082, %v1138
      %v1161 = vmul.f32 %v1083, %v1138
      %v1162 = vmul.f32 %v1084, %v1138
      %v1163 = vmul.f32 %v1086, %v1138
      %v1164 = vmul.f32 %v1087, %v1138
      %v1165 = vmul.f32 %v1088, %v1138
      %v1166 = vmul.f32 %v1090, %v1138
      %v1167 = vmul.f32 %v1091, %v1138
      %v1168 = vmul.f32 %v1092, %v1138
      %v1169 = vmul.f32 %v1094, %v1138
      %v1170 = vmul.f32 %v1095, %v1138
      %v1171 = vmul.f32 %v1096, %v1138
      %v1172 = vmul.f32 %v1098, %v1138
      %v1173 = vmul.f32 %v1099, %v1138
      %v1174 = vmul.f32 %v1100, %v1138
      %v1175 = vmul.f32 %v1102, %v1138
      %v1176 = vmul.f32 %v1103, %v1138
      %v1177 = vmul.f32 %v1104, %v1138
      %v1178 = vmul.f32 %v1106, %v1138
      %v1179 = vmul.f32 %v1107, %v1138
      %v1180 = vmul.f32 %v1108, %v1138
      %v1181 = vmul.f32 %v1110, %v1138
      %v1182 = vmul.f32 %v1111, %v1138
      %v1183 = vmul.f32 %v1112, %v1138
      %v1184 = vmul.f32 %v1114, %v1138
      %v1185 = vmul.f32 %v1115, %v1138
      %v1186 = vmul.f32 %v1116, %v1138
      %v1187 = vadd.f32 %v1139, 0.0
      %v1188 = vadd.f32 %v1140, 0.0
      %v1189 = vadd.f32 %v1141, 0.0
      %v1190 = vadd.f32 %v1142, 0.0
      %v1191 = vadd.f32 %v1143, 0.0
      %v1192 = vadd.f32 %v1144, 0.0
      %v1193 = vadd.f32 %v1145, 0.0
      %v1194 = vadd.f32 %v1146, 0.0
      %v1195 = vadd.f32 %v1147, 0.0
      %v1196 = vadd.f32 %v1148, 0.0
      %v1197 = vadd.f32 %v1149, 0.0
      %v1198 = vadd.f32 %v1150, 0.0
      %v1199 = vadd.f32 %v1151, 0.0
      %v1200 = vadd.f32 %v1152, 0.0
      %v1201 = vadd.f32 %v1153, 0.0
      %v1202 = vadd.f32 %v1154, 0.0
      %v1203 = vadd.f32 %v1155, 0.0
      %v1204 = vadd.f32 %v1156, 0.0
      %v1205 = vadd.f32 %v1157, 0.0
      %v1206 = vadd.f32 %v1158, 0.0
      %v1207 = vadd.f32 %v1159, 0.0
      %v1208 = vadd.f32 %v1160, 0.0
      %v1209 = vadd.f32 %v1161, 0.0
      %v1210 = vadd.f32 %v1162, 0.0
      %v1211 = vadd.f32 %v1163, 0.0
      %v1212 = vadd.f32 %v1164, 0.0
      %v1213 = vadd.f32 %v1165, 0.0
      %v1214 = vadd.f32 %v1166, 0.0
      %v1215 = vadd.f32 %v1167, 0.0
      %v1216 = vadd.f32 %v1168, 0.0
      %v1217 = vadd.f32 %v1169, 0.0
      %v1218 = vadd.f32 %v1170, 0.0
      %v1219 = vadd.f32 %v1171, 0.0
      %v1220 = vadd.f32 %v1172, 0.0
      %v1221 = vadd.f32 %v1173, 0.0
      %v1222 = vadd.f32 %v1174, 0.0
      %v1223 = vadd.f32 %v1175, 0.0
      %v1224 = vadd.f32 %v1176, 0.0
      %v1225 = vadd.f32 %v1177, 0.0
      %v1226 = vadd.f32 %v1178, 0.0
      %v1227 = vadd.f32 %v1179, 0.0
      %v1228 = vadd.f32 %v1180, 0.0
      %v1229 = vadd.f32 %v1181, 0.0
      %v1230 = vadd.f32 %v1182, 0.0
      %v1231 = vadd.f32 %v1183, 0.0
      %v1232 = vadd.f32 %v1184, 0.0
      %v1233 = vadd.f32 %v1185, 0.0
      %v1234 = vadd.f32 %v1186, 0.0
      %v1235 = vld [vmem:[%s4 + $0x1] sm:$0x1]
      %v1236 = vlaneseq
      %v1237 = vshrl.u32 %v1236, 7
      %v1238 = vsub.s32 0, %v1237
      %v1239 = vrot.slane %v1235, %v1238
      %v1240 = vmul.f32 %v1054, %v1239
      %v1241 = vmul.f32 %v1055, %v1239
      %v1242 = vmul.f32 %v1056, %v1239
      %v1243 = vmul.f32 %v1058, %v1239
      %v1244 = vmul.f32 %v1059, %v1239
      %v1245 = vmul.f32 %v1060, %v1239
      %v1246 = vmul.f32 %v1062, %v1239
      %v1247 = vmul.f32 %v1063, %v1239
      %v1248 = vmul.f32 %v1064, %v1239
      %v1249 = vmul.f32 %v1066, %v1239
      %v1250 = vmul.f32 %v1067, %v1239
      %v1251 = vmul.f32 %v1068, %v1239
      %v1252 = vmul.f32 %v1070, %v1239
      %v1253 = vmul.f32 %v1071, %v1239
      %v1254 = vmul.f32 %v1072, %v1239
      %v1255 = vmul.f32 %v1074, %v1239
      %v1256 = vmul.f32 %v1075, %v1239
      %v1257 = vmul.f32 %v1076, %v1239
      %v1258 = vmul.f32 %v1078, %v1239
      %v1259 = vmul.f32 %v1079, %v1239
      %v1260 = vmul.f32 %v1080, %v1239
      %v1261 = vmul.f32 %v1082, %v1239
      %v1262 = vmul.f32 %v1083, %v1239
      %v1263 = vmul.f32 %v1084, %v1239
      %v1264 = vmul.f32 %v1086, %v1239
      %v1265 = vmul.f32 %v1087, %v1239
      %v1266 = vmul.f32 %v1088, %v1239
      %v1267 = vmul.f32 %v1090, %v1239
      %v1268 = vmul.f32 %v1091, %v1239
      %v1269 = vmul.f32 %v1092, %v1239
      %v1270 = vmul.f32 %v1094, %v1239
      %v1271 = vmul.f32 %v1095, %v1239
      %v1272 = vmul.f32 %v1096, %v1239
      %v1273 = vmul.f32 %v1098, %v1239
      %v1274 = vmul.f32 %v1099, %v1239
      %v1275 = vmul.f32 %v1100, %v1239
      %v1276 = vmul.f32 %v1102, %v1239
      %v1277 = vmul.f32 %v1103, %v1239
      %v1278 = vmul.f32 %v1104, %v1239
      %v1279 = vmul.f32 %v1106, %v1239
      %v1280 = vmul.f32 %v1107, %v1239
      %v1281 = vmul.f32 %v1108, %v1239
      %v1282 = vmul.f32 %v1110, %v1239
      %v1283 = vmul.f32 %v1111, %v1239
      %v1284 = vmul.f32 %v1112, %v1239
      %v1285 = vmul.f32 %v1114, %v1239
      %v1286 = vmul.f32 %v1115, %v1239
      %v1287 = vmul.f32 %v1116, %v1239
      %vm1336 = vcmask 1046528
      %v1337 = vrot.slane %v1240, 1
      %v1338 = vrot.slane %v1241, 1
      %v1339 = vsel %vm1336, %v1337, %v1338
      %v1340 = vrot.slane %v1242, 1
      %v1341 = vsel %vm1336, %v1338, %v1340
      %v1342 = vrot.slane %v1243, 1
      %v1343 = vrot.slane %v1244, 1
      %v1344 = vsel %vm1336, %v1342, %v1343
      %v1345 = vrot.slane %v1245, 1
      %v1346 = vsel %vm1336, %v1343, %v1345
      %v1347 = vrot.slane %v1246, 1
      %v1348 = vrot.slane %v1247, 1
      %v1349 = vsel %vm1336, %v1347, %v1348
      %v1350 = vrot.slane %v1248, 1
      %v1351 = vsel %vm1336, %v1348, %v1350
      %v1352 = vrot.slane %v1249, 1
      %v1353 = vrot.slane %v1250, 1
      %v1354 = vsel %vm1336, %v1352, %v1353
      %v1355 = vrot.slane %v1251, 1
      %v1356 = vsel %vm1336, %v1353, %v1355
      %v1357 = vrot.slane %v1252, 1
      %v1358 = vrot.slane %v1253, 1
      %v1359 = vsel %vm1336, %v1357, %v1358
      %v1360 = vrot.slane %v1254, 1
      %v1361 = vsel %vm1336, %v1358, %v1360
      %v1362 = vrot.slane %v1255, 1
      %v1363 = vrot.slane %v1256, 1
      %v1364 = vsel %vm1336, %v1362, %v1363
      %v1365 = vrot.slane %v1257, 1
      %v1366 = vsel %vm1336, %v1363, %v1365
      %v1367 = vrot.slane %v1258, 1
      %v1368 = vrot.slane %v1259, 1
      %v1369 = vsel %vm1336, %v1367, %v1368
      %v1370 = vrot.slane %v1260, 1
      %v1371 = vsel %vm1336, %v1368, %v1370
      %v1372 = vrot.slane %v1261, 1
      %v1373 = vrot.slane %v1262, 1
      %v1374 = vsel %vm1336, %v1372, %v1373
      %v1375 = vrot.slane %v1263, 1
      %v1376 = vsel %vm1336, %v1373, %v1375
      %v1377 = vrot.slane %v1264, 1
      %v1378 = vrot.slane %v1265, 1
      %v1379 = vsel %vm1336, %v1377, %v1378
      %v1380 = vrot.slane %v1266, 1
      %v1381 = vsel %vm1336, %v1378, %v1380
      %v1382 = vrot.slane %v1267, 1
      %v1383 = vrot.slane %v1268, 1
      %v1384 = vsel %vm1336, %v1382, %v1383
      %v1385 = vrot.slane %v1269, 1
      %v1386 = vsel %vm1336, %v1383, %v1385
      %v1387 = vrot.slane %v1270, 1
      %v1388 = vrot.slane %v1271, 1
      %v1389 = vsel %vm1336, %v1387, %v1388
      %v1390 = vrot.slane %v1272, 1
      %v1391 = vsel %vm1336, %v1388, %v1390
      %v1392 = vrot.slane %v1273, 1
      %v1393 = vrot.slane %v1274, 1
      %v1394 = vsel %vm1336, %v1392, %v1393
      %v1395 = vrot.slane %v1275, 1
      %v1396 = vsel %vm1336, %v1393, %v1395
      %v1397 = vrot.slane %v1276, 1
      %v1398 = vrot.slane %v1277, 1
      %v1399 = vsel %vm1336, %v1397, %v1398
      %v1400 = vrot.slane %v1278, 1
      %v1401 = vsel %vm1336, %v1398, %v1400
      %v1402 = vrot.slane %v1279, 1
      %v1403 = vrot.slane %v1280, 1
      %v1404 = vsel %vm1336, %v1402, %v1403
      %v1405 = vrot.slane %v1281, 1
      %v1406 = vsel %vm1336, %v1403, %v1405
      %v1407 = vrot.slane %v1282, 1
      %v1408 = vrot.slane %v1283, 1
      %v1409 = vsel %vm1336, %v1407, %v1408
      %v1410 = vrot.slane %v1284, 1
      %v1411 = vsel %vm1336, %v1408, %v1410
      %v1412 = vrot.slane %v1285, 1
      %v1413 = vrot.slane %v1286, 1
      %v1414 = vsel %vm1336, %v1412, %v1413
      %v1415 = vrot.slane %v1287, 1
      %v1416 = vsel %vm1336, %v1413, %v1415
      %v1465 = vadd.f32 %v1187, %v1339
      %v1466 = vadd.f32 %v1188, %v1341
      %v1467 = vadd.f32 %v1189, %v1340
      %v1468 = vadd.f32 %v1190, %v1344
      %v1469 = vadd.f32 %v1191, %v1346
      %v1470 = vadd.f32 %v1192, %v1345
      %v1471 = vadd.f32 %v1193, %v1349
      %v1472 = vadd.f32 %v1194, %v1351
      %v1473 = vadd.f32 %v1195, %v1350
      %v1474 = vadd.f32 %v1196, %v1354
      %v1475 = vadd.f32 %v1197, %v1356
      %v1476 = vadd.f32 %v1198, %v1355
      %v1477 = vadd.f32 %v1199, %v1359
      %v1478 = vadd.f32 %v1200, %v1361
      %v1479 = vadd.f32 %v1201, %v1360
      %v1480 = vadd.f32 %v1202, %v1364
      %v1481 = vadd.f32 %v1203, %v1366
      %v1482 = vadd.f32 %v1204, %v1365
      %v1483 = vadd.f32 %v1205, %v1369
      %v1484 = vadd.f32 %v1206, %v1371
      %v1485 = vadd.f32 %v1207, %v1370
      %v1486 = vadd.f32 %v1208, %v1374
      %v1487 = vadd.f32 %v1209, %v1376
      %v1488 = vadd.f32 %v1210, %v1375
      %v1489 = vadd.f32 %v1211, %v1379
      %v1490 = vadd.f32 %v1212, %v1381
      %v1491 = vadd.f32 %v1213, %v1380
      %v1492 = vadd.f32 %v1214, %v1384
      %v1493 = vadd.f32 %v1215, %v1386
      %v1494 = vadd.f32 %v1216, %v1385
      %v1495 = vadd.f32 %v1217, %v1389
      %v1496 = vadd.f32 %v1218, %v1391
      %v1497 = vadd.f32 %v1219, %v1390
      %v1498 = vadd.f32 %v1220, %v1394
      %v1499 = vadd.f32 %v1221, %v1396
      %v1500 = vadd.f32 %v1222, %v1395
      %v1501 = vadd.f32 %v1223, %v1399
      %v1502 = vadd.f32 %v1224, %v1401
      %v1503 = vadd.f32 %v1225, %v1400
      %v1504 = vadd.f32 %v1226, %v1404
      %v1505 = vadd.f32 %v1227, %v1406
      %v1506 = vadd.f32 %v1228, %v1405
      %v1507 = vadd.f32 %v1229, %v1409
      %v1508 = vadd.f32 %v1230, %v1411
      %v1509 = vadd.f32 %v1231, %v1410
      %v1510 = vadd.f32 %v1232, %v1414
      %v1511 = vadd.f32 %v1233, %v1416
      %v1512 = vadd.f32 %v1234, %v1415
      %v1513 = vld [vmem:[%s4 + $0x2] sm:$0x1]
      %v1514 = vlaneseq
      %v1515 = vshrl.u32 %v1514, 7
      %v1516 = vsub.s32 0, %v1515
      %v1517 = vrot.slane %v1513, %v1516
      %v1518 = vmul.f32 %v1055, %v1517
      %v1519 = vmul.f32 %v1056, %v1517
      %v1520 = vmul.f32 %v1059, %v1517
      %v1521 = vmul.f32 %v1060, %v1517
      %v1522 = vmul.f32 %v1063, %v1517
      %v1523 = vmul.f32 %v1064, %v1517
      %v1524 = vmul.f32 %v1067, %v1517
      %v1525 = vmul.f32 %v1068, %v1517
      %v1526 = vmul.f32 %v1071, %v1517
      %v1527 = vmul.f32 %v1072, %v1517
      %v1528 = vmul.f32 %v1075, %v1517
      %v1529 = vmul.f32 %v1076, %v1517
      %v1530 = vmul.f32 %v1079, %v1517
      %v1531 = vmul.f32 %v1080, %v1517
      %v1532 = vmul.f32 %v1083, %v1517
      %v1533 = vmul.f32 %v1084, %v1517
      %v1534 = vmul.f32 %v1087, %v1517
      %v1535 = vmul.f32 %v1088, %v1517
      %v1536 = vmul.f32 %v1091, %v1517
      %v1537 = vmul.f32 %v1092, %v1517
      %v1538 = vmul.f32 %v1095, %v1517
      %v1539 = vmul.f32 %v1096, %v1517
      %v1540 = vmul.f32 %v1099, %v1517
      %v1541 = vmul.f32 %v1100, %v1517
      %v1542 = vmul.f32 %v1103, %v1517
      %v1543 = vmul.f32 %v1104, %v1517
      %v1544 = vmul.f32 %v1107, %v1517
      %v1545 = vmul.f32 %v1108, %v1517
      %v1546 = vmul.f32 %v1111, %v1517
      %v1547 = vmul.f32 %v1112, %v1517
      %v1548 = vmul.f32 %v1115, %v1517
      %v1549 = vmul.f32 %v1116, %v1517
      %vm1582 = vcmask 1045504
      %v1583 = vrot.slane %v1518, 2
      %v1584 = vrot.slane %v1519, 2
      %v1585 = vsel %vm1582, %v1583, %v1584
      %v1586 = vrot.slane %v1520, 2
      %v1587 = vrot.slane %v1521, 2
      %v1588 = vsel %vm1582, %v1586, %v1587
      %v1589 = vrot.slane %v1522, 2
      %v1590 = vrot.slane %v1523, 2
      %v1591 = vsel %vm1582, %v1589, %v1590
      %v1592 = vrot.slane %v1524, 2
      %v1593 = vrot.slane %v1525, 2
      %v1594 = vsel %vm1582, %v1592, %v1593
      %v1595 = vrot.slane %v1526, 2
      %v1596 = vrot.slane %v1527, 2
      %v1597 = vsel %vm1582, %v1595, %v1596
      %v1598 = vrot.slane %v1528, 2
      %v1599 = vrot.slane %v1529, 2
      %v1600 = vsel %vm1582, %v1598, %v1599
      %v1601 = vrot.slane %v1530, 2
      %v1602 = vrot.slane %v1531, 2
      %v1603 = vsel %vm1582, %v1601, %v1602
      %v1604 = vrot.slane %v1532, 2
      %v1605 = vrot.slane %v1533, 2
      %v1606 = vsel %vm1582, %v1604, %v1605
      %v1607 = vrot.slane %v1534, 2
      %v1608 = vrot.slane %v1535, 2
      %v1609 = vsel %vm1582, %v1607, %v1608
      %v1610 = vrot.slane %v1536, 2
      %v1611 = vrot.slane %v1537, 2
      %v1612 = vsel %vm1582, %v1610, %v1611
      %v1613 = vrot.slane %v1538, 2
      %v1614 = vrot.slane %v1539, 2
      %v1615 = vsel %vm1582, %v1613, %v1614
      %v1616 = vrot.slane %v1540, 2
      %v1617 = vrot.slane %v1541, 2
      %v1618 = vsel %vm1582, %v1616, %v1617
      %v1619 = vrot.slane %v1542, 2
      %v1620 = vrot.slane %v1543, 2
      %v1621 = vsel %vm1582, %v1619, %v1620
      %v1622 = vrot.slane %v1544, 2
      %v1623 = vrot.slane %v1545, 2
      %v1624 = vsel %vm1582, %v1622, %v1623
      %v1625 = vrot.slane %v1546, 2
      %v1626 = vrot.slane %v1547, 2
      %v1627 = vsel %vm1582, %v1625, %v1626
      %v1628 = vrot.slane %v1548, 2
      %v1629 = vrot.slane %v1549, 2
      %v1630 = vsel %vm1582, %v1628, %v1629
      %v1679 = vadd.f32 %v1465, %v1583
      %v1680 = vadd.f32 %v1466, %v1585
      %v1681 = vadd.f32 %v1467, %v1584
      %v1682 = vadd.f32 %v1468, %v1586
      %v1683 = vadd.f32 %v1469, %v1588
      %v1684 = vadd.f32 %v1470, %v1587
      %v1685 = vadd.f32 %v1471, %v1589
      %v1686 = vadd.f32 %v1472, %v1591
      %v1687 = vadd.f32 %v1473, %v1590
      %v1688 = vadd.f32 %v1474, %v1592
      %v1689 = vadd.f32 %v1475, %v1594
      %v1690 = vadd.f32 %v1476, %v1593
      %v1691 = vadd.f32 %v1477, %v1595
      %v1692 = vadd.f32 %v1478, %v1597
      %v1693 = vadd.f32 %v1479, %v1596
      %v1694 = vadd.f32 %v1480, %v1598
      %v1695 = vadd.f32 %v1481, %v1600
      %v1696 = vadd.f32 %v1482, %v1599
      %v1697 = vadd.f32 %v1483, %v1601
      %v1698 = vadd.f32 %v1484, %v1603
      %v1699 = vadd.f32 %v1485, %v1602
      %v1700 = vadd.f32 %v1486, %v1604
      %v1701 = vadd.f32 %v1487, %v1606
      %v1702 = vadd.f32 %v1488, %v1605
      %v1703 = vadd.f32 %v1489, %v1607
      %v1704 = vadd.f32 %v1490, %v1609
      %v1705 = vadd.f32 %v1491, %v1608
      %v1706 = vadd.f32 %v1492, %v1610
      %v1707 = vadd.f32 %v1493, %v1612
      %v1708 = vadd.f32 %v1494, %v1611
      %v1709 = vadd.f32 %v1495, %v1613
      %v1710 = vadd.f32 %v1496, %v1615
      %v1711 = vadd.f32 %v1497, %v1614
      %v1712 = vadd.f32 %v1498, %v1616
      %v1713 = vadd.f32 %v1499, %v1618
      %v1714 = vadd.f32 %v1500, %v1617
      %v1715 = vadd.f32 %v1501, %v1619
      %v1716 = vadd.f32 %v1502, %v1621
      %v1717 = vadd.f32 %v1503, %v1620
      %v1718 = vadd.f32 %v1504, %v1622
      %v1719 = vadd.f32 %v1505, %v1624
      %v1720 = vadd.f32 %v1506, %v1623
      %v1721 = vadd.f32 %v1507, %v1625
      %v1722 = vadd.f32 %v1508, %v1627
      %v1723 = vadd.f32 %v1509, %v1626
      %v1724 = vadd.f32 %v1510, %v1628
      %v1725 = vadd.f32 %v1511, %v1630
      %v1726 = vadd.f32 %v1512, %v1629
      %v1727 = vld [vmem:[%s4 + $0x3] sm:$0x1]
      %v1728 = vlaneseq
      %v1729 = vshrl.u32 %v1728, 7
      %v1730 = vsub.s32 0, %v1729
      %v1731 = vrot.slane %v1727, %v1730
      %v1732 = vmul.f32 %v1055, %v1731
      %v1733 = vmul.f32 %v1056, %v1731
      %v1734 = vmul.f32 %v1057, %v1731
      %v1735 = vmul.f32 %v1059, %v1731
      %v1736 = vmul.f32 %v1060, %v1731
      %v1737 = vmul.f32 %v1061, %v1731
      %v1738 = vmul.f32 %v1063, %v1731
      %v1739 = vmul.f32 %v1064, %v1731
      %v1740 = vmul.f32 %v1065, %v1731
      %v1741 = vmul.f32 %v1067, %v1731
      %v1742 = vmul.f32 %v1068, %v1731
      %v1743 = vmul.f32 %v1069, %v1731
      %v1744 = vmul.f32 %v1071, %v1731
      %v1745 = vmul.f32 %v1072, %v1731
      %v1746 = vmul.f32 %v1073, %v1731
      %v1747 = vmul.f32 %v1075, %v1731
      %v1748 = vmul.f32 %v1076, %v1731
      %v1749 = vmul.f32 %v1077, %v1731
      %v1750 = vmul.f32 %v1079, %v1731
      %v1751 = vmul.f32 %v1080, %v1731
      %v1752 = vmul.f32 %v1081, %v1731
      %v1753 = vmul.f32 %v1083, %v1731
      %v1754 = vmul.f32 %v1084, %v1731
      %v1755 = vmul.f32 %v1085, %v1731
      %v1756 = vmul.f32 %v1087, %v1731
      %v1757 = vmul.f32 %v1088, %v1731
      %v1758 = vmul.f32 %v1089, %v1731
      %v1759 = vmul.f32 %v1091, %v1731
      %v1760 = vmul.f32 %v1092, %v1731
      %v1761 = vmul.f32 %v1093, %v1731
      %v1762 = vmul.f32 %v1095, %v1731
      %v1763 = vmul.f32 %v1096, %v1731
      %v1764 = vmul.f32 %v1097, %v1731
      %v1765 = vmul.f32 %v1099, %v1731
      %v1766 = vmul.f32 %v1100, %v1731
      %v1767 = vmul.f32 %v1101, %v1731
      %v1768 = vmul.f32 %v1103, %v1731
      %v1769 = vmul.f32 %v1104, %v1731
      %v1770 = vmul.f32 %v1105, %v1731
      %v1771 = vmul.f32 %v1107, %v1731
      %v1772 = vmul.f32 %v1108, %v1731
      %v1773 = vmul.f32 %v1109, %v1731
      %v1774 = vmul.f32 %v1111, %v1731
      %v1775 = vmul.f32 %v1112, %v1731
      %v1776 = vmul.f32 %v1113, %v1731
      %v1777 = vmul.f32 %v1115, %v1731
      %v1778 = vmul.f32 %v1116, %v1731
      %v1779 = vmul.f32 %v1117, %v1731
      %vm1828 = vcmask 1044480
      %v1829 = vrot.slane %v1732, 3
      %v1830 = vrot.slane %v1733, 3
      %v1831 = vsel %vm1828, %v1829, %v1830
      %v1832 = vrot.slane %v1734, 3
      %v1833 = vsel %vm1828, %v1830, %v1832
      %v1834 = vrot.slane %v1735, 3
      %v1835 = vrot.slane %v1736, 3
      %v1836 = vsel %vm1828, %v1834, %v1835
      %v1837 = vrot.slane %v1737, 3
      %v1838 = vsel %vm1828, %v1835, %v1837
      %v1839 = vrot.slane %v1738, 3
      %v1840 = vrot.slane %v1739, 3
      %v1841 = vsel %vm1828, %v1839, %v1840
      %v1842 = vrot.slane %v1740, 3
      %v1843 = vsel %vm1828, %v1840, %v1842
      %v1844 = vrot.slane %v1741, 3
      %v1845 = vrot.slane %v1742, 3
      %v1846 = vsel %vm1828, %v1844, %v1845
      %v1847 = vrot.slane %v1743, 3
      %v1848 = vsel %vm1828, %v1845, %v1847
      %v1849 = vrot.slane %v1744, 3
      %v1850 = vrot.slane %v1745, 3
      %v1851 = vsel %vm1828, %v1849, %v1850
      %v1852 = vrot.slane %v1746, 3
      %v1853 = vsel %vm1828, %v1850, %v1852
      %v1854 = vrot.slane %v1747, 3
      %v1855 = vrot.slane %v1748, 3
      %v1856 = vsel %vm1828, %v1854, %v1855
      %v1857 = vrot.slane %v1749, 3
      %v1858 = vsel %vm1828, %v1855, %v1857
      %v1859 = vrot.slane %v1750, 3
      %v1860 = vrot.slane %v1751, 3
      %v1861 = vsel %vm1828, %v1859, %v1860
      %v1862 = vrot.slane %v1752, 3
      %v1863 = vsel %vm1828, %v1860, %v1862
      %v1864 = vrot.slane %v1753, 3
      %v1865 = vrot.slane %v1754, 3
      %v1866 = vsel %vm1828, %v1864, %v1865
      %v1867 = vrot.slane %v1755, 3
      %v1868 = vsel %vm1828, %v1865, %v1867
      %v1869 = vrot.slane %v1756, 3
      %v1870 = vrot.slane %v1757, 3
      %v1871 = vsel %vm1828, %v1869, %v1870
      %v1872 = vrot.slane %v1758, 3
      %v1873 = vsel %vm1828, %v1870, %v1872
      %v1874 = vrot.slane %v1759, 3
      %v1875 = vrot.slane %v1760, 3
      %v1876 = vsel %vm1828, %v1874, %v1875
      %v1877 = vrot.slane %v1761, 3
      %v1878 = vsel %vm1828, %v1875, %v1877
      %v1879 = vrot.slane %v1762, 3
      %v1880 = vrot.slane %v1763, 3
      %v1881 = vsel %vm1828, %v1879, %v1880
      %v1882 = vrot.slane %v1764, 3
      %v1883 = vsel %vm1828, %v1880, %v1882
      %v1884 = vrot.slane %v1765, 3
      %v1885 = vrot.slane %v1766, 3
      %v1886 = vsel %vm1828, %v1884, %v1885
      %v1887 = vrot.slane %v1767, 3
      %v1888 = vsel %vm1828, %v1885, %v1887
      %v1889 = vrot.slane %v1768, 3
      %v1890 = vrot.slane %v1769, 3
      %v1891 = vsel %vm1828, %v1889, %v1890
      %v1892 = vrot.slane %v1770, 3
      %v1893 = vsel %vm1828, %v1890, %v1892
      %v1894 = vrot.slane %v1771, 3
      %v1895 = vrot.slane %v1772, 3
      %v1896 = vsel %vm1828, %v1894, %v1895
      %v1897 = vrot.slane %v1773, 3
      %v1898 = vsel %vm1828, %v1895, %v1897
      %v1899 = vrot.slane %v1774, 3
      %v1900 = vrot.slane %v1775, 3
      %v1901 = vsel %vm1828, %v1899, %v1900
      %v1902 = vrot.slane %v1776, 3
      %v1903 = vsel %vm1828, %v1900, %v1902
      %v1904 = vrot.slane %v1777, 3
      %v1905 = vrot.slane %v1778, 3
      %v1906 = vsel %vm1828, %v1904, %v1905
      %v1907 = vrot.slane %v1779, 3
      %v1908 = vsel %vm1828, %v1905, %v1907
      %v1957 = vadd.f32 %v1679, %v1829
      %v1958 = vadd.f32 %v1680, %v1831
      %v1959 = vadd.f32 %v1681, %v1833
      %v1960 = vadd.f32 %v1682, %v1834
      %v1961 = vadd.f32 %v1683, %v1836
      %v1962 = vadd.f32 %v1684, %v1838
      %v1963 = vadd.f32 %v1685, %v1839
      %v1964 = vadd.f32 %v1686, %v1841
      %v1965 = vadd.f32 %v1687, %v1843
      %v1966 = vadd.f32 %v1688, %v1844
      %v1967 = vadd.f32 %v1689, %v1846
      %v1968 = vadd.f32 %v1690, %v1848
      %v1969 = vadd.f32 %v1691, %v1849
      %v1970 = vadd.f32 %v1692, %v1851
      %v1971 = vadd.f32 %v1693, %v1853
      %v1972 = vadd.f32 %v1694, %v1854
      %v1973 = vadd.f32 %v1695, %v1856
      %v1974 = vadd.f32 %v1696, %v1858
      %v1975 = vadd.f32 %v1697, %v1859
      %v1976 = vadd.f32 %v1698, %v1861
      %v1977 = vadd.f32 %v1699, %v1863
      %v1978 = vadd.f32 %v1700, %v1864
      %v1979 = vadd.f32 %v1701, %v1866
      %v1980 = vadd.f32 %v1702, %v1868
      %v1981 = vadd.f32 %v1703, %v1869
      %v1982 = vadd.f32 %v1704, %v1871
      %v1983 = vadd.f32 %v1705, %v1873
      %v1984 = vadd.f32 %v1706, %v1874
      %v1985 = vadd.f32 %v1707, %v1876
      %v1986 = vadd.f32 %v1708, %v1878
      %v1987 = vadd.f32 %v1709, %v1879
      %v1988 = vadd.f32 %v1710, %v1881
      %v1989 = vadd.f32 %v1711, %v1883
      %v1990 = vadd.f32 %v1712, %v1884
      %v1991 = vadd.f32 %v1713, %v1886
      %v1992 = vadd.f32 %v1714, %v1888
      %v1993 = vadd.f32 %v1715, %v1889
      %v1994 = vadd.f32 %v1716, %v1891
      %v1995 = vadd.f32 %v1717, %v1893
      %v1996 = vadd.f32 %v1718, %v1894
      %v1997 = vadd.f32 %v1719, %v1896
      %v1998 = vadd.f32 %v1720, %v1898
      %v1999 = vadd.f32 %v1721, %v1899
      %v2000 = vadd.f32 %v1722, %v1901
      %v2001 = vadd.f32 %v1723, %v1903
      %v2002 = vadd.f32 %v1724, %v1904
      %v2003 = vadd.f32 %v1725, %v1906
      %v2004 = vadd.f32 %v1726, %v1908
      %v2005 = vld [vmem:[%s4 + $0x4] sm:$0x1]
      %v2006 = vlaneseq
      %v2007 = vshrl.u32 %v2006, 7
      %v2008 = vsub.s32 0, %v2007
      %v2009 = vrot.slane %v2005, %v2008
      %v2010 = vmul.f32 %v1055, %v2009
      %v2011 = vmul.f32 %v1056, %v2009
      %v2012 = vmul.f32 %v1057, %v2009
      %v2013 = vmul.f32 %v1059, %v2009
      %v2014 = vmul.f32 %v1060, %v2009
      %v2015 = vmul.f32 %v1061, %v2009
      %v2016 = vmul.f32 %v1063, %v2009
      %v2017 = vmul.f32 %v1064, %v2009
      %v2018 = vmul.f32 %v1065, %v2009
      %v2019 = vmul.f32 %v1067, %v2009
      %v2020 = vmul.f32 %v1068, %v2009
      %v2021 = vmul.f32 %v1069, %v2009
      %v2022 = vmul.f32 %v1071, %v2009
      %v2023 = vmul.f32 %v1072, %v2009
      %v2024 = vmul.f32 %v1073, %v2009
      %v2025 = vmul.f32 %v1075, %v2009
      %v2026 = vmul.f32 %v1076, %v2009
      %v2027 = vmul.f32 %v1077, %v2009
      %v2028 = vmul.f32 %v1079, %v2009
      %v2029 = vmul.f32 %v1080, %v2009
      %v2030 = vmul.f32 %v1081, %v2009
      %v2031 = vmul.f32 %v1083, %v2009
      %v2032 = vmul.f32 %v1084, %v2009
      %v2033 = vmul.f32 %v1085, %v2009
      %v2034 = vmul.f32 %v1087, %v2009
      %v2035 = vmul.f32 %v1088, %v2009
      %v2036 = vmul.f32 %v1089, %v2009
      %v2037 = vmul.f32 %v1091, %v2009
      %v2038 = vmul.f32 %v1092, %v2009
      %v2039 = vmul.f32 %v1093, %v2009
      %v2040 = vmul.f32 %v1095, %v2009
      %v2041 = vmul.f32 %v1096, %v2009
      %v2042 = vmul.f32 %v1097, %v2009
      %v2043 = vmul.f32 %v1099, %v2009
      %v2044 = vmul.f32 %v1100, %v2009
      %v2045 = vmul.f32 %v1101, %v2009
      %v2046 = vmul.f32 %v1103, %v2009
      %v2047 = vmul.f32 %v1104, %v2009
      %v2048 = vmul.f32 %v1105, %v2009
      %v2049 = vmul.f32 %v1107, %v2009
      %v2050 = vmul.f32 %v1108, %v2009
      %v2051 = vmul.f32 %v1109, %v2009
      %v2052 = vmul.f32 %v1111, %v2009
      %v2053 = vmul.f32 %v1112, %v2009
      %v2054 = vmul.f32 %v1113, %v2009
      %v2055 = vmul.f32 %v1115, %v2009
      %v2056 = vmul.f32 %v1116, %v2009
      %v2057 = vmul.f32 %v1117, %v2009
      %vm2106 = vcmask 1043456
      %v2107 = vrot.slane %v2010, 4
      %v2108 = vrot.slane %v2011, 4
      %v2109 = vsel %vm2106, %v2107, %v2108
      %v2110 = vrot.slane %v2012, 4
      %v2111 = vsel %vm2106, %v2108, %v2110
      %v2112 = vrot.slane %v2013, 4
      %v2113 = vrot.slane %v2014, 4
      %v2114 = vsel %vm2106, %v2112, %v2113
      %v2115 = vrot.slane %v2015, 4
      %v2116 = vsel %vm2106, %v2113, %v2115
      %v2117 = vrot.slane %v2016, 4
      %v2118 = vrot.slane %v2017, 4
      %v2119 = vsel %vm2106, %v2117, %v2118
      %v2120 = vrot.slane %v2018, 4
      %v2121 = vsel %vm2106, %v2118, %v2120
      %v2122 = vrot.slane %v2019, 4
      %v2123 = vrot.slane %v2020, 4
      %v2124 = vsel %vm2106, %v2122, %v2123
      %v2125 = vrot.slane %v2021, 4
      %v2126 = vsel %vm2106, %v2123, %v2125
      %v2127 = vrot.slane %v2022, 4
      %v2128 = vrot.slane %v2023, 4
      %v2129 = vsel %vm2106, %v2127, %v2128
      %v2130 = vrot.slane %v2024, 4
      %v2131 = vsel %vm2106, %v2128, %v2130
      %v2132 = vrot.slane %v2025, 4
      %v2133 = vrot.slane %v2026, 4
      %v2134 = vsel %vm2106, %v2132, %v2133
      %v2135 = vrot.slane %v2027, 4
      %v2136 = vsel %vm2106, %v2133, %v2135
      %v2137 = vrot.slane %v2028, 4
      %v2138 = vrot.slane %v2029, 4
      %v2139 = vsel %vm2106, %v2137, %v2138
      %v2140 = vrot.slane %v2030, 4
      %v2141 = vsel %vm2106, %v2138, %v2140
      %v2142 = vrot.slane %v2031, 4
      %v2143 = vrot.slane %v2032, 4
      %v2144 = vsel %vm2106, %v2142, %v2143
      %v2145 = vrot.slane %v2033, 4
      %v2146 = vsel %vm2106, %v2143, %v2145
      %v2147 = vrot.slane %v2034, 4
      %v2148 = vrot.slane %v2035, 4
      %v2149 = vsel %vm2106, %v2147, %v2148
      %v2150 = vrot.slane %v2036, 4
      %v2151 = vsel %vm2106, %v2148, %v2150
      %v2152 = vrot.slane %v2037, 4
      %v2153 = vrot.slane %v2038, 4
      %v2154 = vsel %vm2106, %v2152, %v2153
      %v2155 = vrot.slane %v2039, 4
      %v2156 = vsel %vm2106, %v2153, %v2155
      %v2157 = vrot.slane %v2040, 4
      %v2158 = vrot.slane %v2041, 4
      %v2159 = vsel %vm2106, %v2157, %v2158
      %v2160 = vrot.slane %v2042, 4
      %v2161 = vsel %vm2106, %v2158, %v2160
      %v2162 = vrot.slane %v2043, 4
      %v2163 = vrot.slane %v2044, 4
      %v2164 = vsel %vm2106, %v2162, %v2163
      %v2165 = vrot.slane %v2045, 4
      %v2166 = vsel %vm2106, %v2163, %v2165
      %v2167 = vrot.slane %v2046, 4
      %v2168 = vrot.slane %v2047, 4
      %v2169 = vsel %vm2106, %v2167, %v2168
      %v2170 = vrot.slane %v2048, 4
      %v2171 = vsel %vm2106, %v2168, %v2170
      %v2172 = vrot.slane %v2049, 4
      %v2173 = vrot.slane %v2050, 4
      %v2174 = vsel %vm2106, %v2172, %v2173
      %v2175 = vrot.slane %v2051, 4
      %v2176 = vsel %vm2106, %v2173, %v2175
      %v2177 = vrot.slane %v2052, 4
      %v2178 = vrot.slane %v2053, 4
      %v2179 = vsel %vm2106, %v2177, %v2178
      %v2180 = vrot.slane %v2054, 4
      %v2181 = vsel %vm2106, %v2178, %v2180
      %v2182 = vrot.slane %v2055, 4
      %v2183 = vrot.slane %v2056, 4
      %v2184 = vsel %vm2106, %v2182, %v2183
      %v2185 = vrot.slane %v2057, 4
      %v2186 = vsel %vm2106, %v2183, %v2185
      %v2235 = vadd.f32 %v1957, %v2107
      %v2236 = vadd.f32 %v1958, %v2109
      %v2237 = vadd.f32 %v1959, %v2111
      %v2238 = vadd.f32 %v1960, %v2112
      %v2239 = vadd.f32 %v1961, %v2114
      %v2240 = vadd.f32 %v1962, %v2116
      %v2241 = vadd.f32 %v1963, %v2117
      %v2242 = vadd.f32 %v1964, %v2119
      %v2243 = vadd.f32 %v1965, %v2121
      %v2244 = vadd.f32 %v1966, %v2122
      %v2245 = vadd.f32 %v1967, %v2124
      %v2246 = vadd.f32 %v1968, %v2126
      %v2247 = vadd.f32 %v1969, %v2127
      %v2248 = vadd.f32 %v1970, %v2129
      %v2249 = vadd.f32 %v1971, %v2131
      %v2250 = vadd.f32 %v1972, %v2132
      %v2251 = vadd.f32 %v1973, %v2134
      %v2252 = vadd.f32 %v1974, %v2136
      %v2253 = vadd.f32 %v1975, %v2137
      %v2254 = vadd.f32 %v1976, %v2139
      %v2255 = vadd.f32 %v1977, %v2141
      %v2256 = vadd.f32 %v1978, %v2142
      %v2257 = vadd.f32 %v1979, %v2144
      %v2258 = vadd.f32 %v1980, %v2146
      %v2259 = vadd.f32 %v1981, %v2147
      %v2260 = vadd.f32 %v1982, %v2149
      %v2261 = vadd.f32 %v1983, %v2151
      %v2262 = vadd.f32 %v1984, %v2152
      %v2263 = vadd.f32 %v1985, %v2154
      %v2264 = vadd.f32 %v1986, %v2156
      %v2265 = vadd.f32 %v1987, %v2157
      %v2266 = vadd.f32 %v1988, %v2159
      %v2267 = vadd.f32 %v1989, %v2161
      %v2268 = vadd.f32 %v1990, %v2162
      %v2269 = vadd.f32 %v1991, %v2164
      %v2270 = vadd.f32 %v1992, %v2166
      %v2271 = vadd.f32 %v1993, %v2167
      %v2272 = vadd.f32 %v1994, %v2169
      %v2273 = vadd.f32 %v1995, %v2171
      %v2274 = vadd.f32 %v1996, %v2172
      %v2275 = vadd.f32 %v1997, %v2174
      %v2276 = vadd.f32 %v1998, %v2176
      %v2277 = vadd.f32 %v1999, %v2177
      %v2278 = vadd.f32 %v2000, %v2179
      %v2279 = vadd.f32 %v2001, %v2181
      %v2280 = vadd.f32 %v2002, %v2182
      %v2281 = vadd.f32 %v2003, %v2184
      %v2282 = vadd.f32 %v2004, %v2186
      %v2283 = vld [vmem:[%s4 + $0x5] sm:$0x1]
      %v2284 = vlaneseq
      %v2285 = vshrl.u32 %v2284, 7
      %v2286 = vsub.s32 0, %v2285
      %v2287 = vrot.slane %v2283, %v2286
      %v2288 = vmul.f32 %v1058, %v2287
      %v2289 = vmul.f32 %v1059, %v2287
      %v2290 = vmul.f32 %v1060, %v2287
      %v2291 = vmul.f32 %v1062, %v2287
      %v2292 = vmul.f32 %v1063, %v2287
      %v2293 = vmul.f32 %v1064, %v2287
      %v2294 = vmul.f32 %v1066, %v2287
      %v2295 = vmul.f32 %v1067, %v2287
      %v2296 = vmul.f32 %v1068, %v2287
      %v2297 = vmul.f32 %v1070, %v2287
      %v2298 = vmul.f32 %v1071, %v2287
      %v2299 = vmul.f32 %v1072, %v2287
      %v2300 = vmul.f32 %v1074, %v2287
      %v2301 = vmul.f32 %v1075, %v2287
      %v2302 = vmul.f32 %v1076, %v2287
      %v2303 = vmul.f32 %v1078, %v2287
      %v2304 = vmul.f32 %v1079, %v2287
      %v2305 = vmul.f32 %v1080, %v2287
      %v2306 = vmul.f32 %v1082, %v2287
      %v2307 = vmul.f32 %v1083, %v2287
      %v2308 = vmul.f32 %v1084, %v2287
      %v2309 = vmul.f32 %v1086, %v2287
      %v2310 = vmul.f32 %v1087, %v2287
      %v2311 = vmul.f32 %v1088, %v2287
      %v2312 = vmul.f32 %v1090, %v2287
      %v2313 = vmul.f32 %v1091, %v2287
      %v2314 = vmul.f32 %v1092, %v2287
      %v2315 = vmul.f32 %v1094, %v2287
      %v2316 = vmul.f32 %v1095, %v2287
      %v2317 = vmul.f32 %v1096, %v2287
      %v2318 = vmul.f32 %v1098, %v2287
      %v2319 = vmul.f32 %v1099, %v2287
      %v2320 = vmul.f32 %v1100, %v2287
      %v2321 = vmul.f32 %v1102, %v2287
      %v2322 = vmul.f32 %v1103, %v2287
      %v2323 = vmul.f32 %v1104, %v2287
      %v2324 = vmul.f32 %v1106, %v2287
      %v2325 = vmul.f32 %v1107, %v2287
      %v2326 = vmul.f32 %v1108, %v2287
      %v2327 = vmul.f32 %v1110, %v2287
      %v2328 = vmul.f32 %v1111, %v2287
      %v2329 = vmul.f32 %v1112, %v2287
      %v2330 = vmul.f32 %v1114, %v2287
      %v2331 = vmul.f32 %v1115, %v2287
      %v2332 = vmul.f32 %v1116, %v2287
      %v2333 = vmul.f32 %v1118, %v2287
      %v2334 = vmul.f32 %v1119, %v2287
      %v2335 = vmul.f32 %v1120, %v2287
      %v2336 = vadd.f32 %v2235, %v2288
      %v2337 = vadd.f32 %v2236, %v2289
      %v2338 = vadd.f32 %v2237, %v2290
      %v2339 = vadd.f32 %v2238, %v2291
      %v2340 = vadd.f32 %v2239, %v2292
      %v2341 = vadd.f32 %v2240, %v2293
      %v2342 = vadd.f32 %v2241, %v2294
      %v2343 = vadd.f32 %v2242, %v2295
      %v2344 = vadd.f32 %v2243, %v2296
      %v2345 = vadd.f32 %v2244, %v2297
      %v2346 = vadd.f32 %v2245, %v2298
      %v2347 = vadd.f32 %v2246, %v2299
      %v2348 = vadd.f32 %v2247, %v2300
      %v2349 = vadd.f32 %v2248, %v2301
      %v2350 = vadd.f32 %v2249, %v2302
      %v2351 = vadd.f32 %v2250, %v2303
      %v2352 = vadd.f32 %v2251, %v2304
      %v2353 = vadd.f32 %v2252, %v2305
      %v2354 = vadd.f32 %v2253, %v2306
      %v2355 = vadd.f32 %v2254, %v2307
      %v2356 = vadd.f32 %v2255, %v2308
      %v2357 = vadd.f32 %v2256, %v2309
      %v2358 = vadd.f32 %v2257, %v2310
      %v2359 = vadd.f32 %v2258, %v2311
      %v2360 = vadd.f32 %v2259, %v2312
      %v2361 = vadd.f32 %v2260, %v2313
      %v2362 = vadd.f32 %v2261, %v2314
      %v2363 = vadd.f32 %v2262, %v2315
      %v2364 = vadd.f32 %v2263, %v2316
      %v2365 = vadd.f32 %v2264, %v2317
      %v2366 = vadd.f32 %v2265, %v2318
      %v2367 = vadd.f32 %v2266, %v2319
      %v2368 = vadd.f32 %v2267, %v2320
      %v2369 = vadd.f32 %v2268, %v2321
      %v2370 = vadd.f32 %v2269, %v2322
      %v2371 = vadd.f32 %v2270, %v2323
      %v2372 = vadd.f32 %v2271, %v2324
      %v2373 = vadd.f32 %v2272, %v2325
      %v2374 = vadd.f32 %v2273, %v2326
      %v2375 = vadd.f32 %v2274, %v2327
      %v2376 = vadd.f32 %v2275, %v2328
      %v2377 = vadd.f32 %v2276, %v2329
      %v2378 = vadd.f32 %v2277, %v2330
      %v2379 = vadd.f32 %v2278, %v2331
      %v2380 = vadd.f32 %v2279, %v2332
      %v2381 = vadd.f32 %v2280, %v2333
      %v2382 = vadd.f32 %v2281, %v2334
      %v2383 = vadd.f32 %v2282, %v2335
      %v2384 = vld [vmem:[%s4 + $0x6] sm:$0x1]
      %v2385 = vlaneseq
      %v2386 = vshrl.u32 %v2385, 7
      %v2387 = vsub.s32 0, %v2386
      %v2388 = vrot.slane %v2384, %v2387
      %v2389 = vmul.f32 %v1058, %v2388
      %v2390 = vmul.f32 %v1059, %v2388
      %v2391 = vmul.f32 %v1060, %v2388
      %v2392 = vmul.f32 %v1062, %v2388
      %v2393 = vmul.f32 %v1063, %v2388
      %v2394 = vmul.f32 %v1064, %v2388
      %v2395 = vmul.f32 %v1066, %v2388
      %v2396 = vmul.f32 %v1067, %v2388
      %v2397 = vmul.f32 %v1068, %v2388
      %v2398 = vmul.f32 %v1070, %v2388
      %v2399 = vmul.f32 %v1071, %v2388
      %v2400 = vmul.f32 %v1072, %v2388
      %v2401 = vmul.f32 %v1074, %v2388
      %v2402 = vmul.f32 %v1075, %v2388
      %v2403 = vmul.f32 %v1076, %v2388
      %v2404 = vmul.f32 %v1078, %v2388
      %v2405 = vmul.f32 %v1079, %v2388
      %v2406 = vmul.f32 %v1080, %v2388
      %v2407 = vmul.f32 %v1082, %v2388
      %v2408 = vmul.f32 %v1083, %v2388
      %v2409 = vmul.f32 %v1084, %v2388
      %v2410 = vmul.f32 %v1086, %v2388
      %v2411 = vmul.f32 %v1087, %v2388
      %v2412 = vmul.f32 %v1088, %v2388
      %v2413 = vmul.f32 %v1090, %v2388
      %v2414 = vmul.f32 %v1091, %v2388
      %v2415 = vmul.f32 %v1092, %v2388
      %v2416 = vmul.f32 %v1094, %v2388
      %v2417 = vmul.f32 %v1095, %v2388
      %v2418 = vmul.f32 %v1096, %v2388
      %v2419 = vmul.f32 %v1098, %v2388
      %v2420 = vmul.f32 %v1099, %v2388
      %v2421 = vmul.f32 %v1100, %v2388
      %v2422 = vmul.f32 %v1102, %v2388
      %v2423 = vmul.f32 %v1103, %v2388
      %v2424 = vmul.f32 %v1104, %v2388
      %v2425 = vmul.f32 %v1106, %v2388
      %v2426 = vmul.f32 %v1107, %v2388
      %v2427 = vmul.f32 %v1108, %v2388
      %v2428 = vmul.f32 %v1110, %v2388
      %v2429 = vmul.f32 %v1111, %v2388
      %v2430 = vmul.f32 %v1112, %v2388
      %v2431 = vmul.f32 %v1114, %v2388
      %v2432 = vmul.f32 %v1115, %v2388
      %v2433 = vmul.f32 %v1116, %v2388
      %v2434 = vmul.f32 %v1118, %v2388
      %v2435 = vmul.f32 %v1119, %v2388
      %v2436 = vmul.f32 %v1120, %v2388
      %v2485 = vrot.slane %v2389, 1
      %v2486 = vrot.slane %v2390, 1
      %v2487 = vsel %vm1336, %v2485, %v2486
      %v2488 = vrot.slane %v2391, 1
      %v2489 = vsel %vm1336, %v2486, %v2488
      %v2490 = vrot.slane %v2392, 1
      %v2491 = vrot.slane %v2393, 1
      %v2492 = vsel %vm1336, %v2490, %v2491
      %v2493 = vrot.slane %v2394, 1
      %v2494 = vsel %vm1336, %v2491, %v2493
      %v2495 = vrot.slane %v2395, 1
      %v2496 = vrot.slane %v2396, 1
      %v2497 = vsel %vm1336, %v2495, %v2496
      %v2498 = vrot.slane %v2397, 1
      %v2499 = vsel %vm1336, %v2496, %v2498
      %v2500 = vrot.slane %v2398, 1
      %v2501 = vrot.slane %v2399, 1
      %v2502 = vsel %vm1336, %v2500, %v2501
      %v2503 = vrot.slane %v2400, 1
      %v2504 = vsel %vm1336, %v2501, %v2503
      %v2505 = vrot.slane %v2401, 1
      %v2506 = vrot.slane %v2402, 1
      %v2507 = vsel %vm1336, %v2505, %v2506
      %v2508 = vrot.slane %v2403, 1
      %v2509 = vsel %vm1336, %v2506, %v2508
      %v2510 = vrot.slane %v2404, 1
      %v2511 = vrot.slane %v2405, 1
      %v2512 = vsel %vm1336, %v2510, %v2511
      %v2513 = vrot.slane %v2406, 1
      %v2514 = vsel %vm1336, %v2511, %v2513
      %v2515 = vrot.slane %v2407, 1
      %v2516 = vrot.slane %v2408, 1
      %v2517 = vsel %vm1336, %v2515, %v2516
      %v2518 = vrot.slane %v2409, 1
      %v2519 = vsel %vm1336, %v2516, %v2518
      %v2520 = vrot.slane %v2410, 1
      %v2521 = vrot.slane %v2411, 1
      %v2522 = vsel %vm1336, %v2520, %v2521
      %v2523 = vrot.slane %v2412, 1
      %v2524 = vsel %vm1336, %v2521, %v2523
      %v2525 = vrot.slane %v2413, 1
      %v2526 = vrot.slane %v2414, 1
      %v2527 = vsel %vm1336, %v2525, %v2526
      %v2528 = vrot.slane %v2415, 1
      %v2529 = vsel %vm1336, %v2526, %v2528
      %v2530 = vrot.slane %v2416, 1
      %v2531 = vrot.slane %v2417, 1
      %v2532 = vsel %vm1336, %v2530, %v2531
      %v2533 = vrot.slane %v2418, 1
      %v2534 = vsel %vm1336, %v2531, %v2533
      %v2535 = vrot.slane %v2419, 1
      %v2536 = vrot.slane %v2420, 1
      %v2537 = vsel %vm1336, %v2535, %v2536
      %v2538 = vrot.slane %v2421, 1
      %v2539 = vsel %vm1336, %v2536, %v2538
      %v2540 = vrot.slane %v2422, 1
      %v2541 = vrot.slane %v2423, 1
      %v2542 = vsel %vm1336, %v2540, %v2541
      %v2543 = vrot.slane %v2424, 1
      %v2544 = vsel %vm1336, %v2541, %v2543
      %v2545 = vrot.slane %v2425, 1
      %v2546 = vrot.slane %v2426, 1
      %v2547 = vsel %vm1336, %v2545, %v2546
      %v2548 = vrot.slane %v2427, 1
      %v2549 = vsel %vm1336, %v2546, %v2548
      %v2550 = vrot.slane %v2428, 1
      %v2551 = vrot.slane %v2429, 1
      %v2552 = vsel %vm1336, %v2550, %v2551
      %v2553 = vrot.slane %v2430, 1
      %v2554 = vsel %vm1336, %v2551, %v2553
      %v2555 = vrot.slane %v2431, 1
      %v2556 = vrot.slane %v2432, 1
      %v2557 = vsel %vm1336, %v2555, %v2556
      %v2558 = vrot.slane %v2433, 1
      %v2559 = vsel %vm1336, %v2556, %v2558
      %v2560 = vrot.slane %v2434, 1
      %v2561 = vrot.slane %v2435, 1
      %v2562 = vsel %vm1336, %v2560, %v2561
      %v2563 = vrot.slane %v2436, 1
      %v2564 = vsel %vm1336, %v2561, %v2563
      %v2613 = vadd.f32 %v2336, %v2487
      %v2614 = vadd.f32 %v2337, %v2489
      %v2615 = vadd.f32 %v2338, %v2488
      %v2616 = vadd.f32 %v2339, %v2492
      %v2617 = vadd.f32 %v2340, %v2494
      %v2618 = vadd.f32 %v2341, %v2493
      %v2619 = vadd.f32 %v2342, %v2497
      %v2620 = vadd.f32 %v2343, %v2499
      %v2621 = vadd.f32 %v2344, %v2498
      %v2622 = vadd.f32 %v2345, %v2502
      %v2623 = vadd.f32 %v2346, %v2504
      %v2624 = vadd.f32 %v2347, %v2503
      %v2625 = vadd.f32 %v2348, %v2507
      %v2626 = vadd.f32 %v2349, %v2509
      %v2627 = vadd.f32 %v2350, %v2508
      %v2628 = vadd.f32 %v2351, %v2512
      %v2629 = vadd.f32 %v2352, %v2514
      %v2630 = vadd.f32 %v2353, %v2513
      %v2631 = vadd.f32 %v2354, %v2517
      %v2632 = vadd.f32 %v2355, %v2519
      %v2633 = vadd.f32 %v2356, %v2518
      %v2634 = vadd.f32 %v2357, %v2522
      %v2635 = vadd.f32 %v2358, %v2524
      %v2636 = vadd.f32 %v2359, %v2523
      %v2637 = vadd.f32 %v2360, %v2527
      %v2638 = vadd.f32 %v2361, %v2529
      %v2639 = vadd.f32 %v2362, %v2528
      %v2640 = vadd.f32 %v2363, %v2532
      %v2641 = vadd.f32 %v2364, %v2534
      %v2642 = vadd.f32 %v2365, %v2533
      %v2643 = vadd.f32 %v2366, %v2537
      %v2644 = vadd.f32 %v2367, %v2539
      %v2645 = vadd.f32 %v2368, %v2538
      %v2646 = vadd.f32 %v2369, %v2542
      %v2647 = vadd.f32 %v2370, %v2544
      %v2648 = vadd.f32 %v2371, %v2543
      %v2649 = vadd.f32 %v2372, %v2547
      %v2650 = vadd.f32 %v2373, %v2549
      %v2651 = vadd.f32 %v2374, %v2548
      %v2652 = vadd.f32 %v2375, %v2552
      %v2653 = vadd.f32 %v2376, %v2554
      %v2654 = vadd.f32 %v2377, %v2553
      %v2655 = vadd.f32 %v2378, %v2557
      %v2656 = vadd.f32 %v2379, %v2559
      %v2657 = vadd.f32 %v2380, %v2558
      %v2658 = vadd.f32 %v2381, %v2562
      %v2659 = vadd.f32 %v2382, %v2564
      %v2660 = vadd.f32 %v2383, %v2563
      %v2661 = vld [vmem:[%s4 + $0x7] sm:$0x1]
      %v2662 = vlaneseq
      %v2663 = vshrl.u32 %v2662, 7
      %v2664 = vsub.s32 0, %v2663
      %v2665 = vrot.slane %v2661, %v2664
      %v2666 = vmul.f32 %v1059, %v2665
      %v2667 = vmul.f32 %v1060, %v2665
      %v2668 = vmul.f32 %v1063, %v2665
      %v2669 = vmul.f32 %v1064, %v2665
      %v2670 = vmul.f32 %v1067, %v2665
      %v2671 = vmul.f32 %v1068, %v2665
      %v2672 = vmul.f32 %v1071, %v2665
      %v2673 = vmul.f32 %v1072, %v2665
      %v2674 = vmul.f32 %v1075, %v2665
      %v2675 = vmul.f32 %v1076, %v2665
      %v2676 = vmul.f32 %v1079, %v2665
      %v2677 = vmul.f32 %v1080, %v2665
      %v2678 = vmul.f32 %v1083, %v2665
      %v2679 = vmul.f32 %v1084, %v2665
      %v2680 = vmul.f32 %v1087, %v2665
      %v2681 = vmul.f32 %v1088, %v2665
      %v2682 = vmul.f32 %v1091, %v2665
      %v2683 = vmul.f32 %v1092, %v2665
      %v2684 = vmul.f32 %v1095, %v2665
      %v2685 = vmul.f32 %v1096, %v2665
      %v2686 = vmul.f32 %v1099, %v2665
      %v2687 = vmul.f32 %v1100, %v2665
      %v2688 = vmul.f32 %v1103, %v2665
      %v2689 = vmul.f32 %v1104, %v2665
      %v2690 = vmul.f32 %v1107, %v2665
      %v2691 = vmul.f32 %v1108, %v2665
      %v2692 = vmul.f32 %v1111, %v2665
      %v2693 = vmul.f32 %v1112, %v2665
      %v2694 = vmul.f32 %v1115, %v2665
      %v2695 = vmul.f32 %v1116, %v2665
      %v2696 = vmul.f32 %v1119, %v2665
      %v2697 = vmul.f32 %v1120, %v2665
      %v2730 = vrot.slane %v2666, 2
      %v2731 = vrot.slane %v2667, 2
      %v2732 = vsel %vm1582, %v2730, %v2731
      %v2733 = vrot.slane %v2668, 2
      %v2734 = vrot.slane %v2669, 2
      %v2735 = vsel %vm1582, %v2733, %v2734
      %v2736 = vrot.slane %v2670, 2
      %v2737 = vrot.slane %v2671, 2
      %v2738 = vsel %vm1582, %v2736, %v2737
      %v2739 = vrot.slane %v2672, 2
      %v2740 = vrot.slane %v2673, 2
      %v2741 = vsel %vm1582, %v2739, %v2740
      %v2742 = vrot.slane %v2674, 2
      %v2743 = vrot.slane %v2675, 2
      %v2744 = vsel %vm1582, %v2742, %v2743
      %v2745 = vrot.slane %v2676, 2
      %v2746 = vrot.slane %v2677, 2
      %v2747 = vsel %vm1582, %v2745, %v2746
      %v2748 = vrot.slane %v2678, 2
      %v2749 = vrot.slane %v2679, 2
      %v2750 = vsel %vm1582, %v2748, %v2749
      %v2751 = vrot.slane %v2680, 2
      %v2752 = vrot.slane %v2681, 2
      %v2753 = vsel %vm1582, %v2751, %v2752
      %v2754 = vrot.slane %v2682, 2
      %v2755 = vrot.slane %v2683, 2
      %v2756 = vsel %vm1582, %v2754, %v2755
      %v2757 = vrot.slane %v2684, 2
      %v2758 = vrot.slane %v2685, 2
      %v2759 = vsel %vm1582, %v2757, %v2758
      %v2760 = vrot.slane %v2686, 2
      %v2761 = vrot.slane %v2687, 2
      %v2762 = vsel %vm1582, %v2760, %v2761
      %v2763 = vrot.slane %v2688, 2
      %v2764 = vrot.slane %v2689, 2
      %v2765 = vsel %vm1582, %v2763, %v2764
      %v2766 = vrot.slane %v2690, 2
      %v2767 = vrot.slane %v2691, 2
      %v2768 = vsel %vm1582, %v2766, %v2767
      %v2769 = vrot.slane %v2692, 2
      %v2770 = vrot.slane %v2693, 2
      %v2771 = vsel %vm1582, %v2769, %v2770
      %v2772 = vrot.slane %v2694, 2
      %v2773 = vrot.slane %v2695, 2
      %v2774 = vsel %vm1582, %v2772, %v2773
      %v2775 = vrot.slane %v2696, 2
      %v2776 = vrot.slane %v2697, 2
      %v2777 = vsel %vm1582, %v2775, %v2776
      %v2826 = vadd.f32 %v2613, %v2730
      %v2827 = vadd.f32 %v2614, %v2732
      %v2828 = vadd.f32 %v2615, %v2731
      %v2829 = vadd.f32 %v2616, %v2733
      %v2830 = vadd.f32 %v2617, %v2735
      %v2831 = vadd.f32 %v2618, %v2734
      %v2832 = vadd.f32 %v2619, %v2736
      %v2833 = vadd.f32 %v2620, %v2738
      %v2834 = vadd.f32 %v2621, %v2737
      %v2835 = vadd.f32 %v2622, %v2739
      %v2836 = vadd.f32 %v2623, %v2741
      %v2837 = vadd.f32 %v2624, %v2740
      %v2838 = vadd.f32 %v2625, %v2742
      %v2839 = vadd.f32 %v2626, %v2744
      %v2840 = vadd.f32 %v2627, %v2743
      %v2841 = vadd.f32 %v2628, %v2745
      %v2842 = vadd.f32 %v2629, %v2747
      %v2843 = vadd.f32 %v2630, %v2746
      %v2844 = vadd.f32 %v2631, %v2748
      %v2845 = vadd.f32 %v2632, %v2750
      %v2846 = vadd.f32 %v2633, %v2749
      %v2847 = vadd.f32 %v2634, %v2751
      %v2848 = vadd.f32 %v2635, %v2753
      %v2849 = vadd.f32 %v2636, %v2752
      %v2850 = vadd.f32 %v2637, %v2754
      %v2851 = vadd.f32 %v2638, %v2756
      %v2852 = vadd.f32 %v2639, %v2755
      %v2853 = vadd.f32 %v2640, %v2757
      %v2854 = vadd.f32 %v2641, %v2759
      %v2855 = vadd.f32 %v2642, %v2758
      %v2856 = vadd.f32 %v2643, %v2760
      %v2857 = vadd.f32 %v2644, %v2762
      %v2858 = vadd.f32 %v2645, %v2761
      %v2859 = vadd.f32 %v2646, %v2763
      %v2860 = vadd.f32 %v2647, %v2765
      %v2861 = vadd.f32 %v2648, %v2764
      %v2862 = vadd.f32 %v2649, %v2766
      %v2863 = vadd.f32 %v2650, %v2768
      %v2864 = vadd.f32 %v2651, %v2767
      %v2865 = vadd.f32 %v2652, %v2769
      %v2866 = vadd.f32 %v2653, %v2771
      %v2867 = vadd.f32 %v2654, %v2770
      %v2868 = vadd.f32 %v2655, %v2772
      %v2869 = vadd.f32 %v2656, %v2774
      %v2870 = vadd.f32 %v2657, %v2773
      %v2871 = vadd.f32 %v2658, %v2775
      %v2872 = vadd.f32 %v2659, %v2777
      %v2873 = vadd.f32 %v2660, %v2776
      %v2874 = vld [vmem:[%s4 + $0x8] sm:$0x1]
      %v2875 = vlaneseq
      %v2876 = vshrl.u32 %v2875, 7
      %v2877 = vsub.s32 0, %v2876
      %v2878 = vrot.slane %v2874, %v2877
      %v2879 = vmul.f32 %v1059, %v2878
      %v2880 = vmul.f32 %v1060, %v2878
      %v2881 = vmul.f32 %v1061, %v2878
      %v2882 = vmul.f32 %v1063, %v2878
      %v2883 = vmul.f32 %v1064, %v2878
      %v2884 = vmul.f32 %v1065, %v2878
      %v2885 = vmul.f32 %v1067, %v2878
      %v2886 = vmul.f32 %v1068, %v2878
      %v2887 = vmul.f32 %v1069, %v2878
      %v2888 = vmul.f32 %v1071, %v2878
      %v2889 = vmul.f32 %v1072, %v2878
      %v2890 = vmul.f32 %v1073, %v2878
      %v2891 = vmul.f32 %v1075, %v2878
      %v2892 = vmul.f32 %v1076, %v2878
      %v2893 = vmul.f32 %v1077, %v2878
      %v2894 = vmul.f32 %v1079, %v2878
      %v2895 = vmul.f32 %v1080, %v2878
      %v2896 = vmul.f32 %v1081, %v2878
      %v2897 = vmul.f32 %v1083, %v2878
      %v2898 = vmul.f32 %v1084, %v2878
      %v2899 = vmul.f32 %v1085, %v2878
      %v2900 = vmul.f32 %v1087, %v2878
      %v2901 = vmul.f32 %v1088, %v2878
      %v2902 = vmul.f32 %v1089, %v2878
      %v2903 = vmul.f32 %v1091, %v2878
      %v2904 = vmul.f32 %v1092, %v2878
      %v2905 = vmul.f32 %v1093, %v2878
      %v2906 = vmul.f32 %v1095, %v2878
      %v2907 = vmul.f32 %v1096, %v2878
      %v2908 = vmul.f32 %v1097, %v2878
      %v2909 = vmul.f32 %v1099, %v2878
      %v2910 = vmul.f32 %v1100, %v2878
      %v2911 = vmul.f32 %v1101, %v2878
      %v2912 = vmul.f32 %v1103, %v2878
      %v2913 = vmul.f32 %v1104, %v2878
      %v2914 = vmul.f32 %v1105, %v2878
      %v2915 = vmul.f32 %v1107, %v2878
      %v2916 = vmul.f32 %v1108, %v2878
      %v2917 = vmul.f32 %v1109, %v2878
      %v2918 = vmul.f32 %v1111, %v2878
      %v2919 = vmul.f32 %v1112, %v2878
      %v2920 = vmul.f32 %v1113, %v2878
      %v2921 = vmul.f32 %v1115, %v2878
      %v2922 = vmul.f32 %v1116, %v2878
      %v2923 = vmul.f32 %v1117, %v2878
      %v2924 = vmul.f32 %v1119, %v2878
      %v2925 = vmul.f32 %v1120, %v2878
      %v2926 = vmul.f32 %v1121, %v2878
      %v2975 = vrot.slane %v2879, 3
      %v2976 = vrot.slane %v2880, 3
      %v2977 = vsel %vm1828, %v2975, %v2976
      %v2978 = vrot.slane %v2881, 3
      %v2979 = vsel %vm1828, %v2976, %v2978
      %v2980 = vrot.slane %v2882, 3
      %v2981 = vrot.slane %v2883, 3
      %v2982 = vsel %vm1828, %v2980, %v2981
      %v2983 = vrot.slane %v2884, 3
      %v2984 = vsel %vm1828, %v2981, %v2983
      %v2985 = vrot.slane %v2885, 3
      %v2986 = vrot.slane %v2886, 3
      %v2987 = vsel %vm1828, %v2985, %v2986
      %v2988 = vrot.slane %v2887, 3
      %v2989 = vsel %vm1828, %v2986, %v2988
      %v2990 = vrot.slane %v2888, 3
      %v2991 = vrot.slane %v2889, 3
      %v2992 = vsel %vm1828, %v2990, %v2991
      %v2993 = vrot.slane %v2890, 3
      %v2994 = vsel %vm1828, %v2991, %v2993
      %v2995 = vrot.slane %v2891, 3
      %v2996 = vrot.slane %v2892, 3
      %v2997 = vsel %vm1828, %v2995, %v2996
      %v2998 = vrot.slane %v2893, 3
      %v2999 = vsel %vm1828, %v2996, %v2998
      %v3000 = vrot.slane %v2894, 3
      %v3001 = vrot.slane %v2895, 3
      %v3002 = vsel %vm1828, %v3000, %v3001
      %v3003 = vrot.slane %v2896, 3
      %v3004 = vsel %vm1828, %v3001, %v3003
      %v3005 = vrot.slane %v2897, 3
      %v3006 = vrot.slane %v2898, 3
      %v3007 = vsel %vm1828, %v3005, %v3006
      %v3008 = vrot.slane %v2899, 3
      %v3009 = vsel %vm1828, %v3006, %v3008
      %v3010 = vrot.slane %v2900, 3
      %v3011 = vrot.slane %v2901, 3
      %v3012 = vsel %vm1828, %v3010, %v3011
      %v3013 = vrot.slane %v2902, 3
      %v3014 = vsel %vm1828, %v3011, %v3013
      %v3015 = vrot.slane %v2903, 3
      %v3016 = vrot.slane %v2904, 3
      %v3017 = vsel %vm1828, %v3015, %v3016
      %v3018 = vrot.slane %v2905, 3
      %v3019 = vsel %vm1828, %v3016, %v3018
      %v3020 = vrot.slane %v2906, 3
      %v3021 = vrot.slane %v2907, 3
      %v3022 = vsel %vm1828, %v3020, %v3021
      %v3023 = vrot.slane %v2908, 3
      %v3024 = vsel %vm1828, %v3021, %v3023
      %v3025 = vrot.slane %v2909, 3
      %v3026 = vrot.slane %v2910, 3
      %v3027 = vsel %vm1828, %v3025, %v3026
      %v3028 = vrot.slane %v2911, 3
      %v3029 = vsel %vm1828, %v3026, %v3028
      %v3030 = vrot.slane %v2912, 3
      %v3031 = vrot.slane %v2913, 3
      %v3032 = vsel %vm1828, %v3030, %v3031
      %v3033 = vrot.slane %v2914, 3
      %v3034 = vsel %vm1828, %v3031, %v3033
      %v3035 = vrot.slane %v2915, 3
      %v3036 = vrot.slane %v2916, 3
      %v3037 = vsel %vm1828, %v3035, %v3036
      %v3038 = vrot.slane %v2917, 3
      %v3039 = vsel %vm1828, %v3036, %v3038
      %v3040 = vrot.slane %v2918, 3
      %v3041 = vrot.slane %v2919, 3
      %v3042 = vsel %vm1828, %v3040, %v3041
      %v3043 = vrot.slane %v2920, 3
      %v3044 = vsel %vm1828, %v3041, %v3043
      %v3045 = vrot.slane %v2921, 3
      %v3046 = vrot.slane %v2922, 3
      %v3047 = vsel %vm1828, %v3045, %v3046
      %v3048 = vrot.slane %v2923, 3
      %v3049 = vsel %vm1828, %v3046, %v3048
      %v3050 = vrot.slane %v2924, 3
      %v3051 = vrot.slane %v2925, 3
      %v3052 = vsel %vm1828, %v3050, %v3051
      %v3053 = vrot.slane %v2926, 3
      %v3054 = vsel %vm1828, %v3051, %v3053
      %v3103 = vadd.f32 %v2826, %v2975
      %v3104 = vadd.f32 %v2827, %v2977
      %v3105 = vadd.f32 %v2828, %v2979
      %v3106 = vadd.f32 %v2829, %v2980
      %v3107 = vadd.f32 %v2830, %v2982
      %v3108 = vadd.f32 %v2831, %v2984
      %v3109 = vadd.f32 %v2832, %v2985
      %v3110 = vadd.f32 %v2833, %v2987
      %v3111 = vadd.f32 %v2834, %v2989
      %v3112 = vadd.f32 %v2835, %v2990
      %v3113 = vadd.f32 %v2836, %v2992
      %v3114 = vadd.f32 %v2837, %v2994
      %v3115 = vadd.f32 %v2838, %v2995
      %v3116 = vadd.f32 %v2839, %v2997
      %v3117 = vadd.f32 %v2840, %v2999
      %v3118 = vadd.f32 %v2841, %v3000
      %v3119 = vadd.f32 %v2842, %v3002
      %v3120 = vadd.f32 %v2843, %v3004
      %v3121 = vadd.f32 %v2844, %v3005
      %v3122 = vadd.f32 %v2845, %v3007
      %v3123 = vadd.f32 %v2846, %v3009
      %v3124 = vadd.f32 %v2847, %v3010
      %v3125 = vadd.f32 %v2848, %v3012
      %v3126 = vadd.f32 %v2849, %v3014
      %v3127 = vadd.f32 %v2850, %v3015
      %v3128 = vadd.f32 %v2851, %v3017
      %v3129 = vadd.f32 %v2852, %v3019
      %v3130 = vadd.f32 %v2853, %v3020
      %v3131 = vadd.f32 %v2854, %v3022
      %v3132 = vadd.f32 %v2855, %v3024
      %v3133 = vadd.f32 %v2856, %v3025
      %v3134 = vadd.f32 %v2857, %v3027
      %v3135 = vadd.f32 %v2858, %v3029
      %v3136 = vadd.f32 %v2859, %v3030
      %v3137 = vadd.f32 %v2860, %v3032
      %v3138 = vadd.f32 %v2861, %v3034
      %v3139 = vadd.f32 %v2862, %v3035
      %v3140 = vadd.f32 %v2863, %v3037
      %v3141 = vadd.f32 %v2864, %v3039
      %v3142 = vadd.f32 %v2865, %v3040
      %v3143 = vadd.f32 %v2866, %v3042
      %v3144 = vadd.f32 %v2867, %v3044
      %v3145 = vadd.f32 %v2868, %v3045
      %v3146 = vadd.f32 %v2869, %v3047
      %v3147 = vadd.f32 %v2870, %v3049
      %v3148 = vadd.f32 %v2871, %v3050
      %v3149 = vadd.f32 %v2872, %v3052
      %v3150 = vadd.f32 %v2873, %v3054
      %v3151 = vld [vmem:[%s4 + $0x9] sm:$0x1]
      %v3152 = vlaneseq
      %v3153 = vshrl.u32 %v3152, 7
      %v3154 = vsub.s32 0, %v3153
      %v3155 = vrot.slane %v3151, %v3154
      %v3156 = vmul.f32 %v1059, %v3155
      %v3157 = vmul.f32 %v1060, %v3155
      %v3158 = vmul.f32 %v1061, %v3155
      %v3159 = vmul.f32 %v1063, %v3155
      %v3160 = vmul.f32 %v1064, %v3155
      %v3161 = vmul.f32 %v1065, %v3155
      %v3162 = vmul.f32 %v1067, %v3155
      %v3163 = vmul.f32 %v1068, %v3155
      %v3164 = vmul.f32 %v1069, %v3155
      %v3165 = vmul.f32 %v1071, %v3155
      %v3166 = vmul.f32 %v1072, %v3155
      %v3167 = vmul.f32 %v1073, %v3155
      %v3168 = vmul.f32 %v1075, %v3155
      %v3169 = vmul.f32 %v1076, %v3155
      %v3170 = vmul.f32 %v1077, %v3155
      %v3171 = vmul.f32 %v1079, %v3155
      %v3172 = vmul.f32 %v1080, %v3155
      %v3173 = vmul.f32 %v1081, %v3155
      %v3174 = vmul.f32 %v1083, %v3155
      %v3175 = vmul.f32 %v1084, %v3155
      %v3176 = vmul.f32 %v1085, %v3155
      %v3177 = vmul.f32 %v1087, %v3155
      %v3178 = vmul.f32 %v1088, %v3155
      %v3179 = vmul.f32 %v1089, %v3155
      %v3180 = vmul.f32 %v1091, %v3155
      %v3181 = vmul.f32 %v1092, %v3155
      %v3182 = vmul.f32 %v1093, %v3155
      %v3183 = vmul.f32 %v1095, %v3155
      %v3184 = vmul.f32 %v1096, %v3155
      %v3185 = vmul.f32 %v1097, %v3155
      %v3186 = vmul.f32 %v1099, %v3155
      %v3187 = vmul.f32 %v1100, %v3155
      %v3188 = vmul.f32 %v1101, %v3155
      %v3189 = vmul.f32 %v1103, %v3155
      %v3190 = vmul.f32 %v1104, %v3155
      %v3191 = vmul.f32 %v1105, %v3155
      %v3192 = vmul.f32 %v1107, %v3155
      %v3193 = vmul.f32 %v1108, %v3155
      %v3194 = vmul.f32 %v1109, %v3155
      %v3195 = vmul.f32 %v1111, %v3155
      %v3196 = vmul.f32 %v1112, %v3155
      %v3197 = vmul.f32 %v1113, %v3155
      %v3198 = vmul.f32 %v1115, %v3155
      %v3199 = vmul.f32 %v1116, %v3155
      %v3200 = vmul.f32 %v1117, %v3155
      %v3201 = vmul.f32 %v1119, %v3155
      %v3202 = vmul.f32 %v1120, %v3155
      %v3203 = vmul.f32 %v1121, %v3155
      %v3252 = vrot.slane %v3156, 4
      %v3253 = vrot.slane %v3157, 4
      %v3254 = vsel %vm2106, %v3252, %v3253
      %v3255 = vrot.slane %v3158, 4
      %v3256 = vsel %vm2106, %v3253, %v3255
      %v3257 = vrot.slane %v3159, 4
      %v3258 = vrot.slane %v3160, 4
      %v3259 = vsel %vm2106, %v3257, %v3258
      %v3260 = vrot.slane %v3161, 4
      %v3261 = vsel %vm2106, %v3258, %v3260
      %v3262 = vrot.slane %v3162, 4
      %v3263 = vrot.slane %v3163, 4
      %v3264 = vsel %vm2106, %v3262, %v3263
      %v3265 = vrot.slane %v3164, 4
      %v3266 = vsel %vm2106, %v3263, %v3265
      %v3267 = vrot.slane %v3165, 4
      %v3268 = vrot.slane %v3166, 4
      %v3269 = vsel %vm2106, %v3267, %v3268
      %v3270 = vrot.slane %v3167, 4
      %v3271 = vsel %vm2106, %v3268, %v3270
      %v3272 = vrot.slane %v3168, 4
      %v3273 = vrot.slane %v3169, 4
      %v3274 = vsel %vm2106, %v3272, %v3273
      %v3275 = vrot.slane %v3170, 4
      %v3276 = vsel %vm2106, %v3273, %v3275
      %v3277 = vrot.slane %v3171, 4
      %v3278 = vrot.slane %v3172, 4
      %v3279 = vsel %vm2106, %v3277, %v3278
      %v3280 = vrot.slane %v3173, 4
      %v3281 = vsel %vm2106, %v3278, %v3280
      %v3282 = vrot.slane %v3174, 4
      %v3283 = vrot.slane %v3175, 4
      %v3284 = vsel %vm2106, %v3282, %v3283
      %v3285 = vrot.slane %v3176, 4
      %v3286 = vsel %vm2106, %v3283, %v3285
      %v3287 = vrot.slane %v3177, 4
      %v3288 = vrot.slane %v3178, 4
      %v3289 = vsel %vm2106, %v3287, %v3288
      %v3290 = vrot.slane %v3179, 4
      %v3291 = vsel %vm2106, %v3288, %v3290
      %v3292 = vrot.slane %v3180, 4
      %v3293 = vrot.slane %v3181, 4
      %v3294 = vsel %vm2106, %v3292, %v3293
      %v3295 = vrot.slane %v3182, 4
      %v3296 = vsel %vm2106, %v3293, %v3295
      %v3297 = vrot.slane %v3183, 4
      %v3298 = vrot.slane %v3184, 4
      %v3299 = vsel %vm2106, %v3297, %v3298
      %v3300 = vrot.slane %v3185, 4
      %v3301 = vsel %vm2106, %v3298, %v3300
      %v3302 = vrot.slane %v3186, 4
      %v3303 = vrot.slane %v3187, 4
      %v3304 = vsel %vm2106, %v3302, %v3303
      %v3305 = vrot.slane %v3188, 4
      %v3306 = vsel %vm2106, %v3303, %v3305
      %v3307 = vrot.slane %v3189, 4
      %v3308 = vrot.slane %v3190, 4
      %v3309 = vsel %vm2106, %v3307, %v3308
      %v3310 = vrot.slane %v3191, 4
      %v3311 = vsel %vm2106, %v3308, %v3310
      %v3312 = vrot.slane %v3192, 4
      %v3313 = vrot.slane %v3193, 4
      %v3314 = vsel %vm2106, %v3312, %v3313
      %v3315 = vrot.slane %v3194, 4
      %v3316 = vsel %vm2106, %v3313, %v3315
      %v3317 = vrot.slane %v3195, 4
      %v3318 = vrot.slane %v3196, 4
      %v3319 = vsel %vm2106, %v3317, %v3318
      %v3320 = vrot.slane %v3197, 4
      %v3321 = vsel %vm2106, %v3318, %v3320
      %v3322 = vrot.slane %v3198, 4
      %v3323 = vrot.slane %v3199, 4
      %v3324 = vsel %vm2106, %v3322, %v3323
      %v3325 = vrot.slane %v3200, 4
      %v3326 = vsel %vm2106, %v3323, %v3325
      %v3327 = vrot.slane %v3201, 4
      %v3328 = vrot.slane %v3202, 4
      %v3329 = vsel %vm2106, %v3327, %v3328
      %v3330 = vrot.slane %v3203, 4
      %v3331 = vsel %vm2106, %v3328, %v3330
      %v3380 = vadd.f32 %v3103, %v3252
      %v3381 = vadd.f32 %v3104, %v3254
      %v3382 = vadd.f32 %v3105, %v3256
      %v3383 = vadd.f32 %v3106, %v3257
      %v3384 = vadd.f32 %v3107, %v3259
      %v3385 = vadd.f32 %v3108, %v3261
      %v3386 = vadd.f32 %v3109, %v3262
      %v3387 = vadd.f32 %v3110, %v3264
      %v3388 = vadd.f32 %v3111, %v3266
      %v3389 = vadd.f32 %v3112, %v3267
      %v3390 = vadd.f32 %v3113, %v3269
      %v3391 = vadd.f32 %v3114, %v3271
      %v3392 = vadd.f32 %v3115, %v3272
      %v3393 = vadd.f32 %v3116, %v3274
      %v3394 = vadd.f32 %v3117, %v3276
      %v3395 = vadd.f32 %v3118, %v3277
      %v3396 = vadd.f32 %v3119, %v3279
      %v3397 = vadd.f32 %v3120, %v3281
      %v3398 = vadd.f32 %v3121, %v3282
      %v3399 = vadd.f32 %v3122, %v3284
      %v3400 = vadd.f32 %v3123, %v3286
      %v3401 = vadd.f32 %v3124, %v3287
      %v3402 = vadd.f32 %v3125, %v3289
      %v3403 = vadd.f32 %v3126, %v3291
      %v3404 = vadd.f32 %v3127, %v3292
      %v3405 = vadd.f32 %v3128, %v3294
      %v3406 = vadd.f32 %v3129, %v3296
      %v3407 = vadd.f32 %v3130, %v3297
      %v3408 = vadd.f32 %v3131, %v3299
      %v3409 = vadd.f32 %v3132, %v3301
      %v3410 = vadd.f32 %v3133, %v3302
      %v3411 = vadd.f32 %v3134, %v3304
      %v3412 = vadd.f32 %v3135, %v3306
      %v3413 = vadd.f32 %v3136, %v3307
      %v3414 = vadd.f32 %v3137, %v3309
      %v3415 = vadd.f32 %v3138, %v3311
      %v3416 = vadd.f32 %v3139, %v3312
      %v3417 = vadd.f32 %v3140, %v3314
      %v3418 = vadd.f32 %v3141, %v3316
      %v3419 = vadd.f32 %v3142, %v3317
      %v3420 = vadd.f32 %v3143, %v3319
      %v3421 = vadd.f32 %v3144, %v3321
      %v3422 = vadd.f32 %v3145, %v3322
      %v3423 = vadd.f32 %v3146, %v3324
      %v3424 = vadd.f32 %v3147, %v3326
      %v3425 = vadd.f32 %v3148, %v3327
      %v3426 = vadd.f32 %v3149, %v3329
      %v3427 = vadd.f32 %v3150, %v3331
      %v3428 = vld [vmem:[%s4 + $0xa] sm:$0x1]
      %v3429 = vlaneseq
      %v3430 = vshrl.u32 %v3429, 7
      %v3431 = vsub.s32 0, %v3430
      %v3432 = vrot.slane %v3428, %v3431
      %v3433 = vmul.f32 %v1062, %v3432
      %v3434 = vmul.f32 %v1063, %v3432
      %v3435 = vmul.f32 %v1064, %v3432
      %v3436 = vmul.f32 %v1066, %v3432
      %v3437 = vmul.f32 %v1067, %v3432
      %v3438 = vmul.f32 %v1068, %v3432
      %v3439 = vmul.f32 %v1070, %v3432
      %v3440 = vmul.f32 %v1071, %v3432
      %v3441 = vmul.f32 %v1072, %v3432
      %v3442 = vmul.f32 %v1074, %v3432
      %v3443 = vmul.f32 %v1075, %v3432
      %v3444 = vmul.f32 %v1076, %v3432
      %v3445 = vmul.f32 %v1078, %v3432
      %v3446 = vmul.f32 %v1079, %v3432
      %v3447 = vmul.f32 %v1080, %v3432
      %v3448 = vmul.f32 %v1082, %v3432
      %v3449 = vmul.f32 %v1083, %v3432
      %v3450 = vmul.f32 %v1084, %v3432
      %v3451 = vmul.f32 %v1086, %v3432
      %v3452 = vmul.f32 %v1087, %v3432
      %v3453 = vmul.f32 %v1088, %v3432
      %v3454 = vmul.f32 %v1090, %v3432
      %v3455 = vmul.f32 %v1091, %v3432
      %v3456 = vmul.f32 %v1092, %v3432
      %v3457 = vmul.f32 %v1094, %v3432
      %v3458 = vmul.f32 %v1095, %v3432
      %v3459 = vmul.f32 %v1096, %v3432
      %v3460 = vmul.f32 %v1098, %v3432
      %v3461 = vmul.f32 %v1099, %v3432
      %v3462 = vmul.f32 %v1100, %v3432
      %v3463 = vmul.f32 %v1102, %v3432
      %v3464 = vmul.f32 %v1103, %v3432
      %v3465 = vmul.f32 %v1104, %v3432
      %v3466 = vmul.f32 %v1106, %v3432
      %v3467 = vmul.f32 %v1107, %v3432
      %v3468 = vmul.f32 %v1108, %v3432
      %v3469 = vmul.f32 %v1110, %v3432
      %v3470 = vmul.f32 %v1111, %v3432
      %v3471 = vmul.f32 %v1112, %v3432
      %v3472 = vmul.f32 %v1114, %v3432
      %v3473 = vmul.f32 %v1115, %v3432
      %v3474 = vmul.f32 %v1116, %v3432
      %v3475 = vmul.f32 %v1118, %v3432
      %v3476 = vmul.f32 %v1119, %v3432
      %v3477 = vmul.f32 %v1120, %v3432
      %v3478 = vmul.f32 %v1122, %v3432
      %v3479 = vmul.f32 %v1123, %v3432
      %v3480 = vmul.f32 %v1124, %v3432
      %v3481 = vadd.f32 %v3380, %v3433
      %v3482 = vadd.f32 %v3381, %v3434
      %v3483 = vadd.f32 %v3382, %v3435
      %v3484 = vadd.f32 %v3383, %v3436
      %v3485 = vadd.f32 %v3384, %v3437
      %v3486 = vadd.f32 %v3385, %v3438
      %v3487 = vadd.f32 %v3386, %v3439
      %v3488 = vadd.f32 %v3387, %v3440
      %v3489 = vadd.f32 %v3388, %v3441
      %v3490 = vadd.f32 %v3389, %v3442
      %v3491 = vadd.f32 %v3390, %v3443
      %v3492 = vadd.f32 %v3391, %v3444
      %v3493 = vadd.f32 %v3392, %v3445
      %v3494 = vadd.f32 %v3393, %v3446
      %v3495 = vadd.f32 %v3394, %v3447
      %v3496 = vadd.f32 %v3395, %v3448
      %v3497 = vadd.f32 %v3396, %v3449
      %v3498 = vadd.f32 %v3397, %v3450
      %v3499 = vadd.f32 %v3398, %v3451
      %v3500 = vadd.f32 %v3399, %v3452
      %v3501 = vadd.f32 %v3400, %v3453
      %v3502 = vadd.f32 %v3401, %v3454
      %v3503 = vadd.f32 %v3402, %v3455
      %v3504 = vadd.f32 %v3403, %v3456
      %v3505 = vadd.f32 %v3404, %v3457
      %v3506 = vadd.f32 %v3405, %v3458
      %v3507 = vadd.f32 %v3406, %v3459
      %v3508 = vadd.f32 %v3407, %v3460
      %v3509 = vadd.f32 %v3408, %v3461
      %v3510 = vadd.f32 %v3409, %v3462
      %v3511 = vadd.f32 %v3410, %v3463
      %v3512 = vadd.f32 %v3411, %v3464
      %v3513 = vadd.f32 %v3412, %v3465
      %v3514 = vadd.f32 %v3413, %v3466
      %v3515 = vadd.f32 %v3414, %v3467
      %v3516 = vadd.f32 %v3415, %v3468
      %v3517 = vadd.f32 %v3416, %v3469
      %v3518 = vadd.f32 %v3417, %v3470
      %v3519 = vadd.f32 %v3418, %v3471
      %v3520 = vadd.f32 %v3419, %v3472
      %v3521 = vadd.f32 %v3420, %v3473
      %v3522 = vadd.f32 %v3421, %v3474
      %v3523 = vadd.f32 %v3422, %v3475
      %v3524 = vadd.f32 %v3423, %v3476
      %v3525 = vadd.f32 %v3424, %v3477
      %v3526 = vadd.f32 %v3425, %v3478
      %v3527 = vadd.f32 %v3426, %v3479
      %v3528 = vadd.f32 %v3427, %v3480
      %v3529 = vld [vmem:[%s4 + $0xb] sm:$0x1]
      %v3530 = vlaneseq
      %v3531 = vshrl.u32 %v3530, 7
      %v3532 = vsub.s32 0, %v3531
      %v3533 = vrot.slane %v3529, %v3532
      %v3534 = vmul.f32 %v1062, %v3533
      %v3535 = vmul.f32 %v1063, %v3533
      %v3536 = vmul.f32 %v1064, %v3533
      %v3537 = vmul.f32 %v1066, %v3533
      %v3538 = vmul.f32 %v1067, %v3533
      %v3539 = vmul.f32 %v1068, %v3533
      %v3540 = vmul.f32 %v1070, %v3533
      %v3541 = vmul.f32 %v1071, %v3533
      %v3542 = vmul.f32 %v1072, %v3533
      %v3543 = vmul.f32 %v1074, %v3533
      %v3544 = vmul.f32 %v1075, %v3533
      %v3545 = vmul.f32 %v1076, %v3533
      %v3546 = vmul.f32 %v1078, %v3533
      %v3547 = vmul.f32 %v1079, %v3533
      %v3548 = vmul.f32 %v1080, %v3533
      %v3549 = vmul.f32 %v1082, %v3533
      %v3550 = vmul.f32 %v1083, %v3533
      %v3551 = vmul.f32 %v1084, %v3533
      %v3552 = vmul.f32 %v1086, %v3533
      %v3553 = vmul.f32 %v1087, %v3533
      %v3554 = vmul.f32 %v1088, %v3533
      %v3555 = vmul.f32 %v1090, %v3533
      %v3556 = vmul.f32 %v1091, %v3533
      %v3557 = vmul.f32 %v1092, %v3533
      %v3558 = vmul.f32 %v1094, %v3533
      %v3559 = vmul.f32 %v1095, %v3533
      %v3560 = vmul.f32 %v1096, %v3533
      %v3561 = vmul.f32 %v1098, %v3533
      %v3562 = vmul.f32 %v1099, %v3533
      %v3563 = vmul.f32 %v1100, %v3533
      %v3564 = vmul.f32 %v1102, %v3533
      %v3565 = vmul.f32 %v1103, %v3533
      %v3566 = vmul.f32 %v1104, %v3533
      %v3567 = vmul.f32 %v1106, %v3533
      %v3568 = vmul.f32 %v1107, %v3533
      %v3569 = vmul.f32 %v1108, %v3533
      %v3570 = vmul.f32 %v1110, %v3533
      %v3571 = vmul.f32 %v1111, %v3533
      %v3572 = vmul.f32 %v1112, %v3533
      %v3573 = vmul.f32 %v1114, %v3533
      %v3574 = vmul.f32 %v1115, %v3533
      %v3575 = vmul.f32 %v1116, %v3533
      %v3576 = vmul.f32 %v1118, %v3533
      %v3577 = vmul.f32 %v1119, %v3533
      %v3578 = vmul.f32 %v1120, %v3533
      %v3579 = vmul.f32 %v1122, %v3533
      %v3580 = vmul.f32 %v1123, %v3533
      %v3581 = vmul.f32 %v1124, %v3533
      %v3630 = vrot.slane %v3534, 1
      %v3631 = vrot.slane %v3535, 1
      %v3632 = vsel %vm1336, %v3630, %v3631
      %v3633 = vrot.slane %v3536, 1
      %v3634 = vsel %vm1336, %v3631, %v3633
      %v3635 = vrot.slane %v3537, 1
      %v3636 = vrot.slane %v3538, 1
      %v3637 = vsel %vm1336, %v3635, %v3636
      %v3638 = vrot.slane %v3539, 1
      %v3639 = vsel %vm1336, %v3636, %v3638
      %v3640 = vrot.slane %v3540, 1
      %v3641 = vrot.slane %v3541, 1
      %v3642 = vsel %vm1336, %v3640, %v3641
      %v3643 = vrot.slane %v3542, 1
      %v3644 = vsel %vm1336, %v3641, %v3643
      %v3645 = vrot.slane %v3543, 1
      %v3646 = vrot.slane %v3544, 1
      %v3647 = vsel %vm1336, %v3645, %v3646
      %v3648 = vrot.slane %v3545, 1
      %v3649 = vsel %vm1336, %v3646, %v3648
      %v3650 = vrot.slane %v3546, 1
      %v3651 = vrot.slane %v3547, 1
      %v3652 = vsel %vm1336, %v3650, %v3651
      %v3653 = vrot.slane %v3548, 1
      %v3654 = vsel %vm1336, %v3651, %v3653
      %v3655 = vrot.slane %v3549, 1
      %v3656 = vrot.slane %v3550, 1
      %v3657 = vsel %vm1336, %v3655, %v3656
      %v3658 = vrot.slane %v3551, 1
      %v3659 = vsel %vm1336, %v3656, %v3658
      %v3660 = vrot.slane %v3552, 1
      %v3661 = vrot.slane %v3553, 1
      %v3662 = vsel %vm1336, %v3660, %v3661
      %v3663 = vrot.slane %v3554, 1
      %v3664 = vsel %vm1336, %v3661, %v3663
      %v3665 = vrot.slane %v3555, 1
      %v3666 = vrot.slane %v3556, 1
      %v3667 = vsel %vm1336, %v3665, %v3666
      %v3668 = vrot.slane %v3557, 1
      %v3669 = vsel %vm1336, %v3666, %v3668
      %v3670 = vrot.slane %v3558, 1
      %v3671 = vrot.slane %v3559, 1
      %v3672 = vsel %vm1336, %v3670, %v3671
      %v3673 = vrot.slane %v3560, 1
      %v3674 = vsel %vm1336, %v3671, %v3673
      %v3675 = vrot.slane %v3561, 1
      %v3676 = vrot.slane %v3562, 1
      %v3677 = vsel %vm1336, %v3675, %v3676
      %v3678 = vrot.slane %v3563, 1
      %v3679 = vsel %vm1336, %v3676, %v3678
      %v3680 = vrot.slane %v3564, 1
      %v3681 = vrot.slane %v3565, 1
      %v3682 = vsel %vm1336, %v3680, %v3681
      %v3683 = vrot.slane %v3566, 1
      %v3684 = vsel %vm1336, %v3681, %v3683
      %v3685 = vrot.slane %v3567, 1
      %v3686 = vrot.slane %v3568, 1
      %v3687 = vsel %vm1336, %v3685, %v3686
      %v3688 = vrot.slane %v3569, 1
      %v3689 = vsel %vm1336, %v3686, %v3688
      %v3690 = vrot.slane %v3570, 1
      %v3691 = vrot.slane %v3571, 1
      %v3692 = vsel %vm1336, %v3690, %v3691
      %v3693 = vrot.slane %v3572, 1
      %v3694 = vsel %vm1336, %v3691, %v3693
      %v3695 = vrot.slane %v3573, 1
      %v3696 = vrot.slane %v3574, 1
      %v3697 = vsel %vm1336, %v3695, %v3696
      %v3698 = vrot.slane %v3575, 1
      %v3699 = vsel %vm1336, %v3696, %v3698
      %v3700 = vrot.slane %v3576, 1
      %v3701 = vrot.slane %v3577, 1
      %v3702 = vsel %vm1336, %v3700, %v3701
      %v3703 = vrot.slane %v3578, 1
      %v3704 = vsel %vm1336, %v3701, %v3703
      %v3705 = vrot.slane %v3579, 1
      %v3706 = vrot.slane %v3580, 1
      %v3707 = vsel %vm1336, %v3705, %v3706
      %v3708 = vrot.slane %v3581, 1
      %v3709 = vsel %vm1336, %v3706, %v3708
      %v3758 = vadd.f32 %v3481, %v3632
      %v3759 = vadd.f32 %v3482, %v3634
      %v3760 = vadd.f32 %v3483, %v3633
      %v3761 = vadd.f32 %v3484, %v3637
      %v3762 = vadd.f32 %v3485, %v3639
      %v3763 = vadd.f32 %v3486, %v3638
      %v3764 = vadd.f32 %v3487, %v3642
      %v3765 = vadd.f32 %v3488, %v3644
      %v3766 = vadd.f32 %v3489, %v3643
      %v3767 = vadd.f32 %v3490, %v3647
      %v3768 = vadd.f32 %v3491, %v3649
      %v3769 = vadd.f32 %v3492, %v3648
      %v3770 = vadd.f32 %v3493, %v3652
      %v3771 = vadd.f32 %v3494, %v3654
      %v3772 = vadd.f32 %v3495, %v3653
      %v3773 = vadd.f32 %v3496, %v3657
      %v3774 = vadd.f32 %v3497, %v3659
      %v3775 = vadd.f32 %v3498, %v3658
      %v3776 = vadd.f32 %v3499, %v3662
      %v3777 = vadd.f32 %v3500, %v3664
      %v3778 = vadd.f32 %v3501, %v3663
      %v3779 = vadd.f32 %v3502, %v3667
      %v3780 = vadd.f32 %v3503, %v3669
      %v3781 = vadd.f32 %v3504, %v3668
      %v3782 = vadd.f32 %v3505, %v3672
      %v3783 = vadd.f32 %v3506, %v3674
      %v3784 = vadd.f32 %v3507, %v3673
      %v3785 = vadd.f32 %v3508, %v3677
      %v3786 = vadd.f32 %v3509, %v3679
      %v3787 = vadd.f32 %v3510, %v3678
      %v3788 = vadd.f32 %v3511, %v3682
      %v3789 = vadd.f32 %v3512, %v3684
      %v3790 = vadd.f32 %v3513, %v3683
      %v3791 = vadd.f32 %v3514, %v3687
      %v3792 = vadd.f32 %v3515, %v3689
      %v3793 = vadd.f32 %v3516, %v3688
      %v3794 = vadd.f32 %v3517, %v3692
      %v3795 = vadd.f32 %v3518, %v3694
      %v3796 = vadd.f32 %v3519, %v3693
      %v3797 = vadd.f32 %v3520, %v3697
      %v3798 = vadd.f32 %v3521, %v3699
      %v3799 = vadd.f32 %v3522, %v3698
      %v3800 = vadd.f32 %v3523, %v3702
      %v3801 = vadd.f32 %v3524, %v3704
      %v3802 = vadd.f32 %v3525, %v3703
      %v3803 = vadd.f32 %v3526, %v3707
      %v3804 = vadd.f32 %v3527, %v3709
      %v3805 = vadd.f32 %v3528, %v3708
      %v3806 = vld [vmem:[%s4 + $0xc] sm:$0x1]
      %v3807 = vlaneseq
      %v3808 = vshrl.u32 %v3807, 7
      %v3809 = vsub.s32 0, %v3808
      %v3810 = vrot.slane %v3806, %v3809
      %v3811 = vmul.f32 %v1063, %v3810
      %v3812 = vmul.f32 %v1064, %v3810
      %v3813 = vmul.f32 %v1067, %v3810
      %v3814 = vmul.f32 %v1068, %v3810
      %v3815 = vmul.f32 %v1071, %v3810
      %v3816 = vmul.f32 %v1072, %v3810
      %v3817 = vmul.f32 %v1075, %v3810
      %v3818 = vmul.f32 %v1076, %v3810
      %v3819 = vmul.f32 %v1079, %v3810
      %v3820 = vmul.f32 %v1080, %v3810
      %v3821 = vmul.f32 %v1083, %v3810
      %v3822 = vmul.f32 %v1084, %v3810
      %v3823 = vmul.f32 %v1087, %v3810
      %v3824 = vmul.f32 %v1088, %v3810
      %v3825 = vmul.f32 %v1091, %v3810
      %v3826 = vmul.f32 %v1092, %v3810
      %v3827 = vmul.f32 %v1095, %v3810
      %v3828 = vmul.f32 %v1096, %v3810
      %v3829 = vmul.f32 %v1099, %v3810
      %v3830 = vmul.f32 %v1100, %v3810
      %v3831 = vmul.f32 %v1103, %v3810
      %v3832 = vmul.f32 %v1104, %v3810
      %v3833 = vmul.f32 %v1107, %v3810
      %v3834 = vmul.f32 %v1108, %v3810
      %v3835 = vmul.f32 %v1111, %v3810
      %v3836 = vmul.f32 %v1112, %v3810
      %v3837 = vmul.f32 %v1115, %v3810
      %v3838 = vmul.f32 %v1116, %v3810
      %v3839 = vmul.f32 %v1119, %v3810
      %v3840 = vmul.f32 %v1120, %v3810
      %v3841 = vmul.f32 %v1123, %v3810
      %v3842 = vmul.f32 %v1124, %v3810
      %v3875 = vrot.slane %v3811, 2
      %v3876 = vrot.slane %v3812, 2
      %v3877 = vsel %vm1582, %v3875, %v3876
      %v3878 = vrot.slane %v3813, 2
      %v3879 = vrot.slane %v3814, 2
      %v3880 = vsel %vm1582, %v3878, %v3879
      %v3881 = vrot.slane %v3815, 2
      %v3882 = vrot.slane %v3816, 2
      %v3883 = vsel %vm1582, %v3881, %v3882
      %v3884 = vrot.slane %v3817, 2
      %v3885 = vrot.slane %v3818, 2
      %v3886 = vsel %vm1582, %v3884, %v3885
      %v3887 = vrot.slane %v3819, 2
      %v3888 = vrot.slane %v3820, 2
      %v3889 = vsel %vm1582, %v3887, %v3888
      %v3890 = vrot.slane %v3821, 2
      %v3891 = vrot.slane %v3822, 2
      %v3892 = vsel %vm1582, %v3890, %v3891
      %v3893 = vrot.slane %v3823, 2
      %v3894 = vrot.slane %v3824, 2
      %v3895 = vsel %vm1582, %v3893, %v3894
      %v3896 = vrot.slane %v3825, 2
      %v3897 = vrot.slane %v3826, 2
      %v3898 = vsel %vm1582, %v3896, %v3897
      %v3899 = vrot.slane %v3827, 2
      %v3900 = vrot.slane %v3828, 2
      %v3901 = vsel %vm1582, %v3899, %v3900
      %v3902 = vrot.slane %v3829, 2
      %v3903 = vrot.slane %v3830, 2
      %v3904 = vsel %vm1582, %v3902, %v3903
      %v3905 = vrot.slane %v3831, 2
      %v3906 = vrot.slane %v3832, 2
      %v3907 = vsel %vm1582, %v3905, %v3906
      %v3908 = vrot.slane %v3833, 2
      %v3909 = vrot.slane %v3834, 2
      %v3910 = vsel %vm1582, %v3908, %v3909
      %v3911 = vrot.slane %v3835, 2
      %v3912 = vrot.slane %v3836, 2
      %v3913 = vsel %vm1582, %v3911, %v3912
      %v3914 = vrot.slane %v3837, 2
      %v3915 = vrot.slane %v3838, 2
      %v3916 = vsel %vm1582, %v3914, %v3915
      %v3917 = vrot.slane %v3839, 2
      %v3918 = vrot.slane %v3840, 2
      %v3919 = vsel %vm1582, %v3917, %v3918
      %v3920 = vrot.slane %v3841, 2
      %v3921 = vrot.slane %v3842, 2
      %v3922 = vsel %vm1582, %v3920, %v3921
      %v3971 = vadd.f32 %v3758, %v3875
      %v3972 = vadd.f32 %v3759, %v3877
      %v3973 = vadd.f32 %v3760, %v3876
      %v3974 = vadd.f32 %v3761, %v3878
      %v3975 = vadd.f32 %v3762, %v3880
      %v3976 = vadd.f32 %v3763, %v3879
      %v3977 = vadd.f32 %v3764, %v3881
      %v3978 = vadd.f32 %v3765, %v3883
      %v3979 = vadd.f32 %v3766, %v3882
      %v3980 = vadd.f32 %v3767, %v3884
      %v3981 = vadd.f32 %v3768, %v3886
      %v3982 = vadd.f32 %v3769, %v3885
      %v3983 = vadd.f32 %v3770, %v3887
      %v3984 = vadd.f32 %v3771, %v3889
      %v3985 = vadd.f32 %v3772, %v3888
      %v3986 = vadd.f32 %v3773, %v3890
      %v3987 = vadd.f32 %v3774, %v3892
      %v3988 = vadd.f32 %v3775, %v3891
      %v3989 = vadd.f32 %v3776, %v3893
      %v3990 = vadd.f32 %v3777, %v3895
      %v3991 = vadd.f32 %v3778, %v3894
      %v3992 = vadd.f32 %v3779, %v3896
      %v3993 = vadd.f32 %v3780, %v3898
      %v3994 = vadd.f32 %v3781, %v3897
      %v3995 = vadd.f32 %v3782, %v3899
      %v3996 = vadd.f32 %v3783, %v3901
      %v3997 = vadd.f32 %v3784, %v3900
      %v3998 = vadd.f32 %v3785, %v3902
      %v3999 = vadd.f32 %v3786, %v3904
      %v4000 = vadd.f32 %v3787, %v3903
      %v4001 = vadd.f32 %v3788, %v3905
      %v4002 = vadd.f32 %v3789, %v3907
      %v4003 = vadd.f32 %v3790, %v3906
      %v4004 = vadd.f32 %v3791, %v3908
      %v4005 = vadd.f32 %v3792, %v3910
      %v4006 = vadd.f32 %v3793, %v3909
      %v4007 = vadd.f32 %v3794, %v3911
      %v4008 = vadd.f32 %v3795, %v3913
      %v4009 = vadd.f32 %v3796, %v3912
      %v4010 = vadd.f32 %v3797, %v3914
      %v4011 = vadd.f32 %v3798, %v3916
      %v4012 = vadd.f32 %v3799, %v3915
      %v4013 = vadd.f32 %v3800, %v3917
      %v4014 = vadd.f32 %v3801, %v3919
      %v4015 = vadd.f32 %v3802, %v3918
      %v4016 = vadd.f32 %v3803, %v3920
      %v4017 = vadd.f32 %v3804, %v3922
      %v4018 = vadd.f32 %v3805, %v3921
      %v4019 = vld [vmem:[%s4 + $0xd] sm:$0x1]
      %v4020 = vlaneseq
      %v4021 = vshrl.u32 %v4020, 7
      %v4022 = vsub.s32 0, %v4021
      %v4023 = vrot.slane %v4019, %v4022
      %v4024 = vmul.f32 %v1063, %v4023
      %v4025 = vmul.f32 %v1064, %v4023
      %v4026 = vmul.f32 %v1065, %v4023
      %v4027 = vmul.f32 %v1067, %v4023
      %v4028 = vmul.f32 %v1068, %v4023
      %v4029 = vmul.f32 %v1069, %v4023
      %v4030 = vmul.f32 %v1071, %v4023
      %v4031 = vmul.f32 %v1072, %v4023
      %v4032 = vmul.f32 %v1073, %v4023
      %v4033 = vmul.f32 %v1075, %v4023
      %v4034 = vmul.f32 %v1076, %v4023
      %v4035 = vmul.f32 %v1077, %v4023
      %v4036 = vmul.f32 %v1079, %v4023
      %v4037 = vmul.f32 %v1080, %v4023
      %v4038 = vmul.f32 %v1081, %v4023
      %v4039 = vmul.f32 %v1083, %v4023
      %v4040 = vmul.f32 %v1084, %v4023
      %v4041 = vmul.f32 %v1085, %v4023
      %v4042 = vmul.f32 %v1087, %v4023
      %v4043 = vmul.f32 %v1088, %v4023
      %v4044 = vmul.f32 %v1089, %v4023
      %v4045 = vmul.f32 %v1091, %v4023
      %v4046 = vmul.f32 %v1092, %v4023
      %v4047 = vmul.f32 %v1093, %v4023
      %v4048 = vmul.f32 %v1095, %v4023
      %v4049 = vmul.f32 %v1096, %v4023
      %v4050 = vmul.f32 %v1097, %v4023
      %v4051 = vmul.f32 %v1099, %v4023
      %v4052 = vmul.f32 %v1100, %v4023
      %v4053 = vmul.f32 %v1101, %v4023
      %v4054 = vmul.f32 %v1103, %v4023
      %v4055 = vmul.f32 %v1104, %v4023
      %v4056 = vmul.f32 %v1105, %v4023
      %v4057 = vmul.f32 %v1107, %v4023
      %v4058 = vmul.f32 %v1108, %v4023
      %v4059 = vmul.f32 %v1109, %v4023
      %v4060 = vmul.f32 %v1111, %v4023
      %v4061 = vmul.f32 %v1112, %v4023
      %v4062 = vmul.f32 %v1113, %v4023
      %v4063 = vmul.f32 %v1115, %v4023
      %v4064 = vmul.f32 %v1116, %v4023
      %v4065 = vmul.f32 %v1117, %v4023
      %v4066 = vmul.f32 %v1119, %v4023
      %v4067 = vmul.f32 %v1120, %v4023
      %v4068 = vmul.f32 %v1121, %v4023
      %v4069 = vmul.f32 %v1123, %v4023
      %v4070 = vmul.f32 %v1124, %v4023
      %v4071 = vmul.f32 %v1125, %v4023
      %v4120 = vrot.slane %v4024, 3
      %v4121 = vrot.slane %v4025, 3
      %v4122 = vsel %vm1828, %v4120, %v4121
      %v4123 = vrot.slane %v4026, 3
      %v4124 = vsel %vm1828, %v4121, %v4123
      %v4125 = vrot.slane %v4027, 3
      %v4126 = vrot.slane %v4028, 3
      %v4127 = vsel %vm1828, %v4125, %v4126
      %v4128 = vrot.slane %v4029, 3
      %v4129 = vsel %vm1828, %v4126, %v4128
      %v4130 = vrot.slane %v4030, 3
      %v4131 = vrot.slane %v4031, 3
      %v4132 = vsel %vm1828, %v4130, %v4131
      %v4133 = vrot.slane %v4032, 3
      %v4134 = vsel %vm1828, %v4131, %v4133
      %v4135 = vrot.slane %v4033, 3
      %v4136 = vrot.slane %v4034, 3
      %v4137 = vsel %vm1828, %v4135, %v4136
      %v4138 = vrot.slane %v4035, 3
      %v4139 = vsel %vm1828, %v4136, %v4138
      %v4140 = vrot.slane %v4036, 3
      %v4141 = vrot.slane %v4037, 3
      %v4142 = vsel %vm1828, %v4140, %v4141
      %v4143 = vrot.slane %v4038, 3
      %v4144 = vsel %vm1828, %v4141, %v4143
      %v4145 = vrot.slane %v4039, 3
      %v4146 = vrot.slane %v4040, 3
      %v4147 = vsel %vm1828, %v4145, %v4146
      %v4148 = vrot.slane %v4041, 3
      %v4149 = vsel %vm1828, %v4146, %v4148
      %v4150 = vrot.slane %v4042, 3
      %v4151 = vrot.slane %v4043, 3
      %v4152 = vsel %vm1828, %v4150, %v4151
      %v4153 = vrot.slane %v4044, 3
      %v4154 = vsel %vm1828, %v4151, %v4153
      %v4155 = vrot.slane %v4045, 3
      %v4156 = vrot.slane %v4046, 3
      %v4157 = vsel %vm1828, %v4155, %v4156
      %v4158 = vrot.slane %v4047, 3
      %v4159 = vsel %vm1828, %v4156, %v4158
      %v4160 = vrot.slane %v4048, 3
      %v4161 = vrot.slane %v4049, 3
      %v4162 = vsel %vm1828, %v4160, %v4161
      %v4163 = vrot.slane %v4050, 3
      %v4164 = vsel %vm1828, %v4161, %v4163
      %v4165 = vrot.slane %v4051, 3
      %v4166 = vrot.slane %v4052, 3
      %v4167 = vsel %vm1828, %v4165, %v4166
      %v4168 = vrot.slane %v4053, 3
      %v4169 = vsel %vm1828, %v4166, %v4168
      %v4170 = vrot.slane %v4054, 3
      %v4171 = vrot.slane %v4055, 3
      %v4172 = vsel %vm1828, %v4170, %v4171
      %v4173 = vrot.slane %v4056, 3
      %v4174 = vsel %vm1828, %v4171, %v4173
      %v4175 = vrot.slane %v4057, 3
      %v4176 = vrot.slane %v4058, 3
      %v4177 = vsel %vm1828, %v4175, %v4176
      %v4178 = vrot.slane %v4059, 3
      %v4179 = vsel %vm1828, %v4176, %v4178
      %v4180 = vrot.slane %v4060, 3
      %v4181 = vrot.slane %v4061, 3
      %v4182 = vsel %vm1828, %v4180, %v4181
      %v4183 = vrot.slane %v4062, 3
      %v4184 = vsel %vm1828, %v4181, %v4183
      %v4185 = vrot.slane %v4063, 3
      %v4186 = vrot.slane %v4064, 3
      %v4187 = vsel %vm1828, %v4185, %v4186
      %v4188 = vrot.slane %v4065, 3
      %v4189 = vsel %vm1828, %v4186, %v4188
      %v4190 = vrot.slane %v4066, 3
      %v4191 = vrot.slane %v4067, 3
      %v4192 = vsel %vm1828, %v4190, %v4191
      %v4193 = vrot.slane %v4068, 3
      %v4194 = vsel %vm1828, %v4191, %v4193
      %v4195 = vrot.slane %v4069, 3
      %v4196 = vrot.slane %v4070, 3
      %v4197 = vsel %vm1828, %v4195, %v4196
      %v4198 = vrot.slane %v4071, 3
      %v4199 = vsel %vm1828, %v4196, %v4198
      %v4248 = vadd.f32 %v3971, %v4120
      %v4249 = vadd.f32 %v3972, %v4122
      %v4250 = vadd.f32 %v3973, %v4124
      %v4251 = vadd.f32 %v3974, %v4125
      %v4252 = vadd.f32 %v3975, %v4127
      %v4253 = vadd.f32 %v3976, %v4129
      %v4254 = vadd.f32 %v3977, %v4130
      %v4255 = vadd.f32 %v3978, %v4132
      %v4256 = vadd.f32 %v3979, %v4134
      %v4257 = vadd.f32 %v3980, %v4135
      %v4258 = vadd.f32 %v3981, %v4137
      %v4259 = vadd.f32 %v3982, %v4139
      %v4260 = vadd.f32 %v3983, %v4140
      %v4261 = vadd.f32 %v3984, %v4142
      %v4262 = vadd.f32 %v3985, %v4144
      %v4263 = vadd.f32 %v3986, %v4145
      %v4264 = vadd.f32 %v3987, %v4147
      %v4265 = vadd.f32 %v3988, %v4149
      %v4266 = vadd.f32 %v3989, %v4150
      %v4267 = vadd.f32 %v3990, %v4152
      %v4268 = vadd.f32 %v3991, %v4154
      %v4269 = vadd.f32 %v3992, %v4155
      %v4270 = vadd.f32 %v3993, %v4157
      %v4271 = vadd.f32 %v3994, %v4159
      %v4272 = vadd.f32 %v3995, %v4160
      %v4273 = vadd.f32 %v3996, %v4162
      %v4274 = vadd.f32 %v3997, %v4164
      %v4275 = vadd.f32 %v3998, %v4165
      %v4276 = vadd.f32 %v3999, %v4167
      %v4277 = vadd.f32 %v4000, %v4169
      %v4278 = vadd.f32 %v4001, %v4170
      %v4279 = vadd.f32 %v4002, %v4172
      %v4280 = vadd.f32 %v4003, %v4174
      %v4281 = vadd.f32 %v4004, %v4175
      %v4282 = vadd.f32 %v4005, %v4177
      %v4283 = vadd.f32 %v4006, %v4179
      %v4284 = vadd.f32 %v4007, %v4180
      %v4285 = vadd.f32 %v4008, %v4182
      %v4286 = vadd.f32 %v4009, %v4184
      %v4287 = vadd.f32 %v4010, %v4185
      %v4288 = vadd.f32 %v4011, %v4187
      %v4289 = vadd.f32 %v4012, %v4189
      %v4290 = vadd.f32 %v4013, %v4190
      %v4291 = vadd.f32 %v4014, %v4192
      %v4292 = vadd.f32 %v4015, %v4194
      %v4293 = vadd.f32 %v4016, %v4195
      %v4294 = vadd.f32 %v4017, %v4197
      %v4295 = vadd.f32 %v4018, %v4199
      %v4296 = vld [vmem:[%s4 + $0xe] sm:$0x1]
      %v4297 = vlaneseq
      %v4298 = vshrl.u32 %v4297, 7
      %v4299 = vsub.s32 0, %v4298
      %v4300 = vrot.slane %v4296, %v4299
      %v4301 = vmul.f32 %v1063, %v4300
      %v4302 = vmul.f32 %v1064, %v4300
      %v4303 = vmul.f32 %v1065, %v4300
      %v4304 = vmul.f32 %v1067, %v4300
      %v4305 = vmul.f32 %v1068, %v4300
      %v4306 = vmul.f32 %v1069, %v4300
      %v4307 = vmul.f32 %v1071, %v4300
      %v4308 = vmul.f32 %v1072, %v4300
      %v4309 = vmul.f32 %v1073, %v4300
      %v4310 = vmul.f32 %v1075, %v4300
      %v4311 = vmul.f32 %v1076, %v4300
      %v4312 = vmul.f32 %v1077, %v4300
      %v4313 = vmul.f32 %v1079, %v4300
      %v4314 = vmul.f32 %v1080, %v4300
      %v4315 = vmul.f32 %v1081, %v4300
      %v4316 = vmul.f32 %v1083, %v4300
      %v4317 = vmul.f32 %v1084, %v4300
      %v4318 = vmul.f32 %v1085, %v4300
      %v4319 = vmul.f32 %v1087, %v4300
      %v4320 = vmul.f32 %v1088, %v4300
      %v4321 = vmul.f32 %v1089, %v4300
      %v4322 = vmul.f32 %v1091, %v4300
      %v4323 = vmul.f32 %v1092, %v4300
      %v4324 = vmul.f32 %v1093, %v4300
      %v4325 = vmul.f32 %v1095, %v4300
      %v4326 = vmul.f32 %v1096, %v4300
      %v4327 = vmul.f32 %v1097, %v4300
      %v4328 = vmul.f32 %v1099, %v4300
      %v4329 = vmul.f32 %v1100, %v4300
      %v4330 = vmul.f32 %v1101, %v4300
      %v4331 = vmul.f32 %v1103, %v4300
      %v4332 = vmul.f32 %v1104, %v4300
      %v4333 = vmul.f32 %v1105, %v4300
      %v4334 = vmul.f32 %v1107, %v4300
      %v4335 = vmul.f32 %v1108, %v4300
      %v4336 = vmul.f32 %v1109, %v4300
      %v4337 = vmul.f32 %v1111, %v4300
      %v4338 = vmul.f32 %v1112, %v4300
      %v4339 = vmul.f32 %v1113, %v4300
      %v4340 = vmul.f32 %v1115, %v4300
      %v4341 = vmul.f32 %v1116, %v4300
      %v4342 = vmul.f32 %v1117, %v4300
      %v4343 = vmul.f32 %v1119, %v4300
      %v4344 = vmul.f32 %v1120, %v4300
      %v4345 = vmul.f32 %v1121, %v4300
      %v4346 = vmul.f32 %v1123, %v4300
      %v4347 = vmul.f32 %v1124, %v4300
      %v4348 = vmul.f32 %v1125, %v4300
      %v4397 = vrot.slane %v4301, 4
      %v4398 = vrot.slane %v4302, 4
      %v4399 = vsel %vm2106, %v4397, %v4398
      %v4400 = vrot.slane %v4303, 4
      %v4401 = vsel %vm2106, %v4398, %v4400
      %v4402 = vrot.slane %v4304, 4
      %v4403 = vrot.slane %v4305, 4
      %v4404 = vsel %vm2106, %v4402, %v4403
      %v4405 = vrot.slane %v4306, 4
      %v4406 = vsel %vm2106, %v4403, %v4405
      %v4407 = vrot.slane %v4307, 4
      %v4408 = vrot.slane %v4308, 4
      %v4409 = vsel %vm2106, %v4407, %v4408
      %v4410 = vrot.slane %v4309, 4
      %v4411 = vsel %vm2106, %v4408, %v4410
      %v4412 = vrot.slane %v4310, 4
      %v4413 = vrot.slane %v4311, 4
      %v4414 = vsel %vm2106, %v4412, %v4413
      %v4415 = vrot.slane %v4312, 4
      %v4416 = vsel %vm2106, %v4413, %v4415
      %v4417 = vrot.slane %v4313, 4
      %v4418 = vrot.slane %v4314, 4
      %v4419 = vsel %vm2106, %v4417, %v4418
      %v4420 = vrot.slane %v4315, 4
      %v4421 = vsel %vm2106, %v4418, %v4420
      %v4422 = vrot.slane %v4316, 4
      %v4423 = vrot.slane %v4317, 4
      %v4424 = vsel %vm2106, %v4422, %v4423
      %v4425 = vrot.slane %v4318, 4
      %v4426 = vsel %vm2106, %v4423, %v4425
      %v4427 = vrot.slane %v4319, 4
      %v4428 = vrot.slane %v4320, 4
      %v4429 = vsel %vm2106, %v4427, %v4428
      %v4430 = vrot.slane %v4321, 4
      %v4431 = vsel %vm2106, %v4428, %v4430
      %v4432 = vrot.slane %v4322, 4
      %v4433 = vrot.slane %v4323, 4
      %v4434 = vsel %vm2106, %v4432, %v4433
      %v4435 = vrot.slane %v4324, 4
      %v4436 = vsel %vm2106, %v4433, %v4435
      %v4437 = vrot.slane %v4325, 4
      %v4438 = vrot.slane %v4326, 4
      %v4439 = vsel %vm2106, %v4437, %v4438
      %v4440 = vrot.slane %v4327, 4
      %v4441 = vsel %vm2106, %v4438, %v4440
      %v4442 = vrot.slane %v4328, 4
      %v4443 = vrot.slane %v4329, 4
      %v4444 = vsel %vm2106, %v4442, %v4443
      %v4445 = vrot.slane %v4330, 4
      %v4446 = vsel %vm2106, %v4443, %v4445
      %v4447 = vrot.slane %v4331, 4
      %v4448 = vrot.slane %v4332, 4
      %v4449 = vsel %vm2106, %v4447, %v4448
      %v4450 = vrot.slane %v4333, 4
      %v4451 = vsel %vm2106, %v4448, %v4450
      %v4452 = vrot.slane %v4334, 4
      %v4453 = vrot.slane %v4335, 4
      %v4454 = vsel %vm2106, %v4452, %v4453
      %v4455 = vrot.slane %v4336, 4
      %v4456 = vsel %vm2106, %v4453, %v4455
      %v4457 = vrot.slane %v4337, 4
      %v4458 = vrot.slane %v4338, 4
      %v4459 = vsel %vm2106, %v4457, %v4458
      %v4460 = vrot.slane %v4339, 4
      %v4461 = vsel %vm2106, %v4458, %v4460
      %v4462 = vrot.slane %v4340, 4
      %v4463 = vrot.slane %v4341, 4
      %v4464 = vsel %vm2106, %v4462, %v4463
      %v4465 = vrot.slane %v4342, 4
      %v4466 = vsel %vm2106, %v4463, %v4465
      %v4467 = vrot.slane %v4343, 4
      %v4468 = vrot.slane %v4344, 4
      %v4469 = vsel %vm2106, %v4467, %v4468
      %v4470 = vrot.slane %v4345, 4
      %v4471 = vsel %vm2106, %v4468, %v4470
      %v4472 = vrot.slane %v4346, 4
      %v4473 = vrot.slane %v4347, 4
      %v4474 = vsel %vm2106, %v4472, %v4473
      %v4475 = vrot.slane %v4348, 4
      %v4476 = vsel %vm2106, %v4473, %v4475
      %v4525 = vadd.f32 %v4248, %v4397
      %v4526 = vadd.f32 %v4249, %v4399
      %v4527 = vadd.f32 %v4250, %v4401
      %v4528 = vadd.f32 %v4251, %v4402
      %v4529 = vadd.f32 %v4252, %v4404
      %v4530 = vadd.f32 %v4253, %v4406
      %v4531 = vadd.f32 %v4254, %v4407
      %v4532 = vadd.f32 %v4255, %v4409
      %v4533 = vadd.f32 %v4256, %v4411
      %v4534 = vadd.f32 %v4257, %v4412
      %v4535 = vadd.f32 %v4258, %v4414
      %v4536 = vadd.f32 %v4259, %v4416
      %v4537 = vadd.f32 %v4260, %v4417
      %v4538 = vadd.f32 %v4261, %v4419
      %v4539 = vadd.f32 %v4262, %v4421
      %v4540 = vadd.f32 %v4263, %v4422
      %v4541 = vadd.f32 %v4264, %v4424
      %v4542 = vadd.f32 %v4265, %v4426
      %v4543 = vadd.f32 %v4266, %v4427
      %v4544 = vadd.f32 %v4267, %v4429
      %v4545 = vadd.f32 %v4268, %v4431
      %v4546 = vadd.f32 %v4269, %v4432
      %v4547 = vadd.f32 %v4270, %v4434
      %v4548 = vadd.f32 %v4271, %v4436
      %v4549 = vadd.f32 %v4272, %v4437
      %v4550 = vadd.f32 %v4273, %v4439
      %v4551 = vadd.f32 %v4274, %v4441
      %v4552 = vadd.f32 %v4275, %v4442
      %v4553 = vadd.f32 %v4276, %v4444
      %v4554 = vadd.f32 %v4277, %v4446
      %v4555 = vadd.f32 %v4278, %v4447
      %v4556 = vadd.f32 %v4279, %v4449
      %v4557 = vadd.f32 %v4280, %v4451
      %v4558 = vadd.f32 %v4281, %v4452
      %v4559 = vadd.f32 %v4282, %v4454
      %v4560 = vadd.f32 %v4283, %v4456
      %v4561 = vadd.f32 %v4284, %v4457
      %v4562 = vadd.f32 %v4285, %v4459
      %v4563 = vadd.f32 %v4286, %v4461
      %v4564 = vadd.f32 %v4287, %v4462
      %v4565 = vadd.f32 %v4288, %v4464
      %v4566 = vadd.f32 %v4289, %v4466
      %v4567 = vadd.f32 %v4290, %v4467
      %v4568 = vadd.f32 %v4291, %v4469
      %v4569 = vadd.f32 %v4292, %v4471
      %v4570 = vadd.f32 %v4293, %v4472
      %v4571 = vadd.f32 %v4294, %v4474
      %v4572 = vadd.f32 %v4295, %v4476
      %v4573 = vld [vmem:[%s4 + $0xf] sm:$0x1]
      %v4574 = vlaneseq
      %v4575 = vshrl.u32 %v4574, 7
      %v4576 = vsub.s32 0, %v4575
      %v4577 = vrot.slane %v4573, %v4576
      %v4578 = vmul.f32 %v1066, %v4577
      %v4579 = vmul.f32 %v1067, %v4577
      %v4580 = vmul.f32 %v1068, %v4577
      %v4581 = vmul.f32 %v1070, %v4577
      %v4582 = vmul.f32 %v1071, %v4577
      %v4583 = vmul.f32 %v1072, %v4577
      %v4584 = vmul.f32 %v1074, %v4577
      %v4585 = vmul.f32 %v1075, %v4577
      %v4586 = vmul.f32 %v1076, %v4577
      %v4587 = vmul.f32 %v1078, %v4577
      %v4588 = vmul.f32 %v1079, %v4577
      %v4589 = vmul.f32 %v1080, %v4577
      %v4590 = vmul.f32 %v1082, %v4577
      %v4591 = vmul.f32 %v1083, %v4577
      %v4592 = vmul.f32 %v1084, %v4577
      %v4593 = vmul.f32 %v1086, %v4577
      %v4594 = vmul.f32 %v1087, %v4577
      %v4595 = vmul.f32 %v1088, %v4577
      %v4596 = vmul.f32 %v1090, %v4577
      %v4597 = vmul.f32 %v1091, %v4577
      %v4598 = vmul.f32 %v1092, %v4577
      %v4599 = vmul.f32 %v1094, %v4577
      %v4600 = vmul.f32 %v1095, %v4577
      %v4601 = vmul.f32 %v1096, %v4577
      %v4602 = vmul.f32 %v1098, %v4577
      %v4603 = vmul.f32 %v1099, %v4577
      %v4604 = vmul.f32 %v1100, %v4577
      %v4605 = vmul.f32 %v1102, %v4577
      %v4606 = vmul.f32 %v1103, %v4577
      %v4607 = vmul.f32 %v1104, %v4577
      %v4608 = vmul.f32 %v1106, %v4577
      %v4609 = vmul.f32 %v1107, %v4577
      %v4610 = vmul.f32 %v1108, %v4577
      %v4611 = vmul.f32 %v1110, %v4577
      %v4612 = vmul.f32 %v1111, %v4577
      %v4613 = vmul.f32 %v1112, %v4577
      %v4614 = vmul.f32 %v1114, %v4577
      %v4615 = vmul.f32 %v1115, %v4577
      %v4616 = vmul.f32 %v1116, %v4577
      %v4617 = vmul.f32 %v1118, %v4577
      %v4618 = vmul.f32 %v1119, %v4577
      %v4619 = vmul.f32 %v1120, %v4577
      %v4620 = vmul.f32 %v1122, %v4577
      %v4621 = vmul.f32 %v1123, %v4577
      %v4622 = vmul.f32 %v1124, %v4577
      %v4623 = vmul.f32 %v1126, %v4577
      %v4624 = vmul.f32 %v1127, %v4577
      %v4625 = vmul.f32 %v1128, %v4577
      %v4626 = vadd.f32 %v4525, %v4578
      %v4627 = vadd.f32 %v4526, %v4579
      %v4628 = vadd.f32 %v4527, %v4580
      %v4629 = vadd.f32 %v4528, %v4581
      %v4630 = vadd.f32 %v4529, %v4582
      %v4631 = vadd.f32 %v4530, %v4583
      %v4632 = vadd.f32 %v4531, %v4584
      %v4633 = vadd.f32 %v4532, %v4585
      %v4634 = vadd.f32 %v4533, %v4586
      %v4635 = vadd.f32 %v4534, %v4587
      %v4636 = vadd.f32 %v4535, %v4588
      %v4637 = vadd.f32 %v4536, %v4589
      %v4638 = vadd.f32 %v4537, %v4590
      %v4639 = vadd.f32 %v4538, %v4591
      %v4640 = vadd.f32 %v4539, %v4592
      %v4641 = vadd.f32 %v4540, %v4593
      %v4642 = vadd.f32 %v4541, %v4594
      %v4643 = vadd.f32 %v4542, %v4595
      %v4644 = vadd.f32 %v4543, %v4596
      %v4645 = vadd.f32 %v4544, %v4597
      %v4646 = vadd.f32 %v4545, %v4598
      %v4647 = vadd.f32 %v4546, %v4599
      %v4648 = vadd.f32 %v4547, %v4600
      %v4649 = vadd.f32 %v4548, %v4601
      %v4650 = vadd.f32 %v4549, %v4602
      %v4651 = vadd.f32 %v4550, %v4603
      %v4652 = vadd.f32 %v4551, %v4604
      %v4653 = vadd.f32 %v4552, %v4605
      %v4654 = vadd.f32 %v4553, %v4606
      %v4655 = vadd.f32 %v4554, %v4607
      %v4656 = vadd.f32 %v4555, %v4608
      %v4657 = vadd.f32 %v4556, %v4609
      %v4658 = vadd.f32 %v4557, %v4610
      %v4659 = vadd.f32 %v4558, %v4611
      %v4660 = vadd.f32 %v4559, %v4612
      %v4661 = vadd.f32 %v4560, %v4613
      %v4662 = vadd.f32 %v4561, %v4614
      %v4663 = vadd.f32 %v4562, %v4615
      %v4664 = vadd.f32 %v4563, %v4616
      %v4665 = vadd.f32 %v4564, %v4617
      %v4666 = vadd.f32 %v4565, %v4618
      %v4667 = vadd.f32 %v4566, %v4619
      %v4668 = vadd.f32 %v4567, %v4620
      %v4669 = vadd.f32 %v4568, %v4621
      %v4670 = vadd.f32 %v4569, %v4622
      %v4671 = vadd.f32 %v4570, %v4623
      %v4672 = vadd.f32 %v4571, %v4624
      %v4673 = vadd.f32 %v4572, %v4625
      %v4674 = vld [vmem:[%s4 + $0x10] sm:$0x1]
      %v4675 = vlaneseq
      %v4676 = vshrl.u32 %v4675, 7
      %v4677 = vsub.s32 0, %v4676
      %v4678 = vrot.slane %v4674, %v4677
      %v4679 = vmul.f32 %v1066, %v4678
      %v4680 = vmul.f32 %v1067, %v4678
      %v4681 = vmul.f32 %v1068, %v4678
      %v4682 = vmul.f32 %v1070, %v4678
      %v4683 = vmul.f32 %v1071, %v4678
      %v4684 = vmul.f32 %v1072, %v4678
      %v4685 = vmul.f32 %v1074, %v4678
      %v4686 = vmul.f32 %v1075, %v4678
      %v4687 = vmul.f32 %v1076, %v4678
      %v4688 = vmul.f32 %v1078, %v4678
      %v4689 = vmul.f32 %v1079, %v4678
      %v4690 = vmul.f32 %v1080, %v4678
      %v4691 = vmul.f32 %v1082, %v4678
      %v4692 = vmul.f32 %v1083, %v4678
      %v4693 = vmul.f32 %v1084, %v4678
      %v4694 = vmul.f32 %v1086, %v4678
      %v4695 = vmul.f32 %v1087, %v4678
      %v4696 = vmul.f32 %v1088, %v4678
      %v4697 = vmul.f32 %v1090, %v4678
      %v4698 = vmul.f32 %v1091, %v4678
      %v4699 = vmul.f32 %v1092, %v4678
      %v4700 = vmul.f32 %v1094, %v4678
      %v4701 = vmul.f32 %v1095, %v4678
      %v4702 = vmul.f32 %v1096, %v4678
      %v4703 = vmul.f32 %v1098, %v4678
      %v4704 = vmul.f32 %v1099, %v4678
      %v4705 = vmul.f32 %v1100, %v4678
      %v4706 = vmul.f32 %v1102, %v4678
      %v4707 = vmul.f32 %v1103, %v4678
      %v4708 = vmul.f32 %v1104, %v4678
      %v4709 = vmul.f32 %v1106, %v4678
      %v4710 = vmul.f32 %v1107, %v4678
      %v4711 = vmul.f32 %v1108, %v4678
      %v4712 = vmul.f32 %v1110, %v4678
      %v4713 = vmul.f32 %v1111, %v4678
      %v4714 = vmul.f32 %v1112, %v4678
      %v4715 = vmul.f32 %v1114, %v4678
      %v4716 = vmul.f32 %v1115, %v4678
      %v4717 = vmul.f32 %v1116, %v4678
      %v4718 = vmul.f32 %v1118, %v4678
      %v4719 = vmul.f32 %v1119, %v4678
      %v4720 = vmul.f32 %v1120, %v4678
      %v4721 = vmul.f32 %v1122, %v4678
      %v4722 = vmul.f32 %v1123, %v4678
      %v4723 = vmul.f32 %v1124, %v4678
      %v4724 = vmul.f32 %v1126, %v4678
      %v4725 = vmul.f32 %v1127, %v4678
      %v4726 = vmul.f32 %v1128, %v4678
      %v4775 = vrot.slane %v4679, 1
      %v4776 = vrot.slane %v4680, 1
      %v4777 = vsel %vm1336, %v4775, %v4776
      %v4778 = vrot.slane %v4681, 1
      %v4779 = vsel %vm1336, %v4776, %v4778
      %v4780 = vrot.slane %v4682, 1
      %v4781 = vrot.slane %v4683, 1
      %v4782 = vsel %vm1336, %v4780, %v4781
      %v4783 = vrot.slane %v4684, 1
      %v4784 = vsel %vm1336, %v4781, %v4783
      %v4785 = vrot.slane %v4685, 1
      %v4786 = vrot.slane %v4686, 1
      %v4787 = vsel %vm1336, %v4785, %v4786
      %v4788 = vrot.slane %v4687, 1
      %v4789 = vsel %vm1336, %v4786, %v4788
      %v4790 = vrot.slane %v4688, 1
      %v4791 = vrot.slane %v4689, 1
      %v4792 = vsel %vm1336, %v4790, %v4791
      %v4793 = vrot.slane %v4690, 1
      %v4794 = vsel %vm1336, %v4791, %v4793
      %v4795 = vrot.slane %v4691, 1
      %v4796 = vrot.slane %v4692, 1
      %v4797 = vsel %vm1336, %v4795, %v4796
      %v4798 = vrot.slane %v4693, 1
      %v4799 = vsel %vm1336, %v4796, %v4798
      %v4800 = vrot.slane %v4694, 1
      %v4801 = vrot.slane %v4695, 1
      %v4802 = vsel %vm1336, %v4800, %v4801
      %v4803 = vrot.slane %v4696, 1
      %v4804 = vsel %vm1336, %v4801, %v4803
      %v4805 = vrot.slane %v4697, 1
      %v4806 = vrot.slane %v4698, 1
      %v4807 = vsel %vm1336, %v4805, %v4806
      %v4808 = vrot.slane %v4699, 1
      %v4809 = vsel %vm1336, %v4806, %v4808
      %v4810 = vrot.slane %v4700, 1
      %v4811 = vrot.slane %v4701, 1
      %v4812 = vsel %vm1336, %v4810, %v4811
      %v4813 = vrot.slane %v4702, 1
      %v4814 = vsel %vm1336, %v4811, %v4813
      %v4815 = vrot.slane %v4703, 1
      %v4816 = vrot.slane %v4704, 1
      %v4817 = vsel %vm1336, %v4815, %v4816
      %v4818 = vrot.slane %v4705, 1
      %v4819 = vsel %vm1336, %v4816, %v4818
      %v4820 = vrot.slane %v4706, 1
      %v4821 = vrot.slane %v4707, 1
      %v4822 = vsel %vm1336, %v4820, %v4821
      %v4823 = vrot.slane %v4708, 1
      %v4824 = vsel %vm1336, %v4821, %v4823
      %v4825 = vrot.slane %v4709, 1
      %v4826 = vrot.slane %v4710, 1
      %v4827 = vsel %vm1336, %v4825, %v4826
      %v4828 = vrot.slane %v4711, 1
      %v4829 = vsel %vm1336, %v4826, %v4828
      %v4830 = vrot.slane %v4712, 1
      %v4831 = vrot.slane %v4713, 1
      %v4832 = vsel %vm1336, %v4830, %v4831
      %v4833 = vrot.slane %v4714, 1
      %v4834 = vsel %vm1336, %v4831, %v4833
      %v4835 = vrot.slane %v4715, 1
      %v4836 = vrot.slane %v4716, 1
      %v4837 = vsel %vm1336, %v4835, %v4836
      %v4838 = vrot.slane %v4717, 1
      %v4839 = vsel %vm1336, %v4836, %v4838
      %v4840 = vrot.slane %v4718, 1
      %v4841 = vrot.slane %v4719, 1
      %v4842 = vsel %vm1336, %v4840, %v4841
      %v4843 = vrot.slane %v4720, 1
      %v4844 = vsel %vm1336, %v4841, %v4843
      %v4845 = vrot.slane %v4721, 1
      %v4846 = vrot.slane %v4722, 1
      %v4847 = vsel %vm1336, %v4845, %v4846
      %v4848 = vrot.slane %v4723, 1
      %v4849 = vsel %vm1336, %v4846, %v4848
      %v4850 = vrot.slane %v4724, 1
      %v4851 = vrot.slane %v4725, 1
      %v4852 = vsel %vm1336, %v4850, %v4851
      %v4853 = vrot.slane %v4726, 1
      %v4854 = vsel %vm1336, %v4851, %v4853
      %v4903 = vadd.f32 %v4626, %v4777
      %v4904 = vadd.f32 %v4627, %v4779
      %v4905 = vadd.f32 %v4628, %v4778
      %v4906 = vadd.f32 %v4629, %v4782
      %v4907 = vadd.f32 %v4630, %v4784
      %v4908 = vadd.f32 %v4631, %v4783
      %v4909 = vadd.f32 %v4632, %v4787
      %v4910 = vadd.f32 %v4633, %v4789
      %v4911 = vadd.f32 %v4634, %v4788
      %v4912 = vadd.f32 %v4635, %v4792
      %v4913 = vadd.f32 %v4636, %v4794
      %v4914 = vadd.f32 %v4637, %v4793
      %v4915 = vadd.f32 %v4638, %v4797
      %v4916 = vadd.f32 %v4639, %v4799
      %v4917 = vadd.f32 %v4640, %v4798
      %v4918 = vadd.f32 %v4641, %v4802
      %v4919 = vadd.f32 %v4642, %v4804
      %v4920 = vadd.f32 %v4643, %v4803
      %v4921 = vadd.f32 %v4644, %v4807
      %v4922 = vadd.f32 %v4645, %v4809
      %v4923 = vadd.f32 %v4646, %v4808
      %v4924 = vadd.f32 %v4647, %v4812
      %v4925 = vadd.f32 %v4648, %v4814
      %v4926 = vadd.f32 %v4649, %v4813
      %v4927 = vadd.f32 %v4650, %v4817
      %v4928 = vadd.f32 %v4651, %v4819
      %v4929 = vadd.f32 %v4652, %v4818
      %v4930 = vadd.f32 %v4653, %v4822
      %v4931 = vadd.f32 %v4654, %v4824
      %v4932 = vadd.f32 %v4655, %v4823
      %v4933 = vadd.f32 %v4656, %v4827
      %v4934 = vadd.f32 %v4657, %v4829
      %v4935 = vadd.f32 %v4658, %v4828
      %v4936 = vadd.f32 %v4659, %v4832
      %v4937 = vadd.f32 %v4660, %v4834
      %v4938 = vadd.f32 %v4661, %v4833
      %v4939 = vadd.f32 %v4662, %v4837
      %v4940 = vadd.f32 %v4663, %v4839
      %v4941 = vadd.f32 %v4664, %v4838
      %v4942 = vadd.f32 %v4665, %v4842
      %v4943 = vadd.f32 %v4666, %v4844
      %v4944 = vadd.f32 %v4667, %v4843
      %v4945 = vadd.f32 %v4668, %v4847
      %v4946 = vadd.f32 %v4669, %v4849
      %v4947 = vadd.f32 %v4670, %v4848
      %v4948 = vadd.f32 %v4671, %v4852
      %v4949 = vadd.f32 %v4672, %v4854
      %v4950 = vadd.f32 %v4673, %v4853
      %v4951 = vld [vmem:[%s4 + $0x11] sm:$0x1]
      %v4952 = vlaneseq
      %v4953 = vshrl.u32 %v4952, 7
      %v4954 = vsub.s32 0, %v4953
      %v4955 = vrot.slane %v4951, %v4954
      %v4956 = vmul.f32 %v1067, %v4955
      %v4957 = vmul.f32 %v1068, %v4955
      %v4958 = vmul.f32 %v1071, %v4955
      %v4959 = vmul.f32 %v1072, %v4955
      %v4960 = vmul.f32 %v1075, %v4955
      %v4961 = vmul.f32 %v1076, %v4955
      %v4962 = vmul.f32 %v1079, %v4955
      %v4963 = vmul.f32 %v1080, %v4955
      %v4964 = vmul.f32 %v1083, %v4955
      %v4965 = vmul.f32 %v1084, %v4955
      %v4966 = vmul.f32 %v1087, %v4955
      %v4967 = vmul.f32 %v1088, %v4955
      %v4968 = vmul.f32 %v1091, %v4955
      %v4969 = vmul.f32 %v1092, %v4955
      %v4970 = vmul.f32 %v1095, %v4955
      %v4971 = vmul.f32 %v1096, %v4955
      %v4972 = vmul.f32 %v1099, %v4955
      %v4973 = vmul.f32 %v1100, %v4955
      %v4974 = vmul.f32 %v1103, %v4955
      %v4975 = vmul.f32 %v1104, %v4955
      %v4976 = vmul.f32 %v1107, %v4955
      %v4977 = vmul.f32 %v1108, %v4955
      %v4978 = vmul.f32 %v1111, %v4955
      %v4979 = vmul.f32 %v1112, %v4955
      %v4980 = vmul.f32 %v1115, %v4955
      %v4981 = vmul.f32 %v1116, %v4955
      %v4982 = vmul.f32 %v1119, %v4955
      %v4983 = vmul.f32 %v1120, %v4955
      %v4984 = vmul.f32 %v1123, %v4955
      %v4985 = vmul.f32 %v1124, %v4955
      %v4986 = vmul.f32 %v1127, %v4955
      %v4987 = vmul.f32 %v1128, %v4955
      %v5020 = vrot.slane %v4956, 2
      %v5021 = vrot.slane %v4957, 2
      %v5022 = vsel %vm1582, %v5020, %v5021
      %v5023 = vrot.slane %v4958, 2
      %v5024 = vrot.slane %v4959, 2
      %v5025 = vsel %vm1582, %v5023, %v5024
      %v5026 = vrot.slane %v4960, 2
      %v5027 = vrot.slane %v4961, 2
      %v5028 = vsel %vm1582, %v5026, %v5027
      %v5029 = vrot.slane %v4962, 2
      %v5030 = vrot.slane %v4963, 2
      %v5031 = vsel %vm1582, %v5029, %v5030
      %v5032 = vrot.slane %v4964, 2
      %v5033 = vrot.slane %v4965, 2
      %v5034 = vsel %vm1582, %v5032, %v5033
      %v5035 = vrot.slane %v4966, 2
      %v5036 = vrot.slane %v4967, 2
      %v5037 = vsel %vm1582, %v5035, %v5036
      %v5038 = vrot.slane %v4968, 2
      %v5039 = vrot.slane %v4969, 2
      %v5040 = vsel %vm1582, %v5038, %v5039
      %v5041 = vrot.slane %v4970, 2
      %v5042 = vrot.slane %v4971, 2
      %v5043 = vsel %vm1582, %v5041, %v5042
      %v5044 = vrot.slane %v4972, 2
      %v5045 = vrot.slane %v4973, 2
      %v5046 = vsel %vm1582, %v5044, %v5045
      %v5047 = vrot.slane %v4974, 2
      %v5048 = vrot.slane %v4975, 2
      %v5049 = vsel %vm1582, %v5047, %v5048
      %v5050 = vrot.slane %v4976, 2
      %v5051 = vrot.slane %v4977, 2
      %v5052 = vsel %vm1582, %v5050, %v5051
      %v5053 = vrot.slane %v4978, 2
      %v5054 = vrot.slane %v4979, 2
      %v5055 = vsel %vm1582, %v5053, %v5054
      %v5056 = vrot.slane %v4980, 2
      %v5057 = vrot.slane %v4981, 2
      %v5058 = vsel %vm1582, %v5056, %v5057
      %v5059 = vrot.slane %v4982, 2
      %v5060 = vrot.slane %v4983, 2
      %v5061 = vsel %vm1582, %v5059, %v5060
      %v5062 = vrot.slane %v4984, 2
      %v5063 = vrot.slane %v4985, 2
      %v5064 = vsel %vm1582, %v5062, %v5063
      %v5065 = vrot.slane %v4986, 2
      %v5066 = vrot.slane %v4987, 2
      %v5067 = vsel %vm1582, %v5065, %v5066
      %v5116 = vadd.f32 %v4903, %v5020
      %v5117 = vadd.f32 %v4904, %v5022
      %v5118 = vadd.f32 %v4905, %v5021
      %v5119 = vadd.f32 %v4906, %v5023
      %v5120 = vadd.f32 %v4907, %v5025
      %v5121 = vadd.f32 %v4908, %v5024
      %v5122 = vadd.f32 %v4909, %v5026
      %v5123 = vadd.f32 %v4910, %v5028
      %v5124 = vadd.f32 %v4911, %v5027
      %v5125 = vadd.f32 %v4912, %v5029
      %v5126 = vadd.f32 %v4913, %v5031
      %v5127 = vadd.f32 %v4914, %v5030
      %v5128 = vadd.f32 %v4915, %v5032
      %v5129 = vadd.f32 %v4916, %v5034
      %v5130 = vadd.f32 %v4917, %v5033
      %v5131 = vadd.f32 %v4918, %v5035
      %v5132 = vadd.f32 %v4919, %v5037
      %v5133 = vadd.f32 %v4920, %v5036
      %v5134 = vadd.f32 %v4921, %v5038
      %v5135 = vadd.f32 %v4922, %v5040
      %v5136 = vadd.f32 %v4923, %v5039
      %v5137 = vadd.f32 %v4924, %v5041
      %v5138 = vadd.f32 %v4925, %v5043
      %v5139 = vadd.f32 %v4926, %v5042
      %v5140 = vadd.f32 %v4927, %v5044
      %v5141 = vadd.f32 %v4928, %v5046
      %v5142 = vadd.f32 %v4929, %v5045
      %v5143 = vadd.f32 %v4930, %v5047
      %v5144 = vadd.f32 %v4931, %v5049
      %v5145 = vadd.f32 %v4932, %v5048
      %v5146 = vadd.f32 %v4933, %v5050
      %v5147 = vadd.f32 %v4934, %v5052
      %v5148 = vadd.f32 %v4935, %v5051
      %v5149 = vadd.f32 %v4936, %v5053
      %v5150 = vadd.f32 %v4937, %v5055
      %v5151 = vadd.f32 %v4938, %v5054
      %v5152 = vadd.f32 %v4939, %v5056
      %v5153 = vadd.f32 %v4940, %v5058
      %v5154 = vadd.f32 %v4941, %v5057
      %v5155 = vadd.f32 %v4942, %v5059
      %v5156 = vadd.f32 %v4943, %v5061
      %v5157 = vadd.f32 %v4944, %v5060
      %v5158 = vadd.f32 %v4945, %v5062
      %v5159 = vadd.f32 %v4946, %v5064
      %v5160 = vadd.f32 %v4947, %v5063
      %v5161 = vadd.f32 %v4948, %v5065
      %v5162 = vadd.f32 %v4949, %v5067
      %v5163 = vadd.f32 %v4950, %v5066
      %v5164 = vld [vmem:[%s4 + $0x12] sm:$0x1]
      %v5165 = vlaneseq
      %v5166 = vshrl.u32 %v5165, 7
      %v5167 = vsub.s32 0, %v5166
      %v5168 = vrot.slane %v5164, %v5167
      %v5169 = vmul.f32 %v1067, %v5168
      %v5170 = vmul.f32 %v1068, %v5168
      %v5171 = vmul.f32 %v1069, %v5168
      %v5172 = vmul.f32 %v1071, %v5168
      %v5173 = vmul.f32 %v1072, %v5168
      %v5174 = vmul.f32 %v1073, %v5168
      %v5175 = vmul.f32 %v1075, %v5168
      %v5176 = vmul.f32 %v1076, %v5168
      %v5177 = vmul.f32 %v1077, %v5168
      %v5178 = vmul.f32 %v1079, %v5168
      %v5179 = vmul.f32 %v1080, %v5168
      %v5180 = vmul.f32 %v1081, %v5168
      %v5181 = vmul.f32 %v1083, %v5168
      %v5182 = vmul.f32 %v1084, %v5168
      %v5183 = vmul.f32 %v1085, %v5168
      %v5184 = vmul.f32 %v1087, %v5168
      %v5185 = vmul.f32 %v1088, %v5168
      %v5186 = vmul.f32 %v1089, %v5168
      %v5187 = vmul.f32 %v1091, %v5168
      %v5188 = vmul.f32 %v1092, %v5168
      %v5189 = vmul.f32 %v1093, %v5168
      %v5190 = vmul.f32 %v1095, %v5168
      %v5191 = vmul.f32 %v1096, %v5168
      %v5192 = vmul.f32 %v1097, %v5168
      %v5193 = vmul.f32 %v1099, %v5168
      %v5194 = vmul.f32 %v1100, %v5168
      %v5195 = vmul.f32 %v1101, %v5168
      %v5196 = vmul.f32 %v1103, %v5168
      %v5197 = vmul.f32 %v1104, %v5168
      %v5198 = vmul.f32 %v1105, %v5168
      %v5199 = vmul.f32 %v1107, %v5168
      %v5200 = vmul.f32 %v1108, %v5168
      %v5201 = vmul.f32 %v1109, %v5168
      %v5202 = vmul.f32 %v1111, %v5168
      %v5203 = vmul.f32 %v1112, %v5168
      %v5204 = vmul.f32 %v1113, %v5168
      %v5205 = vmul.f32 %v1115, %v5168
      %v5206 = vmul.f32 %v1116, %v5168
      %v5207 = vmul.f32 %v1117, %v5168
      %v5208 = vmul.f32 %v1119, %v5168
      %v5209 = vmul.f32 %v1120, %v5168
      %v5210 = vmul.f32 %v1121, %v5168
      %v5211 = vmul.f32 %v1123, %v5168
      %v5212 = vmul.f32 %v1124, %v5168
      %v5213 = vmul.f32 %v1125, %v5168
      %v5214 = vmul.f32 %v1127, %v5168
      %v5215 = vmul.f32 %v1128, %v5168
      %v5216 = vmul.f32 %v1129, %v5168
      %v5265 = vrot.slane %v5169, 3
      %v5266 = vrot.slane %v5170, 3
      %v5267 = vsel %vm1828, %v5265, %v5266
      %v5268 = vrot.slane %v5171, 3
      %v5269 = vsel %vm1828, %v5266, %v5268
      %v5270 = vrot.slane %v5172, 3
      %v5271 = vrot.slane %v5173, 3
      %v5272 = vsel %vm1828, %v5270, %v5271
      %v5273 = vrot.slane %v5174, 3
      %v5274 = vsel %vm1828, %v5271, %v5273
      %v5275 = vrot.slane %v5175, 3
      %v5276 = vrot.slane %v5176, 3
      %v5277 = vsel %vm1828, %v5275, %v5276
      %v5278 = vrot.slane %v5177, 3
      %v5279 = vsel %vm1828, %v5276, %v5278
      %v5280 = vrot.slane %v5178, 3
      %v5281 = vrot.slane %v5179, 3
      %v5282 = vsel %vm1828, %v5280, %v5281
      %v5283 = vrot.slane %v5180, 3
      %v5284 = vsel %vm1828, %v5281, %v5283
      %v5285 = vrot.slane %v5181, 3
      %v5286 = vrot.slane %v5182, 3
      %v5287 = vsel %vm1828, %v5285, %v5286
      %v5288 = vrot.slane %v5183, 3
      %v5289 = vsel %vm1828, %v5286, %v5288
      %v5290 = vrot.slane %v5184, 3
      %v5291 = vrot.slane %v5185, 3
      %v5292 = vsel %vm1828, %v5290, %v5291
      %v5293 = vrot.slane %v5186, 3
      %v5294 = vsel %vm1828, %v5291, %v5293
      %v5295 = vrot.slane %v5187, 3
      %v5296 = vrot.slane %v5188, 3
      %v5297 = vsel %vm1828, %v5295, %v5296
      %v5298 = vrot.slane %v5189, 3
      %v5299 = vsel %vm1828, %v5296, %v5298
      %v5300 = vrot.slane %v5190, 3
      %v5301 = vrot.slane %v5191, 3
      %v5302 = vsel %vm1828, %v5300, %v5301
      %v5303 = vrot.slane %v5192, 3
      %v5304 = vsel %vm1828, %v5301, %v5303
      %v5305 = vrot.slane %v5193, 3
      %v5306 = vrot.slane %v5194, 3
      %v5307 = vsel %vm1828, %v5305, %v5306
      %v5308 = vrot.slane %v5195, 3
      %v5309 = vsel %vm1828, %v5306, %v5308
      %v5310 = vrot.slane %v5196, 3
      %v5311 = vrot.slane %v5197, 3
      %v5312 = vsel %vm1828, %v5310, %v5311
      %v5313 = vrot.slane %v5198, 3
      %v5314 = vsel %vm1828, %v5311, %v5313
      %v5315 = vrot.slane %v5199, 3
      %v5316 = vrot.slane %v5200, 3
      %v5317 = vsel %vm1828, %v5315, %v5316
      %v5318 = vrot.slane %v5201, 3
      %v5319 = vsel %vm1828, %v5316, %v5318
      %v5320 = vrot.slane %v5202, 3
      %v5321 = vrot.slane %v5203, 3
      %v5322 = vsel %vm1828, %v5320, %v5321
      %v5323 = vrot.slane %v5204, 3
      %v5324 = vsel %vm1828, %v5321, %v5323
      %v5325 = vrot.slane %v5205, 3
      %v5326 = vrot.slane %v5206, 3
      %v5327 = vsel %vm1828, %v5325, %v5326
      %v5328 = vrot.slane %v5207, 3
      %v5329 = vsel %vm1828, %v5326, %v5328
      %v5330 = vrot.slane %v5208, 3
      %v5331 = vrot.slane %v5209, 3
      %v5332 = vsel %vm1828, %v5330, %v5331
      %v5333 = vrot.slane %v5210, 3
      %v5334 = vsel %vm1828, %v5331, %v5333
      %v5335 = vrot.slane %v5211, 3
      %v5336 = vrot.slane %v5212, 3
      %v5337 = vsel %vm1828, %v5335, %v5336
      %v5338 = vrot.slane %v5213, 3
      %v5339 = vsel %vm1828, %v5336, %v5338
      %v5340 = vrot.slane %v5214, 3
      %v5341 = vrot.slane %v5215, 3
      %v5342 = vsel %vm1828, %v5340, %v5341
      %v5343 = vrot.slane %v5216, 3
      %v5344 = vsel %vm1828, %v5341, %v5343
      %v5393 = vadd.f32 %v5116, %v5265
      %v5394 = vadd.f32 %v5117, %v5267
      %v5395 = vadd.f32 %v5118, %v5269
      %v5396 = vadd.f32 %v5119, %v5270
      %v5397 = vadd.f32 %v5120, %v5272
      %v5398 = vadd.f32 %v5121, %v5274
      %v5399 = vadd.f32 %v5122, %v5275
      %v5400 = vadd.f32 %v5123, %v5277
      %v5401 = vadd.f32 %v5124, %v5279
      %v5402 = vadd.f32 %v5125, %v5280
      %v5403 = vadd.f32 %v5126, %v5282
      %v5404 = vadd.f32 %v5127, %v5284
      %v5405 = vadd.f32 %v5128, %v5285
      %v5406 = vadd.f32 %v5129, %v5287
      %v5407 = vadd.f32 %v5130, %v5289
      %v5408 = vadd.f32 %v5131, %v5290
      %v5409 = vadd.f32 %v5132, %v5292
      %v5410 = vadd.f32 %v5133, %v5294
      %v5411 = vadd.f32 %v5134, %v5295
      %v5412 = vadd.f32 %v5135, %v5297
      %v5413 = vadd.f32 %v5136, %v5299
      %v5414 = vadd.f32 %v5137, %v5300
      %v5415 = vadd.f32 %v5138, %v5302
      %v5416 = vadd.f32 %v5139, %v5304
      %v5417 = vadd.f32 %v5140, %v5305
      %v5418 = vadd.f32 %v5141, %v5307
      %v5419 = vadd.f32 %v5142, %v5309
      %v5420 = vadd.f32 %v5143, %v5310
      %v5421 = vadd.f32 %v5144, %v5312
      %v5422 = vadd.f32 %v5145, %v5314
      %v5423 = vadd.f32 %v5146, %v5315
      %v5424 = vadd.f32 %v5147, %v5317
      %v5425 = vadd.f32 %v5148, %v5319
      %v5426 = vadd.f32 %v5149, %v5320
      %v5427 = vadd.f32 %v5150, %v5322
      %v5428 = vadd.f32 %v5151, %v5324
      %v5429 = vadd.f32 %v5152, %v5325
      %v5430 = vadd.f32 %v5153, %v5327
      %v5431 = vadd.f32 %v5154, %v5329
      %v5432 = vadd.f32 %v5155, %v5330
      %v5433 = vadd.f32 %v5156, %v5332
      %v5434 = vadd.f32 %v5157, %v5334
      %v5435 = vadd.f32 %v5158, %v5335
      %v5436 = vadd.f32 %v5159, %v5337
      %v5437 = vadd.f32 %v5160, %v5339
      %v5438 = vadd.f32 %v5161, %v5340
      %v5439 = vadd.f32 %v5162, %v5342
      %v5440 = vadd.f32 %v5163, %v5344
      %v5441 = vld [vmem:[%s4 + $0x13] sm:$0x1]
      %v5442 = vlaneseq
      %v5443 = vshrl.u32 %v5442, 7
      %v5444 = vsub.s32 0, %v5443
      %v5445 = vrot.slane %v5441, %v5444
      %v5446 = vmul.f32 %v1067, %v5445
      %v5447 = vmul.f32 %v1068, %v5445
      %v5448 = vmul.f32 %v1069, %v5445
      %v5449 = vmul.f32 %v1071, %v5445
      %v5450 = vmul.f32 %v1072, %v5445
      %v5451 = vmul.f32 %v1073, %v5445
      %v5452 = vmul.f32 %v1075, %v5445
      %v5453 = vmul.f32 %v1076, %v5445
      %v5454 = vmul.f32 %v1077, %v5445
      %v5455 = vmul.f32 %v1079, %v5445
      %v5456 = vmul.f32 %v1080, %v5445
      %v5457 = vmul.f32 %v1081, %v5445
      %v5458 = vmul.f32 %v1083, %v5445
      %v5459 = vmul.f32 %v1084, %v5445
      %v5460 = vmul.f32 %v1085, %v5445
      %v5461 = vmul.f32 %v1087, %v5445
      %v5462 = vmul.f32 %v1088, %v5445
      %v5463 = vmul.f32 %v1089, %v5445
      %v5464 = vmul.f32 %v1091, %v5445
      %v5465 = vmul.f32 %v1092, %v5445
      %v5466 = vmul.f32 %v1093, %v5445
      %v5467 = vmul.f32 %v1095, %v5445
      %v5468 = vmul.f32 %v1096, %v5445
      %v5469 = vmul.f32 %v1097, %v5445
      %v5470 = vmul.f32 %v1099, %v5445
      %v5471 = vmul.f32 %v1100, %v5445
      %v5472 = vmul.f32 %v1101, %v5445
      %v5473 = vmul.f32 %v1103, %v5445
      %v5474 = vmul.f32 %v1104, %v5445
      %v5475 = vmul.f32 %v1105, %v5445
      %v5476 = vmul.f32 %v1107, %v5445
      %v5477 = vmul.f32 %v1108, %v5445
      %v5478 = vmul.f32 %v1109, %v5445
      %v5479 = vmul.f32 %v1111, %v5445
      %v5480 = vmul.f32 %v1112, %v5445
      %v5481 = vmul.f32 %v1113, %v5445
      %v5482 = vmul.f32 %v1115, %v5445
      %v5483 = vmul.f32 %v1116, %v5445
      %v5484 = vmul.f32 %v1117, %v5445
      %v5485 = vmul.f32 %v1119, %v5445
      %v5486 = vmul.f32 %v1120, %v5445
      %v5487 = vmul.f32 %v1121, %v5445
      %v5488 = vmul.f32 %v1123, %v5445
      %v5489 = vmul.f32 %v1124, %v5445
      %v5490 = vmul.f32 %v1125, %v5445
      %v5491 = vmul.f32 %v1127, %v5445
      %v5492 = vmul.f32 %v1128, %v5445
      %v5493 = vmul.f32 %v1129, %v5445
      %v5542 = vrot.slane %v5446, 4
      %v5543 = vrot.slane %v5447, 4
      %v5544 = vsel %vm2106, %v5542, %v5543
      %v5545 = vrot.slane %v5448, 4
      %v5546 = vsel %vm2106, %v5543, %v5545
      %v5547 = vrot.slane %v5449, 4
      %v5548 = vrot.slane %v5450, 4
      %v5549 = vsel %vm2106, %v5547, %v5548
      %v5550 = vrot.slane %v5451, 4
      %v5551 = vsel %vm2106, %v5548, %v5550
      %v5552 = vrot.slane %v5452, 4
      %v5553 = vrot.slane %v5453, 4
      %v5554 = vsel %vm2106, %v5552, %v5553
      %v5555 = vrot.slane %v5454, 4
      %v5556 = vsel %vm2106, %v5553, %v5555
      %v5557 = vrot.slane %v5455, 4
      %v5558 = vrot.slane %v5456, 4
      %v5559 = vsel %vm2106, %v5557, %v5558
      %v5560 = vrot.slane %v5457, 4
      %v5561 = vsel %vm2106, %v5558, %v5560
      %v5562 = vrot.slane %v5458, 4
      %v5563 = vrot.slane %v5459, 4
      %v5564 = vsel %vm2106, %v5562, %v5563
      %v5565 = vrot.slane %v5460, 4
      %v5566 = vsel %vm2106, %v5563, %v5565
      %v5567 = vrot.slane %v5461, 4
      %v5568 = vrot.slane %v5462, 4
      %v5569 = vsel %vm2106, %v5567, %v5568
      %v5570 = vrot.slane %v5463, 4
      %v5571 = vsel %vm2106, %v5568, %v5570
      %v5572 = vrot.slane %v5464, 4
      %v5573 = vrot.slane %v5465, 4
      %v5574 = vsel %vm2106, %v5572, %v5573
      %v5575 = vrot.slane %v5466, 4
      %v5576 = vsel %vm2106, %v5573, %v5575
      %v5577 = vrot.slane %v5467, 4
      %v5578 = vrot.slane %v5468, 4
      %v5579 = vsel %vm2106, %v5577, %v5578
      %v5580 = vrot.slane %v5469, 4
      %v5581 = vsel %vm2106, %v5578, %v5580
      %v5582 = vrot.slane %v5470, 4
      %v5583 = vrot.slane %v5471, 4
      %v5584 = vsel %vm2106, %v5582, %v5583
      %v5585 = vrot.slane %v5472, 4
      %v5586 = vsel %vm2106, %v5583, %v5585
      %v5587 = vrot.slane %v5473, 4
      %v5588 = vrot.slane %v5474, 4
      %v5589 = vsel %vm2106, %v5587, %v5588
      %v5590 = vrot.slane %v5475, 4
      %v5591 = vsel %vm2106, %v5588, %v5590
      %v5592 = vrot.slane %v5476, 4
      %v5593 = vrot.slane %v5477, 4
      %v5594 = vsel %vm2106, %v5592, %v5593
      %v5595 = vrot.slane %v5478, 4
      %v5596 = vsel %vm2106, %v5593, %v5595
      %v5597 = vrot.slane %v5479, 4
      %v5598 = vrot.slane %v5480, 4
      %v5599 = vsel %vm2106, %v5597, %v5598
      %v5600 = vrot.slane %v5481, 4
      %v5601 = vsel %vm2106, %v5598, %v5600
      %v5602 = vrot.slane %v5482, 4
      %v5603 = vrot.slane %v5483, 4
      %v5604 = vsel %vm2106, %v5602, %v5603
      %v5605 = vrot.slane %v5484, 4
      %v5606 = vsel %vm2106, %v5603, %v5605
      %v5607 = vrot.slane %v5485, 4
      %v5608 = vrot.slane %v5486, 4
      %v5609 = vsel %vm2106, %v5607, %v5608
      %v5610 = vrot.slane %v5487, 4
      %v5611 = vsel %vm2106, %v5608, %v5610
      %v5612 = vrot.slane %v5488, 4
      %v5613 = vrot.slane %v5489, 4
      %v5614 = vsel %vm2106, %v5612, %v5613
      %v5615 = vrot.slane %v5490, 4
      %v5616 = vsel %vm2106, %v5613, %v5615
      %v5617 = vrot.slane %v5491, 4
      %v5618 = vrot.slane %v5492, 4
      %v5619 = vsel %vm2106, %v5617, %v5618
      %v5620 = vrot.slane %v5493, 4
      %v5621 = vsel %vm2106, %v5618, %v5620
      %v5670 = vadd.f32 %v5393, %v5542
      %v5671 = vadd.f32 %v5394, %v5544
      %v5672 = vadd.f32 %v5395, %v5546
      %v5673 = vadd.f32 %v5396, %v5547
      %v5674 = vadd.f32 %v5397, %v5549
      %v5675 = vadd.f32 %v5398, %v5551
      %v5676 = vadd.f32 %v5399, %v5552
      %v5677 = vadd.f32 %v5400, %v5554
      %v5678 = vadd.f32 %v5401, %v5556
      %v5679 = vadd.f32 %v5402, %v5557
      %v5680 = vadd.f32 %v5403, %v5559
      %v5681 = vadd.f32 %v5404, %v5561
      %v5682 = vadd.f32 %v5405, %v5562
      %v5683 = vadd.f32 %v5406, %v5564
      %v5684 = vadd.f32 %v5407, %v5566
      %v5685 = vadd.f32 %v5408, %v5567
      %v5686 = vadd.f32 %v5409, %v5569
      %v5687 = vadd.f32 %v5410, %v5571
      %v5688 = vadd.f32 %v5411, %v5572
      %v5689 = vadd.f32 %v5412, %v5574
      %v5690 = vadd.f32 %v5413, %v5576
      %v5691 = vadd.f32 %v5414, %v5577
      %v5692 = vadd.f32 %v5415, %v5579
      %v5693 = vadd.f32 %v5416, %v5581
      %v5694 = vadd.f32 %v5417, %v5582
      %v5695 = vadd.f32 %v5418, %v5584
      %v5696 = vadd.f32 %v5419, %v5586
      %v5697 = vadd.f32 %v5420, %v5587
      %v5698 = vadd.f32 %v5421, %v5589
      %v5699 = vadd.f32 %v5422, %v5591
      %v5700 = vadd.f32 %v5423, %v5592
      %v5701 = vadd.f32 %v5424, %v5594
      %v5702 = vadd.f32 %v5425, %v5596
      %v5703 = vadd.f32 %v5426, %v5597
      %v5704 = vadd.f32 %v5427, %v5599
      %v5705 = vadd.f32 %v5428, %v5601
      %v5706 = vadd.f32 %v5429, %v5602
      %v5707 = vadd.f32 %v5430, %v5604
      %v5708 = vadd.f32 %v5431, %v5606
      %v5709 = vadd.f32 %v5432, %v5607
      %v5710 = vadd.f32 %v5433, %v5609
      %v5711 = vadd.f32 %v5434, %v5611
      %v5712 = vadd.f32 %v5435, %v5612
      %v5713 = vadd.f32 %v5436, %v5614
      %v5714 = vadd.f32 %v5437, %v5616
      %v5715 = vadd.f32 %v5438, %v5617
      %v5716 = vadd.f32 %v5439, %v5619
      %v5717 = vadd.f32 %v5440, %v5621
      %v5718 = vld [vmem:[%s4 + $0x14] sm:$0x1]
      %v5719 = vlaneseq
      %v5720 = vshrl.u32 %v5719, 7
      %v5721 = vsub.s32 0, %v5720
      %v5722 = vrot.slane %v5718, %v5721
      %v5723 = vmul.f32 %v1070, %v5722
      %v5724 = vmul.f32 %v1071, %v5722
      %v5725 = vmul.f32 %v1072, %v5722
      %v5726 = vmul.f32 %v1074, %v5722
      %v5727 = vmul.f32 %v1075, %v5722
      %v5728 = vmul.f32 %v1076, %v5722
      %v5729 = vmul.f32 %v1078, %v5722
      %v5730 = vmul.f32 %v1079, %v5722
      %v5731 = vmul.f32 %v1080, %v5722
      %v5732 = vmul.f32 %v1082, %v5722
      %v5733 = vmul.f32 %v1083, %v5722
      %v5734 = vmul.f32 %v1084, %v5722
      %v5735 = vmul.f32 %v1086, %v5722
      %v5736 = vmul.f32 %v1087, %v5722
      %v5737 = vmul.f32 %v1088, %v5722
      %v5738 = vmul.f32 %v1090, %v5722
      %v5739 = vmul.f32 %v1091, %v5722
      %v5740 = vmul.f32 %v1092, %v5722
      %v5741 = vmul.f32 %v1094, %v5722
      %v5742 = vmul.f32 %v1095, %v5722
      %v5743 = vmul.f32 %v1096, %v5722
      %v5744 = vmul.f32 %v1098, %v5722
      %v5745 = vmul.f32 %v1099, %v5722
      %v5746 = vmul.f32 %v1100, %v5722
      %v5747 = vmul.f32 %v1102, %v5722
      %v5748 = vmul.f32 %v1103, %v5722
      %v5749 = vmul.f32 %v1104, %v5722
      %v5750 = vmul.f32 %v1106, %v5722
      %v5751 = vmul.f32 %v1107, %v5722
      %v5752 = vmul.f32 %v1108, %v5722
      %v5753 = vmul.f32 %v1110, %v5722
      %v5754 = vmul.f32 %v1111, %v5722
      %v5755 = vmul.f32 %v1112, %v5722
      %v5756 = vmul.f32 %v1114, %v5722
      %v5757 = vmul.f32 %v1115, %v5722
      %v5758 = vmul.f32 %v1116, %v5722
      %v5759 = vmul.f32 %v1118, %v5722
      %v5760 = vmul.f32 %v1119, %v5722
      %v5761 = vmul.f32 %v1120, %v5722
      %v5762 = vmul.f32 %v1122, %v5722
      %v5763 = vmul.f32 %v1123, %v5722
      %v5764 = vmul.f32 %v1124, %v5722
      %v5765 = vmul.f32 %v1126, %v5722
      %v5766 = vmul.f32 %v1127, %v5722
      %v5767 = vmul.f32 %v1128, %v5722
      %v5768 = vmul.f32 %v1130, %v5722
      %v5769 = vmul.f32 %v1131, %v5722
      %v5770 = vmul.f32 %v1132, %v5722
      %v5771 = vadd.f32 %v5670, %v5723
      %v5772 = vadd.f32 %v5671, %v5724
      %v5773 = vadd.f32 %v5672, %v5725
      %v5774 = vadd.f32 %v5673, %v5726
      %v5775 = vadd.f32 %v5674, %v5727
      %v5776 = vadd.f32 %v5675, %v5728
      %v5777 = vadd.f32 %v5676, %v5729
      %v5778 = vadd.f32 %v5677, %v5730
      %v5779 = vadd.f32 %v5678, %v5731
      %v5780 = vadd.f32 %v5679, %v5732
      %v5781 = vadd.f32 %v5680, %v5733
      %v5782 = vadd.f32 %v5681, %v5734
      %v5783 = vadd.f32 %v5682, %v5735
      %v5784 = vadd.f32 %v5683, %v5736
      %v5785 = vadd.f32 %v5684, %v5737
      %v5786 = vadd.f32 %v5685, %v5738
      %v5787 = vadd.f32 %v5686, %v5739
      %v5788 = vadd.f32 %v5687, %v5740
      %v5789 = vadd.f32 %v5688, %v5741
      %v5790 = vadd.f32 %v5689, %v5742
      %v5791 = vadd.f32 %v5690, %v5743
      %v5792 = vadd.f32 %v5691, %v5744
      %v5793 = vadd.f32 %v5692, %v5745
      %v5794 = vadd.f32 %v5693, %v5746
      %v5795 = vadd.f32 %v5694, %v5747
      %v5796 = vadd.f32 %v5695, %v5748
      %v5797 = vadd.f32 %v5696, %v5749
      %v5798 = vadd.f32 %v5697, %v5750
      %v5799 = vadd.f32 %v5698, %v5751
      %v5800 = vadd.f32 %v5699, %v5752
      %v5801 = vadd.f32 %v5700, %v5753
      %v5802 = vadd.f32 %v5701, %v5754
      %v5803 = vadd.f32 %v5702, %v5755
      %v5804 = vadd.f32 %v5703, %v5756
      %v5805 = vadd.f32 %v5704, %v5757
      %v5806 = vadd.f32 %v5705, %v5758
      %v5807 = vadd.f32 %v5706, %v5759
      %v5808 = vadd.f32 %v5707, %v5760
      %v5809 = vadd.f32 %v5708, %v5761
      %v5810 = vadd.f32 %v5709, %v5762
      %v5811 = vadd.f32 %v5710, %v5763
      %v5812 = vadd.f32 %v5711, %v5764
      %v5813 = vadd.f32 %v5712, %v5765
      %v5814 = vadd.f32 %v5713, %v5766
      %v5815 = vadd.f32 %v5714, %v5767
      %v5816 = vadd.f32 %v5715, %v5768
      %v5817 = vadd.f32 %v5716, %v5769
      %v5818 = vadd.f32 %v5717, %v5770
      %v5819 = vld [vmem:[%s4 + $0x15] sm:$0x1]
      %v5820 = vlaneseq
      %v5821 = vshrl.u32 %v5820, 7
      %v5822 = vsub.s32 0, %v5821
      %v5823 = vrot.slane %v5819, %v5822
      %v5824 = vmul.f32 %v1070, %v5823
      %v5825 = vmul.f32 %v1071, %v5823
      %v5826 = vmul.f32 %v1072, %v5823
      %v5827 = vmul.f32 %v1074, %v5823
      %v5828 = vmul.f32 %v1075, %v5823
      %v5829 = vmul.f32 %v1076, %v5823
      %v5830 = vmul.f32 %v1078, %v5823
      %v5831 = vmul.f32 %v1079, %v5823
      %v5832 = vmul.f32 %v1080, %v5823
      %v5833 = vmul.f32 %v1082, %v5823
      %v5834 = vmul.f32 %v1083, %v5823
      %v5835 = vmul.f32 %v1084, %v5823
      %v5836 = vmul.f32 %v1086, %v5823
      %v5837 = vmul.f32 %v1087, %v5823
      %v5838 = vmul.f32 %v1088, %v5823
      %v5839 = vmul.f32 %v1090, %v5823
      %v5840 = vmul.f32 %v1091, %v5823
      %v5841 = vmul.f32 %v1092, %v5823
      %v5842 = vmul.f32 %v1094, %v5823
      %v5843 = vmul.f32 %v1095, %v5823
      %v5844 = vmul.f32 %v1096, %v5823
      %v5845 = vmul.f32 %v1098, %v5823
      %v5846 = vmul.f32 %v1099, %v5823
      %v5847 = vmul.f32 %v1100, %v5823
      %v5848 = vmul.f32 %v1102, %v5823
      %v5849 = vmul.f32 %v1103, %v5823
      %v5850 = vmul.f32 %v1104, %v5823
      %v5851 = vmul.f32 %v1106, %v5823
      %v5852 = vmul.f32 %v1107, %v5823
      %v5853 = vmul.f32 %v1108, %v5823
      %v5854 = vmul.f32 %v1110, %v5823
      %v5855 = vmul.f32 %v1111, %v5823
      %v5856 = vmul.f32 %v1112, %v5823
      %v5857 = vmul.f32 %v1114, %v5823
      %v5858 = vmul.f32 %v1115, %v5823
      %v5859 = vmul.f32 %v1116, %v5823
      %v5860 = vmul.f32 %v1118, %v5823
      %v5861 = vmul.f32 %v1119, %v5823
      %v5862 = vmul.f32 %v1120, %v5823
      %v5863 = vmul.f32 %v1122, %v5823
      %v5864 = vmul.f32 %v1123, %v5823
      %v5865 = vmul.f32 %v1124, %v5823
      %v5866 = vmul.f32 %v1126, %v5823
      %v5867 = vmul.f32 %v1127, %v5823
      %v5868 = vmul.f32 %v1128, %v5823
      %v5869 = vmul.f32 %v1130, %v5823
      %v5870 = vmul.f32 %v1131, %v5823
      %v5871 = vmul.f32 %v1132, %v5823
      %v5920 = vrot.slane %v5824, 1
      %v5921 = vrot.slane %v5825, 1
      %v5922 = vsel %vm1336, %v5920, %v5921
      %v5923 = vrot.slane %v5826, 1
      %v5924 = vsel %vm1336, %v5921, %v5923
      %v5925 = vrot.slane %v5827, 1
      %v5926 = vrot.slane %v5828, 1
      %v5927 = vsel %vm1336, %v5925, %v5926
      %v5928 = vrot.slane %v5829, 1
      %v5929 = vsel %vm1336, %v5926, %v5928
      %v5930 = vrot.slane %v5830, 1
      %v5931 = vrot.slane %v5831, 1
      %v5932 = vsel %vm1336, %v5930, %v5931
      %v5933 = vrot.slane %v5832, 1
      %v5934 = vsel %vm1336, %v5931, %v5933
      %v5935 = vrot.slane %v5833, 1
      %v5936 = vrot.slane %v5834, 1
      %v5937 = vsel %vm1336, %v5935, %v5936
      %v5938 = vrot.slane %v5835, 1
      %v5939 = vsel %vm1336, %v5936, %v5938
      %v5940 = vrot.slane %v5836, 1
      %v5941 = vrot.slane %v5837, 1
      %v5942 = vsel %vm1336, %v5940, %v5941
      %v5943 = vrot.slane %v5838, 1
      %v5944 = vsel %vm1336, %v5941, %v5943
      %v5945 = vrot.slane %v5839, 1
      %v5946 = vrot.slane %v5840, 1
      %v5947 = vsel %vm1336, %v5945, %v5946
      %v5948 = vrot.slane %v5841, 1
      %v5949 = vsel %vm1336, %v5946, %v5948
      %v5950 = vrot.slane %v5842, 1
      %v5951 = vrot.slane %v5843, 1
      %v5952 = vsel %vm1336, %v5950, %v5951
      %v5953 = vrot.slane %v5844, 1
      %v5954 = vsel %vm1336, %v5951, %v5953
      %v5955 = vrot.slane %v5845, 1
      %v5956 = vrot.slane %v5846, 1
      %v5957 = vsel %vm1336, %v5955, %v5956
      %v5958 = vrot.slane %v5847, 1
      %v5959 = vsel %vm1336, %v5956, %v5958
      %v5960 = vrot.slane %v5848, 1
      %v5961 = vrot.slane %v5849, 1
      %v5962 = vsel %vm1336, %v5960, %v5961
      %v5963 = vrot.slane %v5850, 1
      %v5964 = vsel %vm1336, %v5961, %v5963
      %v5965 = vrot.slane %v5851, 1
      %v5966 = vrot.slane %v5852, 1
      %v5967 = vsel %vm1336, %v5965, %v5966
      %v5968 = vrot.slane %v5853, 1
      %v5969 = vsel %vm1336, %v5966, %v5968
      %v5970 = vrot.slane %v5854, 1
      %v5971 = vrot.slane %v5855, 1
      %v5972 = vsel %vm1336, %v5970, %v5971
      %v5973 = vrot.slane %v5856, 1
      %v5974 = vsel %vm1336, %v5971, %v5973
      %v5975 = vrot.slane %v5857, 1
      %v5976 = vrot.slane %v5858, 1
      %v5977 = vsel %vm1336, %v5975, %v5976
      %v5978 = vrot.slane %v5859, 1
      %v5979 = vsel %vm1336, %v5976, %v5978
      %v5980 = vrot.slane %v5860, 1
      %v5981 = vrot.slane %v5861, 1
      %v5982 = vsel %vm1336, %v5980, %v5981
      %v5983 = vrot.slane %v5862, 1
      %v5984 = vsel %vm1336, %v5981, %v5983
      %v5985 = vrot.slane %v5863, 1
      %v5986 = vrot.slane %v5864, 1
      %v5987 = vsel %vm1336, %v5985, %v5986
      %v5988 = vrot.slane %v5865, 1
      %v5989 = vsel %vm1336, %v5986, %v5988
      %v5990 = vrot.slane %v5866, 1
      %v5991 = vrot.slane %v5867, 1
      %v5992 = vsel %vm1336, %v5990, %v5991
      %v5993 = vrot.slane %v5868, 1
      %v5994 = vsel %vm1336, %v5991, %v5993
      %v5995 = vrot.slane %v5869, 1
      %v5996 = vrot.slane %v5870, 1
      %v5997 = vsel %vm1336, %v5995, %v5996
      %v5998 = vrot.slane %v5871, 1
      %v5999 = vsel %vm1336, %v5996, %v5998
      %v6048 = vadd.f32 %v5771, %v5922
      %v6049 = vadd.f32 %v5772, %v5924
      %v6050 = vadd.f32 %v5773, %v5923
      %v6051 = vadd.f32 %v5774, %v5927
      %v6052 = vadd.f32 %v5775, %v5929
      %v6053 = vadd.f32 %v5776, %v5928
      %v6054 = vadd.f32 %v5777, %v5932
      %v6055 = vadd.f32 %v5778, %v5934
      %v6056 = vadd.f32 %v5779, %v5933
      %v6057 = vadd.f32 %v5780, %v5937
      %v6058 = vadd.f32 %v5781, %v5939
      %v6059 = vadd.f32 %v5782, %v5938
      %v6060 = vadd.f32 %v5783, %v5942
      %v6061 = vadd.f32 %v5784, %v5944
      %v6062 = vadd.f32 %v5785, %v5943
      %v6063 = vadd.f32 %v5786, %v5947
      %v6064 = vadd.f32 %v5787, %v5949
      %v6065 = vadd.f32 %v5788, %v5948
      %v6066 = vadd.f32 %v5789, %v5952
      %v6067 = vadd.f32 %v5790, %v5954
      %v6068 = vadd.f32 %v5791, %v5953
      %v6069 = vadd.f32 %v5792, %v5957
      %v6070 = vadd.f32 %v5793, %v5959
      %v6071 = vadd.f32 %v5794, %v5958
      %v6072 = vadd.f32 %v5795, %v5962
      %v6073 = vadd.f32 %v5796, %v5964
      %v6074 = vadd.f32 %v5797, %v5963
      %v6075 = vadd.f32 %v5798, %v5967
      %v6076 = vadd.f32 %v5799, %v5969
      %v6077 = vadd.f32 %v5800, %v5968
      %v6078 = vadd.f32 %v5801, %v5972
      %v6079 = vadd.f32 %v5802, %v5974
      %v6080 = vadd.f32 %v5803, %v5973
      %v6081 = vadd.f32 %v5804, %v5977
      %v6082 = vadd.f32 %v5805, %v5979
      %v6083 = vadd.f32 %v5806, %v5978
      %v6084 = vadd.f32 %v5807, %v5982
      %v6085 = vadd.f32 %v5808, %v5984
      %v6086 = vadd.f32 %v5809, %v5983
      %v6087 = vadd.f32 %v5810, %v5987
      %v6088 = vadd.f32 %v5811, %v5989
      %v6089 = vadd.f32 %v5812, %v5988
      %v6090 = vadd.f32 %v5813, %v5992
      %v6091 = vadd.f32 %v5814, %v5994
      %v6092 = vadd.f32 %v5815, %v5993
      %v6093 = vadd.f32 %v5816, %v5997
      %v6094 = vadd.f32 %v5817, %v5999
      %v6095 = vadd.f32 %v5818, %v5998
      %v6096 = vld [vmem:[%s4 + $0x16] sm:$0x1]
      %v6097 = vlaneseq
      %v6098 = vshrl.u32 %v6097, 7
      %v6099 = vsub.s32 0, %v6098
      %v6100 = vrot.slane %v6096, %v6099
      %v6101 = vmul.f32 %v1071, %v6100
      %v6102 = vmul.f32 %v1072, %v6100
      %v6103 = vmul.f32 %v1075, %v6100
      %v6104 = vmul.f32 %v1076, %v6100
      %v6105 = vmul.f32 %v1079, %v6100
      %v6106 = vmul.f32 %v1080, %v6100
      %v6107 = vmul.f32 %v1083, %v6100
      %v6108 = vmul.f32 %v1084, %v6100
      %v6109 = vmul.f32 %v1087, %v6100
      %v6110 = vmul.f32 %v1088, %v6100
      %v6111 = vmul.f32 %v1091, %v6100
      %v6112 = vmul.f32 %v1092, %v6100
      %v6113 = vmul.f32 %v1095, %v6100
      %v6114 = vmul.f32 %v1096, %v6100
      %v6115 = vmul.f32 %v1099, %v6100
      %v6116 = vmul.f32 %v1100, %v6100
      %v6117 = vmul.f32 %v1103, %v6100
      %v6118 = vmul.f32 %v1104, %v6100
      %v6119 = vmul.f32 %v1107, %v6100
      %v6120 = vmul.f32 %v1108, %v6100
      %v6121 = vmul.f32 %v1111, %v6100
      %v6122 = vmul.f32 %v1112, %v6100
      %v6123 = vmul.f32 %v1115, %v6100
      %v6124 = vmul.f32 %v1116, %v6100
      %v6125 = vmul.f32 %v1119, %v6100
      %v6126 = vmul.f32 %v1120, %v6100
      %v6127 = vmul.f32 %v1123, %v6100
      %v6128 = vmul.f32 %v1124, %v6100
      %v6129 = vmul.f32 %v1127, %v6100
      %v6130 = vmul.f32 %v1128, %v6100
      %v6131 = vmul.f32 %v1131, %v6100
      %v6132 = vmul.f32 %v1132, %v6100
      %v6165 = vrot.slane %v6101, 2
      %v6166 = vrot.slane %v6102, 2
      %v6167 = vsel %vm1582, %v6165, %v6166
      %v6168 = vrot.slane %v6103, 2
      %v6169 = vrot.slane %v6104, 2
      %v6170 = vsel %vm1582, %v6168, %v6169
      %v6171 = vrot.slane %v6105, 2
      %v6172 = vrot.slane %v6106, 2
      %v6173 = vsel %vm1582, %v6171, %v6172
      %v6174 = vrot.slane %v6107, 2
      %v6175 = vrot.slane %v6108, 2
      %v6176 = vsel %vm1582, %v6174, %v6175
      %v6177 = vrot.slane %v6109, 2
      %v6178 = vrot.slane %v6110, 2
      %v6179 = vsel %vm1582, %v6177, %v6178
      %v6180 = vrot.slane %v6111, 2
      %v6181 = vrot.slane %v6112, 2
      %v6182 = vsel %vm1582, %v6180, %v6181
      %v6183 = vrot.slane %v6113, 2
      %v6184 = vrot.slane %v6114, 2
      %v6185 = vsel %vm1582, %v6183, %v6184
      %v6186 = vrot.slane %v6115, 2
      %v6187 = vrot.slane %v6116, 2
      %v6188 = vsel %vm1582, %v6186, %v6187
      %v6189 = vrot.slane %v6117, 2
      %v6190 = vrot.slane %v6118, 2
      %v6191 = vsel %vm1582, %v6189, %v6190
      %v6192 = vrot.slane %v6119, 2
      %v6193 = vrot.slane %v6120, 2
      %v6194 = vsel %vm1582, %v6192, %v6193
      %v6195 = vrot.slane %v6121, 2
      %v6196 = vrot.slane %v6122, 2
      %v6197 = vsel %vm1582, %v6195, %v6196
      %v6198 = vrot.slane %v6123, 2
      %v6199 = vrot.slane %v6124, 2
      %v6200 = vsel %vm1582, %v6198, %v6199
      %v6201 = vrot.slane %v6125, 2
      %v6202 = vrot.slane %v6126, 2
      %v6203 = vsel %vm1582, %v6201, %v6202
      %v6204 = vrot.slane %v6127, 2
      %v6205 = vrot.slane %v6128, 2
      %v6206 = vsel %vm1582, %v6204, %v6205
      %v6207 = vrot.slane %v6129, 2
      %v6208 = vrot.slane %v6130, 2
      %v6209 = vsel %vm1582, %v6207, %v6208
      %v6210 = vrot.slane %v6131, 2
      %v6211 = vrot.slane %v6132, 2
      %v6212 = vsel %vm1582, %v6210, %v6211
      %v6261 = vadd.f32 %v6048, %v6165
      %v6262 = vadd.f32 %v6049, %v6167
      %v6263 = vadd.f32 %v6050, %v6166
      %v6264 = vadd.f32 %v6051, %v6168
      %v6265 = vadd.f32 %v6052, %v6170
      %v6266 = vadd.f32 %v6053, %v6169
      %v6267 = vadd.f32 %v6054, %v6171
      %v6268 = vadd.f32 %v6055, %v6173
      %v6269 = vadd.f32 %v6056, %v6172
      %v6270 = vadd.f32 %v6057, %v6174
      %v6271 = vadd.f32 %v6058, %v6176
      %v6272 = vadd.f32 %v6059, %v6175
      %v6273 = vadd.f32 %v6060, %v6177
      %v6274 = vadd.f32 %v6061, %v6179
      %v6275 = vadd.f32 %v6062, %v6178
      %v6276 = vadd.f32 %v6063, %v6180
      %v6277 = vadd.f32 %v6064, %v6182
      %v6278 = vadd.f32 %v6065, %v6181
      %v6279 = vadd.f32 %v6066, %v6183
      %v6280 = vadd.f32 %v6067, %v6185
      %v6281 = vadd.f32 %v6068, %v6184
      %v6282 = vadd.f32 %v6069, %v6186
      %v6283 = vadd.f32 %v6070, %v6188
      %v6284 = vadd.f32 %v6071, %v6187
      %v6285 = vadd.f32 %v6072, %v6189
      %v6286 = vadd.f32 %v6073, %v6191
      %v6287 = vadd.f32 %v6074, %v6190
      %v6288 = vadd.f32 %v6075, %v6192
      %v6289 = vadd.f32 %v6076, %v6194
      %v6290 = vadd.f32 %v6077, %v6193
      %v6291 = vadd.f32 %v6078, %v6195
      %v6292 = vadd.f32 %v6079, %v6197
      %v6293 = vadd.f32 %v6080, %v6196
      %v6294 = vadd.f32 %v6081, %v6198
      %v6295 = vadd.f32 %v6082, %v6200
      %v6296 = vadd.f32 %v6083, %v6199
      %v6297 = vadd.f32 %v6084, %v6201
      %v6298 = vadd.f32 %v6085, %v6203
      %v6299 = vadd.f32 %v6086, %v6202
      %v6300 = vadd.f32 %v6087, %v6204
      %v6301 = vadd.f32 %v6088, %v6206
      %v6302 = vadd.f32 %v6089, %v6205
      %v6303 = vadd.f32 %v6090, %v6207
      %v6304 = vadd.f32 %v6091, %v6209
      %v6305 = vadd.f32 %v6092, %v6208
      %v6306 = vadd.f32 %v6093, %v6210
      %v6307 = vadd.f32 %v6094, %v6212
      %v6308 = vadd.f32 %v6095, %v6211
      %v6309 = vld [vmem:[%s4 + $0x17] sm:$0x1]
      %v6310 = vlaneseq
      %v6311 = vshrl.u32 %v6310, 7
      %v6312 = vsub.s32 0, %v6311
      %v6313 = vrot.slane %v6309, %v6312
      %v6314 = vmul.f32 %v1071, %v6313
      %v6315 = vmul.f32 %v1072, %v6313
      %v6316 = vmul.f32 %v1073, %v6313
      %v6317 = vmul.f32 %v1075, %v6313
      %v6318 = vmul.f32 %v1076, %v6313
      %v6319 = vmul.f32 %v1077, %v6313
      %v6320 = vmul.f32 %v1079, %v6313
      %v6321 = vmul.f32 %v1080, %v6313
      %v6322 = vmul.f32 %v1081, %v6313
      %v6323 = vmul.f32 %v1083, %v6313
      %v6324 = vmul.f32 %v1084, %v6313
      %v6325 = vmul.f32 %v1085, %v6313
      %v6326 = vmul.f32 %v1087, %v6313
      %v6327 = vmul.f32 %v1088, %v6313
      %v6328 = vmul.f32 %v1089, %v6313
      %v6329 = vmul.f32 %v1091, %v6313
      %v6330 = vmul.f32 %v1092, %v6313
      %v6331 = vmul.f32 %v1093, %v6313
      %v6332 = vmul.f32 %v1095, %v6313
      %v6333 = vmul.f32 %v1096, %v6313
      %v6334 = vmul.f32 %v1097, %v6313
      %v6335 = vmul.f32 %v1099, %v6313
      %v6336 = vmul.f32 %v1100, %v6313
      %v6337 = vmul.f32 %v1101, %v6313
      %v6338 = vmul.f32 %v1103, %v6313
      %v6339 = vmul.f32 %v1104, %v6313
      %v6340 = vmul.f32 %v1105, %v6313
      %v6341 = vmul.f32 %v1107, %v6313
      %v6342 = vmul.f32 %v1108, %v6313
      %v6343 = vmul.f32 %v1109, %v6313
      %v6344 = vmul.f32 %v1111, %v6313
      %v6345 = vmul.f32 %v1112, %v6313
      %v6346 = vmul.f32 %v1113, %v6313
      %v6347 = vmul.f32 %v1115, %v6313
      %v6348 = vmul.f32 %v1116, %v6313
      %v6349 = vmul.f32 %v1117, %v6313
      %v6350 = vmul.f32 %v1119, %v6313
      %v6351 = vmul.f32 %v1120, %v6313
      %v6352 = vmul.f32 %v1121, %v6313
      %v6353 = vmul.f32 %v1123, %v6313
      %v6354 = vmul.f32 %v1124, %v6313
      %v6355 = vmul.f32 %v1125, %v6313
      %v6356 = vmul.f32 %v1127, %v6313
      %v6357 = vmul.f32 %v1128, %v6313
      %v6358 = vmul.f32 %v1129, %v6313
      %v6359 = vmul.f32 %v1131, %v6313
      %v6360 = vmul.f32 %v1132, %v6313
      %v6361 = vmul.f32 %v1133, %v6313
      %v6410 = vrot.slane %v6314, 3
      %v6411 = vrot.slane %v6315, 3
      %v6412 = vsel %vm1828, %v6410, %v6411
      %v6413 = vrot.slane %v6316, 3
      %v6414 = vsel %vm1828, %v6411, %v6413
      %v6415 = vrot.slane %v6317, 3
      %v6416 = vrot.slane %v6318, 3
      %v6417 = vsel %vm1828, %v6415, %v6416
      %v6418 = vrot.slane %v6319, 3
      %v6419 = vsel %vm1828, %v6416, %v6418
      %v6420 = vrot.slane %v6320, 3
      %v6421 = vrot.slane %v6321, 3
      %v6422 = vsel %vm1828, %v6420, %v6421
      %v6423 = vrot.slane %v6322, 3
      %v6424 = vsel %vm1828, %v6421, %v6423
      %v6425 = vrot.slane %v6323, 3
      %v6426 = vrot.slane %v6324, 3
      %v6427 = vsel %vm1828, %v6425, %v6426
      %v6428 = vrot.slane %v6325, 3
      %v6429 = vsel %vm1828, %v6426, %v6428
      %v6430 = vrot.slane %v6326, 3
      %v6431 = vrot.slane %v6327, 3
      %v6432 = vsel %vm1828, %v6430, %v6431
      %v6433 = vrot.slane %v6328, 3
      %v6434 = vsel %vm1828, %v6431, %v6433
      %v6435 = vrot.slane %v6329, 3
      %v6436 = vrot.slane %v6330, 3
      %v6437 = vsel %vm1828, %v6435, %v6436
      %v6438 = vrot.slane %v6331, 3
      %v6439 = vsel %vm1828, %v6436, %v6438
      %v6440 = vrot.slane %v6332, 3
      %v6441 = vrot.slane %v6333, 3
      %v6442 = vsel %vm1828, %v6440, %v6441
      %v6443 = vrot.slane %v6334, 3
      %v6444 = vsel %vm1828, %v6441, %v6443
      %v6445 = vrot.slane %v6335, 3
      %v6446 = vrot.slane %v6336, 3
      %v6447 = vsel %vm1828, %v6445, %v6446
      %v6448 = vrot.slane %v6337, 3
      %v6449 = vsel %vm1828, %v6446, %v6448
      %v6450 = vrot.slane %v6338, 3
      %v6451 = vrot.slane %v6339, 3
      %v6452 = vsel %vm1828, %v6450, %v6451
      %v6453 = vrot.slane %v6340, 3
      %v6454 = vsel %vm1828, %v6451, %v6453
      %v6455 = vrot.slane %v6341, 3
      %v6456 = vrot.slane %v6342, 3
      %v6457 = vsel %vm1828, %v6455, %v6456
      %v6458 = vrot.slane %v6343, 3
      %v6459 = vsel %vm1828, %v6456, %v6458
      %v6460 = vrot.slane %v6344, 3
      %v6461 = vrot.slane %v6345, 3
      %v6462 = vsel %vm1828, %v6460, %v6461
      %v6463 = vrot.slane %v6346, 3
      %v6464 = vsel %vm1828, %v6461, %v6463
      %v6465 = vrot.slane %v6347, 3
      %v6466 = vrot.slane %v6348, 3
      %v6467 = vsel %vm1828, %v6465, %v6466
      %v6468 = vrot.slane %v6349, 3
      %v6469 = vsel %vm1828, %v6466, %v6468
      %v6470 = vrot.slane %v6350, 3
      %v6471 = vrot.slane %v6351, 3
      %v6472 = vsel %vm1828, %v6470, %v6471
      %v6473 = vrot.slane %v6352, 3
      %v6474 = vsel %vm1828, %v6471, %v6473
      %v6475 = vrot.slane %v6353, 3
      %v6476 = vrot.slane %v6354, 3
      %v6477 = vsel %vm1828, %v6475, %v6476
      %v6478 = vrot.slane %v6355, 3
      %v6479 = vsel %vm1828, %v6476, %v6478
      %v6480 = vrot.slane %v6356, 3
      %v6481 = vrot.slane %v6357, 3
      %v6482 = vsel %vm1828, %v6480, %v6481
      %v6483 = vrot.slane %v6358, 3
      %v6484 = vsel %vm1828, %v6481, %v6483
      %v6485 = vrot.slane %v6359, 3
      %v6486 = vrot.slane %v6360, 3
      %v6487 = vsel %vm1828, %v6485, %v6486
      %v6488 = vrot.slane %v6361, 3
      %v6489 = vsel %vm1828, %v6486, %v6488
      %v6538 = vadd.f32 %v6261, %v6410
      %v6539 = vadd.f32 %v6262, %v6412
      %v6540 = vadd.f32 %v6263, %v6414
      %v6541 = vadd.f32 %v6264, %v6415
      %v6542 = vadd.f32 %v6265, %v6417
      %v6543 = vadd.f32 %v6266, %v6419
      %v6544 = vadd.f32 %v6267, %v6420
      %v6545 = vadd.f32 %v6268, %v6422
      %v6546 = vadd.f32 %v6269, %v6424
      %v6547 = vadd.f32 %v6270, %v6425
      %v6548 = vadd.f32 %v6271, %v6427
      %v6549 = vadd.f32 %v6272, %v6429
      %v6550 = vadd.f32 %v6273, %v6430
      %v6551 = vadd.f32 %v6274, %v6432
      %v6552 = vadd.f32 %v6275, %v6434
      %v6553 = vadd.f32 %v6276, %v6435
      %v6554 = vadd.f32 %v6277, %v6437
      %v6555 = vadd.f32 %v6278, %v6439
      %v6556 = vadd.f32 %v6279, %v6440
      %v6557 = vadd.f32 %v6280, %v6442
      %v6558 = vadd.f32 %v6281, %v6444
      %v6559 = vadd.f32 %v6282, %v6445
      %v6560 = vadd.f32 %v6283, %v6447
      %v6561 = vadd.f32 %v6284, %v6449
      %v6562 = vadd.f32 %v6285, %v6450
      %v6563 = vadd.f32 %v6286, %v6452
      %v6564 = vadd.f32 %v6287, %v6454
      %v6565 = vadd.f32 %v6288, %v6455
      %v6566 = vadd.f32 %v6289, %v6457
      %v6567 = vadd.f32 %v6290, %v6459
      %v6568 = vadd.f32 %v6291, %v6460
      %v6569 = vadd.f32 %v6292, %v6462
      %v6570 = vadd.f32 %v6293, %v6464
      %v6571 = vadd.f32 %v6294, %v6465
      %v6572 = vadd.f32 %v6295, %v6467
      %v6573 = vadd.f32 %v6296, %v6469
      %v6574 = vadd.f32 %v6297, %v6470
      %v6575 = vadd.f32 %v6298, %v6472
      %v6576 = vadd.f32 %v6299, %v6474
      %v6577 = vadd.f32 %v6300, %v6475
      %v6578 = vadd.f32 %v6301, %v6477
      %v6579 = vadd.f32 %v6302, %v6479
      %v6580 = vadd.f32 %v6303, %v6480
      %v6581 = vadd.f32 %v6304, %v6482
      %v6582 = vadd.f32 %v6305, %v6484
      %v6583 = vadd.f32 %v6306, %v6485
      %v6584 = vadd.f32 %v6307, %v6487
      %v6585 = vadd.f32 %v6308, %v6489
      %v6586 = vld [vmem:[%s4 + $0x18] sm:$0x1]
      %v6587 = vlaneseq
      %v6588 = vshrl.u32 %v6587, 7
      %v6589 = vsub.s32 0, %v6588
      %v6590 = vrot.slane %v6586, %v6589
      %v6591 = vmul.f32 %v1071, %v6590
      %v6592 = vmul.f32 %v1072, %v6590
      %v6593 = vmul.f32 %v1073, %v6590
      %v6594 = vmul.f32 %v1075, %v6590
      %v6595 = vmul.f32 %v1076, %v6590
      %v6596 = vmul.f32 %v1077, %v6590
      %v6597 = vmul.f32 %v1079, %v6590
      %v6598 = vmul.f32 %v1080, %v6590
      %v6599 = vmul.f32 %v1081, %v6590
      %v6600 = vmul.f32 %v1083, %v6590
      %v6601 = vmul.f32 %v1084, %v6590
      %v6602 = vmul.f32 %v1085, %v6590
      %v6603 = vmul.f32 %v1087, %v6590
      %v6604 = vmul.f32 %v1088, %v6590
      %v6605 = vmul.f32 %v1089, %v6590
      %v6606 = vmul.f32 %v1091, %v6590
      %v6607 = vmul.f32 %v1092, %v6590
      %v6608 = vmul.f32 %v1093, %v6590
      %v6609 = vmul.f32 %v1095, %v6590
      %v6610 = vmul.f32 %v1096, %v6590
      %v6611 = vmul.f32 %v1097, %v6590
      %v6612 = vmul.f32 %v1099, %v6590
      %v6613 = vmul.f32 %v1100, %v6590
      %v6614 = vmul.f32 %v1101, %v6590
      %v6615 = vmul.f32 %v1103, %v6590
      %v6616 = vmul.f32 %v1104, %v6590
      %v6617 = vmul.f32 %v1105, %v6590
      %v6618 = vmul.f32 %v1107, %v6590
      %v6619 = vmul.f32 %v1108, %v6590
      %v6620 = vmul.f32 %v1109, %v6590
      %v6621 = vmul.f32 %v1111, %v6590
      %v6622 = vmul.f32 %v1112, %v6590
      %v6623 = vmul.f32 %v1113, %v6590
      %v6624 = vmul.f32 %v1115, %v6590
      %v6625 = vmul.f32 %v1116, %v6590
      %v6626 = vmul.f32 %v1117, %v6590
      %v6627 = vmul.f32 %v1119, %v6590
      %v6628 = vmul.f32 %v1120, %v6590
      %v6629 = vmul.f32 %v1121, %v6590
      %v6630 = vmul.f32 %v1123, %v6590
      %v6631 = vmul.f32 %v1124, %v6590
      %v6632 = vmul.f32 %v1125, %v6590
      %v6633 = vmul.f32 %v1127, %v6590
      %v6634 = vmul.f32 %v1128, %v6590
      %v6635 = vmul.f32 %v1129, %v6590
      %v6636 = vmul.f32 %v1131, %v6590
      %v6637 = vmul.f32 %v1132, %v6590
      %v6638 = vmul.f32 %v1133, %v6590
      %v6687 = vrot.slane %v6591, 4
      %v6688 = vrot.slane %v6592, 4
      %v6689 = vsel %vm2106, %v6687, %v6688
      %v6690 = vrot.slane %v6593, 4
      %v6691 = vsel %vm2106, %v6688, %v6690
      %v6692 = vrot.slane %v6594, 4
      %v6693 = vrot.slane %v6595, 4
      %v6694 = vsel %vm2106, %v6692, %v6693
      %v6695 = vrot.slane %v6596, 4
      %v6696 = vsel %vm2106, %v6693, %v6695
      %v6697 = vrot.slane %v6597, 4
      %v6698 = vrot.slane %v6598, 4
      %v6699 = vsel %vm2106, %v6697, %v6698
      %v6700 = vrot.slane %v6599, 4
      %v6701 = vsel %vm2106, %v6698, %v6700
      %v6702 = vrot.slane %v6600, 4
      %v6703 = vrot.slane %v6601, 4
      %v6704 = vsel %vm2106, %v6702, %v6703
      %v6705 = vrot.slane %v6602, 4
      %v6706 = vsel %vm2106, %v6703, %v6705
      %v6707 = vrot.slane %v6603, 4
      %v6708 = vrot.slane %v6604, 4
      %v6709 = vsel %vm2106, %v6707, %v6708
      %v6710 = vrot.slane %v6605, 4
      %v6711 = vsel %vm2106, %v6708, %v6710
      %v6712 = vrot.slane %v6606, 4
      %v6713 = vrot.slane %v6607, 4
      %v6714 = vsel %vm2106, %v6712, %v6713
      %v6715 = vrot.slane %v6608, 4
      %v6716 = vsel %vm2106, %v6713, %v6715
      %v6717 = vrot.slane %v6609, 4
      %v6718 = vrot.slane %v6610, 4
      %v6719 = vsel %vm2106, %v6717, %v6718
      %v6720 = vrot.slane %v6611, 4
      %v6721 = vsel %vm2106, %v6718, %v6720
      %v6722 = vrot.slane %v6612, 4
      %v6723 = vrot.slane %v6613, 4
      %v6724 = vsel %vm2106, %v6722, %v6723
      %v6725 = vrot.slane %v6614, 4
      %v6726 = vsel %vm2106, %v6723, %v6725
      %v6727 = vrot.slane %v6615, 4
      %v6728 = vrot.slane %v6616, 4
      %v6729 = vsel %vm2106, %v6727, %v6728
      %v6730 = vrot.slane %v6617, 4
      %v6731 = vsel %vm2106, %v6728, %v6730
      %v6732 = vrot.slane %v6618, 4
      %v6733 = vrot.slane %v6619, 4
      %v6734 = vsel %vm2106, %v6732, %v6733
      %v6735 = vrot.slane %v6620, 4
      %v6736 = vsel %vm2106, %v6733, %v6735
      %v6737 = vrot.slane %v6621, 4
      %v6738 = vrot.slane %v6622, 4
      %v6739 = vsel %vm2106, %v6737, %v6738
      %v6740 = vrot.slane %v6623, 4
      %v6741 = vsel %vm2106, %v6738, %v6740
      %v6742 = vrot.slane %v6624, 4
      %v6743 = vrot.slane %v6625, 4
      %v6744 = vsel %vm2106, %v6742, %v6743
      %v6745 = vrot.slane %v6626, 4
      %v6746 = vsel %vm2106, %v6743, %v6745
      %v6747 = vrot.slane %v6627, 4
      %v6748 = vrot.slane %v6628, 4
      %v6749 = vsel %vm2106, %v6747, %v6748
      %v6750 = vrot.slane %v6629, 4
      %v6751 = vsel %vm2106, %v6748, %v6750
      %v6752 = vrot.slane %v6630, 4
      %v6753 = vrot.slane %v6631, 4
      %v6754 = vsel %vm2106, %v6752, %v6753
      %v6755 = vrot.slane %v6632, 4
      %v6756 = vsel %vm2106, %v6753, %v6755
      %v6757 = vrot.slane %v6633, 4
      %v6758 = vrot.slane %v6634, 4
      %v6759 = vsel %vm2106, %v6757, %v6758
      %v6760 = vrot.slane %v6635, 4
      %v6761 = vsel %vm2106, %v6758, %v6760
      %v6762 = vrot.slane %v6636, 4
      %v6763 = vrot.slane %v6637, 4
      %v6764 = vsel %vm2106, %v6762, %v6763
      %v6765 = vrot.slane %v6638, 4
      %v6766 = vsel %vm2106, %v6763, %v6765
      %v6815 = vadd.f32 %v6538, %v6687
      %v6816 = vadd.f32 %v6539, %v6689
      %v6817 = vadd.f32 %v6540, %v6691
      %v6818 = vadd.f32 %v6541, %v6692
      %v6819 = vadd.f32 %v6542, %v6694
      %v6820 = vadd.f32 %v6543, %v6696
      %v6821 = vadd.f32 %v6544, %v6697
      %v6822 = vadd.f32 %v6545, %v6699
      %v6823 = vadd.f32 %v6546, %v6701
      %v6824 = vadd.f32 %v6547, %v6702
      %v6825 = vadd.f32 %v6548, %v6704
      %v6826 = vadd.f32 %v6549, %v6706
      %v6827 = vadd.f32 %v6550, %v6707
      %v6828 = vadd.f32 %v6551, %v6709
      %v6829 = vadd.f32 %v6552, %v6711
      %v6830 = vadd.f32 %v6553, %v6712
      %v6831 = vadd.f32 %v6554, %v6714
      %v6832 = vadd.f32 %v6555, %v6716
      %v6833 = vadd.f32 %v6556, %v6717
      %v6834 = vadd.f32 %v6557, %v6719
      %v6835 = vadd.f32 %v6558, %v6721
      %v6836 = vadd.f32 %v6559, %v6722
      %v6837 = vadd.f32 %v6560, %v6724
      %v6838 = vadd.f32 %v6561, %v6726
      %v6839 = vadd.f32 %v6562, %v6727
      %v6840 = vadd.f32 %v6563, %v6729
      %v6841 = vadd.f32 %v6564, %v6731
      %v6842 = vadd.f32 %v6565, %v6732
      %v6843 = vadd.f32 %v6566, %v6734
      %v6844 = vadd.f32 %v6567, %v6736
      %v6845 = vadd.f32 %v6568, %v6737
      %v6846 = vadd.f32 %v6569, %v6739
      %v6847 = vadd.f32 %v6570, %v6741
      %v6848 = vadd.f32 %v6571, %v6742
      %v6849 = vadd.f32 %v6572, %v6744
      %v6850 = vadd.f32 %v6573, %v6746
      %v6851 = vadd.f32 %v6574, %v6747
      %v6852 = vadd.f32 %v6575, %v6749
      %v6853 = vadd.f32 %v6576, %v6751
      %v6854 = vadd.f32 %v6577, %v6752
      %v6855 = vadd.f32 %v6578, %v6754
      %v6856 = vadd.f32 %v6579, %v6756
      %v6857 = vadd.f32 %v6580, %v6757
      %v6858 = vadd.f32 %v6581, %v6759
      %v6859 = vadd.f32 %v6582, %v6761
      %v6860 = vadd.f32 %v6583, %v6762
      %v6861 = vadd.f32 %v6584, %v6764
      %v6862 = vadd.f32 %v6585, %v6766
      %v6863 = vld [vmem:[%s5] sm:$0x1]
      %v6865 = vlaneseq
      %v6866 = vshrl.u32 %v6865, 7
      %v6867 = vsub.s32 0, %v6866
      %v6868 = vrot.slane %v6863, %v6867
      %v6870 = vmul.f32 %v6815, %v6868
      %v6871 = vmul.f32 %v6816, %v6868
      %v6872 = vmul.f32 %v6817, %v6868
      %v6873 = vmul.f32 %v6818, %v6868
      %v6874 = vmul.f32 %v6819, %v6868
      %v6875 = vmul.f32 %v6820, %v6868
      %v6876 = vmul.f32 %v6821, %v6868
      %v6877 = vmul.f32 %v6822, %v6868
      %v6878 = vmul.f32 %v6823, %v6868
      %v6879 = vmul.f32 %v6824, %v6868
      %v6880 = vmul.f32 %v6825, %v6868
      %v6881 = vmul.f32 %v6826, %v6868
      %v6882 = vmul.f32 %v6827, %v6868
      %v6883 = vmul.f32 %v6828, %v6868
      %v6884 = vmul.f32 %v6829, %v6868
      %v6885 = vmul.f32 %v6830, %v6868
      %v6886 = vmul.f32 %v6831, %v6868
      %v6887 = vmul.f32 %v6832, %v6868
      %v6888 = vmul.f32 %v6833, %v6868
      %v6889 = vmul.f32 %v6834, %v6868
      %v6890 = vmul.f32 %v6835, %v6868
      %v6891 = vmul.f32 %v6836, %v6868
      %v6892 = vmul.f32 %v6837, %v6868
      %v6893 = vmul.f32 %v6838, %v6868
      %v6894 = vmul.f32 %v6839, %v6868
      %v6895 = vmul.f32 %v6840, %v6868
      %v6896 = vmul.f32 %v6841, %v6868
      %v6897 = vmul.f32 %v6842, %v6868
      %v6898 = vmul.f32 %v6843, %v6868
      %v6899 = vmul.f32 %v6844, %v6868
      %v6900 = vmul.f32 %v6845, %v6868
      %v6901 = vmul.f32 %v6846, %v6868
      %v6902 = vmul.f32 %v6847, %v6868
      %v6903 = vmul.f32 %v6848, %v6868
      %v6904 = vmul.f32 %v6849, %v6868
      %v6905 = vmul.f32 %v6850, %v6868
      %v6906 = vmul.f32 %v6851, %v6868
      %v6907 = vmul.f32 %v6852, %v6868
      %v6908 = vmul.f32 %v6853, %v6868
      %v6909 = vmul.f32 %v6854, %v6868
      %v6910 = vmul.f32 %v6855, %v6868
      %v6911 = vmul.f32 %v6856, %v6868
      %v6912 = vmul.f32 %v6857, %v6868
      %v6913 = vmul.f32 %v6858, %v6868
      %v6914 = vmul.f32 %v6859, %v6868
      %v6915 = vmul.f32 %v6860, %v6868
      %v6916 = vmul.f32 %v6861, %v6868
      %v6917 = vmul.f32 %v6862, %v6868
      %v6918 = vld [vmem:[%s6] sm:$0x1]
      %v6920 = vlaneseq
      %v6921 = vshrl.u32 %v6920, 7
      %v6922 = vsub.s32 0, %v6921
      %v6923 = vrot.slane %v6918, %v6922
      %v6925 = vadd.f32 %v6870, %v6923
      %v6926 = vadd.f32 %v6871, %v6923
      %v6927 = vadd.f32 %v6872, %v6923
      %v6928 = vadd.f32 %v6873, %v6923
      %v6929 = vadd.f32 %v6874, %v6923
      %v6930 = vadd.f32 %v6875, %v6923
      %v6931 = vadd.f32 %v6876, %v6923
      %v6932 = vadd.f32 %v6877, %v6923
      %v6933 = vadd.f32 %v6878, %v6923
      %v6934 = vadd.f32 %v6879, %v6923
      %v6935 = vadd.f32 %v6880, %v6923
      %v6936 = vadd.f32 %v6881, %v6923
      %v6937 = vadd.f32 %v6882, %v6923
      %v6938 = vadd.f32 %v6883, %v6923
      %v6939 = vadd.f32 %v6884, %v6923
      %v6940 = vadd.f32 %v6885, %v6923
      %v6941 = vadd.f32 %v6886, %v6923
      %v6942 = vadd.f32 %v6887, %v6923
      %v6943 = vadd.f32 %v6888, %v6923
      %v6944 = vadd.f32 %v6889, %v6923
      %v6945 = vadd.f32 %v6890, %v6923
      %v6946 = vadd.f32 %v6891, %v6923
      %v6947 = vadd.f32 %v6892, %v6923
      %v6948 = vadd.f32 %v6893, %v6923
      %v6949 = vadd.f32 %v6894, %v6923
      %v6950 = vadd.f32 %v6895, %v6923
      %v6951 = vadd.f32 %v6896, %v6923
      %v6952 = vadd.f32 %v6897, %v6923
      %v6953 = vadd.f32 %v6898, %v6923
      %v6954 = vadd.f32 %v6899, %v6923
      %v6955 = vadd.f32 %v6900, %v6923
      %v6956 = vadd.f32 %v6901, %v6923
      %v6957 = vadd.f32 %v6902, %v6923
      %v6958 = vadd.f32 %v6903, %v6923
      %v6959 = vadd.f32 %v6904, %v6923
      %v6960 = vadd.f32 %v6905, %v6923
      %v6961 = vadd.f32 %v6906, %v6923
      %v6962 = vadd.f32 %v6907, %v6923
      %v6963 = vadd.f32 %v6908, %v6923
      %v6964 = vadd.f32 %v6909, %v6923
      %v6965 = vadd.f32 %v6910, %v6923
      %v6966 = vadd.f32 %v6911, %v6923
      %v6967 = vadd.f32 %v6912, %v6923
      %v6968 = vadd.f32 %v6913, %v6923
      %v6969 = vadd.f32 %v6914, %v6923
      %v6970 = vadd.f32 %v6915, %v6923
      %v6971 = vadd.f32 %v6916, %v6923
      %v6972 = vadd.f32 %v6917, %v6923
      %v6973 = vxor.u32 %v6925, 2147483648
      %v6974 = vxor.u32 %v6926, 2147483648
      %v6975 = vxor.u32 %v6927, 2147483648
      %v6976 = vxor.u32 %v6928, 2147483648
      %v6977 = vxor.u32 %v6929, 2147483648
      %v6978 = vxor.u32 %v6930, 2147483648
      %v6979 = vxor.u32 %v6931, 2147483648
      %v6980 = vxor.u32 %v6932, 2147483648
      %v6981 = vxor.u32 %v6933, 2147483648
      %v6982 = vxor.u32 %v6934, 2147483648
      %v6983 = vxor.u32 %v6935, 2147483648
      %v6984 = vxor.u32 %v6936, 2147483648
      %v6985 = vxor.u32 %v6937, 2147483648
      %v6986 = vxor.u32 %v6938, 2147483648
      %v6987 = vxor.u32 %v6939, 2147483648
      %v6988 = vxor.u32 %v6940, 2147483648
      %v6989 = vxor.u32 %v6941, 2147483648
      %v6990 = vxor.u32 %v6942, 2147483648
      %v6991 = vxor.u32 %v6943, 2147483648
      %v6992 = vxor.u32 %v6944, 2147483648
      %v6993 = vxor.u32 %v6945, 2147483648
      %v6994 = vxor.u32 %v6946, 2147483648
      %v6995 = vxor.u32 %v6947, 2147483648
      %v6996 = vxor.u32 %v6948, 2147483648
      %v6997 = vxor.u32 %v6949, 2147483648
      %v6998 = vxor.u32 %v6950, 2147483648
      %v6999 = vxor.u32 %v6951, 2147483648
      %v7000 = vxor.u32 %v6952, 2147483648
      %v7001 = vxor.u32 %v6953, 2147483648
      %v7002 = vxor.u32 %v6954, 2147483648
      %v7003 = vxor.u32 %v6955, 2147483648
      %v7004 = vxor.u32 %v6956, 2147483648
      %v7005 = vxor.u32 %v6957, 2147483648
      %v7006 = vxor.u32 %v6958, 2147483648
      %v7007 = vxor.u32 %v6959, 2147483648
      %v7008 = vxor.u32 %v6960, 2147483648
      %v7009 = vxor.u32 %v6961, 2147483648
      %v7010 = vxor.u32 %v6962, 2147483648
      %v7011 = vxor.u32 %v6963, 2147483648
      %v7012 = vxor.u32 %v6964, 2147483648
      %v7013 = vxor.u32 %v6965, 2147483648
      %v7014 = vxor.u32 %v6966, 2147483648
      %v7015 = vxor.u32 %v6967, 2147483648
      %v7016 = vxor.u32 %v6968, 2147483648
      %v7017 = vxor.u32 %v6969, 2147483648
      %v7018 = vxor.u32 %v6970, 2147483648
      %v7019 = vxor.u32 %v6971, 2147483648
      %v7020 = vxor.u32 %v6972, 2147483648
      %v7021 = vmul.f32 %v6973, 1.442695
      %v7022 = vpow.pop %v7021
      %v7023 = vmul.f32 %v6974, 1.442695
      %v7024 = vpow.pop %v7023
      %v7025 = vmul.f32 %v6975, 1.442695
      %v7026 = vpow.pop %v7025
      %v7027 = vmul.f32 %v6976, 1.442695
      %v7028 = vpow.pop %v7027
      %v7029 = vmul.f32 %v6977, 1.442695
      %v7030 = vpow.pop %v7029
      %v7031 = vmul.f32 %v6978, 1.442695
      %v7032 = vpow.pop %v7031
      %v7033 = vmul.f32 %v6979, 1.442695
      %v7034 = vpow.pop %v7033
      %v7035 = vmul.f32 %v6980, 1.442695
      %v7036 = vpow.pop %v7035
      %v7037 = vmul.f32 %v6981, 1.442695
      %v7038 = vpow.pop %v7037
      %v7039 = vmul.f32 %v6982, 1.442695
      %v7040 = vpow.pop %v7039
      %v7041 = vmul.f32 %v6983, 1.442695
      %v7042 = vpow.pop %v7041
      %v7043 = vmul.f32 %v6984, 1.442695
      %v7044 = vpow.pop %v7043
      %v7045 = vmul.f32 %v6985, 1.442695
      %v7046 = vpow.pop %v7045
      %v7047 = vmul.f32 %v6986, 1.442695
      %v7048 = vpow.pop %v7047
      %v7049 = vmul.f32 %v6987, 1.442695
      %v7050 = vpow.pop %v7049
      %v7051 = vmul.f32 %v6988, 1.442695
      %v7052 = vpow.pop %v7051
      %v7053 = vmul.f32 %v6989, 1.442695
      %v7054 = vpow.pop %v7053
      %v7055 = vmul.f32 %v6990, 1.442695
      %v7056 = vpow.pop %v7055
      %v7057 = vmul.f32 %v6991, 1.442695
      %v7058 = vpow.pop %v7057
      %v7059 = vmul.f32 %v6992, 1.442695
      %v7060 = vpow.pop %v7059
      %v7061 = vmul.f32 %v6993, 1.442695
      %v7062 = vpow.pop %v7061
      %v7063 = vmul.f32 %v6994, 1.442695
      %v7064 = vpow.pop %v7063
      %v7065 = vmul.f32 %v6995, 1.442695
      %v7066 = vpow.pop %v7065
      %v7067 = vmul.f32 %v6996, 1.442695
      %v7068 = vpow.pop %v7067
      %v7069 = vmul.f32 %v6997, 1.442695
      %v7070 = vpow.pop %v7069
      %v7071 = vmul.f32 %v6998, 1.442695
      %v7072 = vpow.pop %v7071
      %v7073 = vmul.f32 %v6999, 1.442695
      %v7074 = vpow.pop %v7073
      %v7075 = vmul.f32 %v7000, 1.442695
      %v7076 = vpow.pop %v7075
      %v7077 = vmul.f32 %v7001, 1.442695
      %v7078 = vpow.pop %v7077
      %v7079 = vmul.f32 %v7002, 1.442695
      %v7080 = vpow.pop %v7079
      %v7081 = vmul.f32 %v7003, 1.442695
      %v7082 = vpow.pop %v7081
      %v7083 = vmul.f32 %v7004, 1.442695
      %v7084 = vpow.pop %v7083
      %v7085 = vmul.f32 %v7005, 1.442695
      %v7086 = vpow.pop %v7085
      %v7087 = vmul.f32 %v7006, 1.442695
      %v7088 = vpow.pop %v7087
      %v7089 = vmul.f32 %v7007, 1.442695
      %v7090 = vpow.pop %v7089
      %v7091 = vmul.f32 %v7008, 1.442695
      %v7092 = vpow.pop %v7091
      %v7093 = vmul.f32 %v7009, 1.442695
      %v7094 = vpow.pop %v7093
      %v7095 = vmul.f32 %v7010, 1.442695
      %v7096 = vpow.pop %v7095
      %v7097 = vmul.f32 %v7011, 1.442695
      %v7098 = vpow.pop %v7097
      %v7099 = vmul.f32 %v7012, 1.442695
      %v7100 = vpow.pop %v7099
      %v7101 = vmul.f32 %v7013, 1.442695
      %v7102 = vpow.pop %v7101
      %v7103 = vmul.f32 %v7014, 1.442695
      %v7104 = vpow.pop %v7103
      %v7105 = vmul.f32 %v7015, 1.442695
      %v7106 = vpow.pop %v7105
      %v7107 = vmul.f32 %v7016, 1.442695
      %v7108 = vpow.pop %v7107
      %v7109 = vmul.f32 %v7017, 1.442695
      %v7110 = vpow.pop %v7109
      %v7111 = vmul.f32 %v7018, 1.442695
      %v7112 = vpow.pop %v7111
      %v7113 = vmul.f32 %v7019, 1.442695
      %v7114 = vpow.pop %v7113
      %v7115 = vmul.f32 %v7020, 1.442695
      %v7116 = vpow.pop %v7115
      %v7117 = vadd.f32 %v7022, 1.0
      %v7118 = vadd.f32 %v7024, 1.0
      %v7119 = vadd.f32 %v7026, 1.0
      %v7120 = vadd.f32 %v7028, 1.0
      %v7121 = vadd.f32 %v7030, 1.0
      %v7122 = vadd.f32 %v7032, 1.0
      %v7123 = vadd.f32 %v7034, 1.0
      %v7124 = vadd.f32 %v7036, 1.0
      %v7125 = vadd.f32 %v7038, 1.0
      %v7126 = vadd.f32 %v7040, 1.0
      %v7127 = vadd.f32 %v7042, 1.0
      %v7128 = vadd.f32 %v7044, 1.0
      %v7129 = vadd.f32 %v7046, 1.0
      %v7130 = vadd.f32 %v7048, 1.0
      %v7131 = vadd.f32 %v7050, 1.0
      %v7132 = vadd.f32 %v7052, 1.0
      %v7133 = vadd.f32 %v7054, 1.0
      %v7134 = vadd.f32 %v7056, 1.0
      %v7135 = vadd.f32 %v7058, 1.0
      %v7136 = vadd.f32 %v7060, 1.0
      %v7137 = vadd.f32 %v7062, 1.0
      %v7138 = vadd.f32 %v7064, 1.0
      %v7139 = vadd.f32 %v7066, 1.0
      %v7140 = vadd.f32 %v7068, 1.0
      %v7141 = vadd.f32 %v7070, 1.0
      %v7142 = vadd.f32 %v7072, 1.0
      %v7143 = vadd.f32 %v7074, 1.0
      %v7144 = vadd.f32 %v7076, 1.0
      %v7145 = vadd.f32 %v7078, 1.0
      %v7146 = vadd.f32 %v7080, 1.0
      %v7147 = vadd.f32 %v7082, 1.0
      %v7148 = vadd.f32 %v7084, 1.0
      %v7149 = vadd.f32 %v7086, 1.0
      %v7150 = vadd.f32 %v7088, 1.0
      %v7151 = vadd.f32 %v7090, 1.0
      %v7152 = vadd.f32 %v7092, 1.0
      %v7153 = vadd.f32 %v7094, 1.0
      %v7154 = vadd.f32 %v7096, 1.0
      %v7155 = vadd.f32 %v7098, 1.0
      %v7156 = vadd.f32 %v7100, 1.0
      %v7157 = vadd.f32 %v7102, 1.0
      %v7158 = vadd.f32 %v7104, 1.0
      %v7159 = vadd.f32 %v7106, 1.0
      %v7160 = vadd.f32 %v7108, 1.0
      %v7161 = vadd.f32 %v7110, 1.0
      %v7162 = vadd.f32 %v7112, 1.0
      %v7163 = vadd.f32 %v7114, 1.0
      %v7164 = vadd.f32 %v7116, 1.0
      %v7165 = vrcp.pop %v7117
      %v7166 = vmul.f32 1.0, %v7165
      %v7167 = vrcp.pop %v7118
      %v7168 = vmul.f32 1.0, %v7167
      %v7169 = vrcp.pop %v7119
      %v7170 = vmul.f32 1.0, %v7169
      %v7171 = vrcp.pop %v7120
      %v7172 = vmul.f32 1.0, %v7171
      %v7173 = vrcp.pop %v7121
      %v7174 = vmul.f32 1.0, %v7173
      %v7175 = vrcp.pop %v7122
      %v7176 = vmul.f32 1.0, %v7175
      %v7177 = vrcp.pop %v7123
      %v7178 = vmul.f32 1.0, %v7177
      %v7179 = vrcp.pop %v7124
      %v7180 = vmul.f32 1.0, %v7179
      %v7181 = vrcp.pop %v7125
      %v7182 = vmul.f32 1.0, %v7181
      %v7183 = vrcp.pop %v7126
      %v7184 = vmul.f32 1.0, %v7183
      %v7185 = vrcp.pop %v7127
      %v7186 = vmul.f32 1.0, %v7185
      %v7187 = vrcp.pop %v7128
      %v7188 = vmul.f32 1.0, %v7187
      %v7189 = vrcp.pop %v7129
      %v7190 = vmul.f32 1.0, %v7189
      %v7191 = vrcp.pop %v7130
      %v7192 = vmul.f32 1.0, %v7191
      %v7193 = vrcp.pop %v7131
      %v7194 = vmul.f32 1.0, %v7193
      %v7195 = vrcp.pop %v7132
      %v7196 = vmul.f32 1.0, %v7195
      %v7197 = vrcp.pop %v7133
      %v7198 = vmul.f32 1.0, %v7197
      %v7199 = vrcp.pop %v7134
      %v7200 = vmul.f32 1.0, %v7199
      %v7201 = vrcp.pop %v7135
      %v7202 = vmul.f32 1.0, %v7201
      %v7203 = vrcp.pop %v7136
      %v7204 = vmul.f32 1.0, %v7203
      %v7205 = vrcp.pop %v7137
      %v7206 = vmul.f32 1.0, %v7205
      %v7207 = vrcp.pop %v7138
      %v7208 = vmul.f32 1.0, %v7207
      %v7209 = vrcp.pop %v7139
      %v7210 = vmul.f32 1.0, %v7209
      %v7211 = vrcp.pop %v7140
      %v7212 = vmul.f32 1.0, %v7211
      %v7213 = vrcp.pop %v7141
      %v7214 = vmul.f32 1.0, %v7213
      %v7215 = vrcp.pop %v7142
      %v7216 = vmul.f32 1.0, %v7215
      %v7217 = vrcp.pop %v7143
      %v7218 = vmul.f32 1.0, %v7217
      %v7219 = vrcp.pop %v7144
      %v7220 = vmul.f32 1.0, %v7219
      %v7221 = vrcp.pop %v7145
      %v7222 = vmul.f32 1.0, %v7221
      %v7223 = vrcp.pop %v7146
      %v7224 = vmul.f32 1.0, %v7223
      %v7225 = vrcp.pop %v7147
      %v7226 = vmul.f32 1.0, %v7225
      %v7227 = vrcp.pop %v7148
      %v7228 = vmul.f32 1.0, %v7227
      %v7229 = vrcp.pop %v7149
      %v7230 = vmul.f32 1.0, %v7229
      %v7231 = vrcp.pop %v7150
      %v7232 = vmul.f32 1.0, %v7231
      %v7233 = vrcp.pop %v7151
      %v7234 = vmul.f32 1.0, %v7233
      %v7235 = vrcp.pop %v7152
      %v7236 = vmul.f32 1.0, %v7235
      %v7237 = vrcp.pop %v7153
      %v7238 = vmul.f32 1.0, %v7237
      %v7239 = vrcp.pop %v7154
      %v7240 = vmul.f32 1.0, %v7239
      %v7241 = vrcp.pop %v7155
      %v7242 = vmul.f32 1.0, %v7241
      %v7243 = vrcp.pop %v7156
      %v7244 = vmul.f32 1.0, %v7243
      %v7245 = vrcp.pop %v7157
      %v7246 = vmul.f32 1.0, %v7245
      %v7247 = vrcp.pop %v7158
      %v7248 = vmul.f32 1.0, %v7247
      %v7249 = vrcp.pop %v7159
      %v7250 = vmul.f32 1.0, %v7249
      %v7251 = vrcp.pop %v7160
      %v7252 = vmul.f32 1.0, %v7251
      %v7253 = vrcp.pop %v7161
      %v7254 = vmul.f32 1.0, %v7253
      %v7255 = vrcp.pop %v7162
      %v7256 = vmul.f32 1.0, %v7255
      %v7257 = vrcp.pop %v7163
      %v7258 = vmul.f32 1.0, %v7257
      %v7259 = vrcp.pop %v7164
      %v7260 = vmul.f32 1.0, %v7259
      %v7261 = vmul.f32 %v6925, %v7166
      %v7262 = vmul.f32 %v6926, %v7168
      %v7263 = vmul.f32 %v6927, %v7170
      %v7264 = vmul.f32 %v6928, %v7172
      %v7265 = vmul.f32 %v6929, %v7174
      %v7266 = vmul.f32 %v6930, %v7176
      %v7267 = vmul.f32 %v6931, %v7178
      %v7268 = vmul.f32 %v6932, %v7180
      %v7269 = vmul.f32 %v6933, %v7182
      %v7270 = vmul.f32 %v6934, %v7184
      %v7271 = vmul.f32 %v6935, %v7186
      %v7272 = vmul.f32 %v6936, %v7188
      %v7273 = vmul.f32 %v6937, %v7190
      %v7274 = vmul.f32 %v6938, %v7192
      %v7275 = vmul.f32 %v6939, %v7194
      %v7276 = vmul.f32 %v6940, %v7196
      %v7277 = vmul.f32 %v6941, %v7198
      %v7278 = vmul.f32 %v6942, %v7200
      %v7279 = vmul.f32 %v6943, %v7202
      %v7280 = vmul.f32 %v6944, %v7204
      %v7281 = vmul.f32 %v6945, %v7206
      %v7282 = vmul.f32 %v6946, %v7208
      %v7283 = vmul.f32 %v6947, %v7210
      %v7284 = vmul.f32 %v6948, %v7212
      %v7285 = vmul.f32 %v6949, %v7214
      %v7286 = vmul.f32 %v6950, %v7216
      %v7287 = vmul.f32 %v6951, %v7218
      %v7288 = vmul.f32 %v6952, %v7220
      %v7289 = vmul.f32 %v6953, %v7222
      %v7290 = vmul.f32 %v6954, %v7224
      %v7291 = vmul.f32 %v6955, %v7226
      %v7292 = vmul.f32 %v6956, %v7228
      %v7293 = vmul.f32 %v6957, %v7230
      %v7294 = vmul.f32 %v6958, %v7232
      %v7295 = vmul.f32 %v6959, %v7234
      %v7296 = vmul.f32 %v6960, %v7236
      %v7297 = vmul.f32 %v6961, %v7238
      %v7298 = vmul.f32 %v6962, %v7240
      %v7299 = vmul.f32 %v6963, %v7242
      %v7300 = vmul.f32 %v6964, %v7244
      %v7301 = vmul.f32 %v6965, %v7246
      %v7302 = vmul.f32 %v6966, %v7248
      %v7303 = vmul.f32 %v6967, %v7250
      %v7304 = vmul.f32 %v6968, %v7252
      %v7305 = vmul.f32 %v6969, %v7254
      %v7306 = vmul.f32 %v6970, %v7256
      %v7307 = vmul.f32 %v6971, %v7258
      %v7308 = vmul.f32 %v6972, %v7260
      %7357 = vrot.lane.b32.xlu0 %v7261, 4
      %v7358 = vpop.permute.xlu0 %7357
      %7359 = vrot.lane.b32.xlu0 %v7262, 4
      %v7360 = vpop.permute.xlu0 %7359
      %7361 = vrot.lane.b32.xlu0 %v7263, 4
      %v7362 = vpop.permute.xlu0 %7361
      %7363 = vrot.lane.b32.xlu0 %v7264, 4
      %v7364 = vpop.permute.xlu0 %7363
      %7365 = vrot.lane.b32.xlu0 %v7265, 4
      %v7366 = vpop.permute.xlu0 %7365
      %7367 = vrot.lane.b32.xlu0 %v7266, 4
      %v7368 = vpop.permute.xlu0 %7367
      %7369 = vrot.lane.b32.xlu0 %v7267, 4
      %v7370 = vpop.permute.xlu0 %7369
      %7371 = vrot.lane.b32.xlu0 %v7268, 4
      %v7372 = vpop.permute.xlu0 %7371
      %7373 = vrot.lane.b32.xlu0 %v7269, 4
      %v7374 = vpop.permute.xlu0 %7373
      %7375 = vrot.lane.b32.xlu0 %v7270, 4
      %v7376 = vpop.permute.xlu0 %7375
      %7377 = vrot.lane.b32.xlu0 %v7271, 4
      %v7378 = vpop.permute.xlu0 %7377
      %7379 = vrot.lane.b32.xlu0 %v7272, 4
      %v7380 = vpop.permute.xlu0 %7379
      %7381 = vrot.lane.b32.xlu0 %v7273, 4
      %v7382 = vpop.permute.xlu0 %7381
      %7383 = vrot.lane.b32.xlu0 %v7274, 4
      %v7384 = vpop.permute.xlu0 %7383
      %7385 = vrot.lane.b32.xlu0 %v7275, 4
      %v7386 = vpop.permute.xlu0 %7385
      %7387 = vrot.lane.b32.xlu0 %v7276, 4
      %v7388 = vpop.permute.xlu0 %7387
      %7389 = vrot.lane.b32.xlu0 %v7277, 4
      %v7390 = vpop.permute.xlu0 %7389
      %7391 = vrot.lane.b32.xlu0 %v7278, 4
      %v7392 = vpop.permute.xlu0 %7391
      %7393 = vrot.lane.b32.xlu0 %v7279, 4
      %v7394 = vpop.permute.xlu0 %7393
      %7395 = vrot.lane.b32.xlu0 %v7280, 4
      %v7396 = vpop.permute.xlu0 %7395
      %7397 = vrot.lane.b32.xlu0 %v7281, 4
      %v7398 = vpop.permute.xlu0 %7397
      %7399 = vrot.lane.b32.xlu0 %v7282, 4
      %v7400 = vpop.permute.xlu0 %7399
      %7401 = vrot.lane.b32.xlu0 %v7283, 4
      %v7402 = vpop.permute.xlu0 %7401
      %7403 = vrot.lane.b32.xlu0 %v7284, 4
      %v7404 = vpop.permute.xlu0 %7403
      %7405 = vrot.lane.b32.xlu0 %v7285, 4
      %v7406 = vpop.permute.xlu0 %7405
      %7407 = vrot.lane.b32.xlu0 %v7286, 4
      %v7408 = vpop.permute.xlu0 %7407
      %7409 = vrot.lane.b32.xlu0 %v7287, 4
      %v7410 = vpop.permute.xlu0 %7409
      %7411 = vrot.lane.b32.xlu0 %v7288, 4
      %v7412 = vpop.permute.xlu0 %7411
      %7413 = vrot.lane.b32.xlu0 %v7289, 4
      %v7414 = vpop.permute.xlu0 %7413
      %7415 = vrot.lane.b32.xlu0 %v7290, 4
      %v7416 = vpop.permute.xlu0 %7415
      %7417 = vrot.lane.b32.xlu0 %v7291, 4
      %v7418 = vpop.permute.xlu0 %7417
      %7419 = vrot.lane.b32.xlu0 %v7292, 4
      %v7420 = vpop.permute.xlu0 %7419
      %7421 = vrot.lane.b32.xlu0 %v7293, 4
      %v7422 = vpop.permute.xlu0 %7421
      %7423 = vrot.lane.b32.xlu0 %v7294, 4
      %v7424 = vpop.permute.xlu0 %7423
      %7425 = vrot.lane.b32.xlu0 %v7295, 4
      %v7426 = vpop.permute.xlu0 %7425
      %7427 = vrot.lane.b32.xlu0 %v7296, 4
      %v7428 = vpop.permute.xlu0 %7427
      %7429 = vrot.lane.b32.xlu0 %v7297, 4
      %v7430 = vpop.permute.xlu0 %7429
      %7431 = vrot.lane.b32.xlu0 %v7298, 4
      %v7432 = vpop.permute.xlu0 %7431
      %7433 = vrot.lane.b32.xlu0 %v7299, 4
      %v7434 = vpop.permute.xlu0 %7433
      %7435 = vrot.lane.b32.xlu0 %v7300, 4
      %v7436 = vpop.permute.xlu0 %7435
      %7437 = vrot.lane.b32.xlu0 %v7301, 4
      %v7438 = vpop.permute.xlu0 %7437
      %7439 = vrot.lane.b32.xlu0 %v7302, 4
      %v7440 = vpop.permute.xlu0 %7439
      %7441 = vrot.lane.b32.xlu0 %v7303, 4
      %v7442 = vpop.permute.xlu0 %7441
      %7443 = vrot.lane.b32.xlu0 %v7304, 4
      %v7444 = vpop.permute.xlu0 %7443
      %7445 = vrot.lane.b32.xlu0 %v7305, 4
      %v7446 = vpop.permute.xlu0 %7445
      %7447 = vrot.lane.b32.xlu0 %v7306, 4
      %v7448 = vpop.permute.xlu0 %7447
      %7449 = vrot.lane.b32.xlu0 %v7307, 4
      %v7450 = vpop.permute.xlu0 %7449
      %7451 = vrot.lane.b32.xlu0 %v7308, 4
      %v7452 = vpop.permute.xlu0 %7451
      %vm7501 = vcmask 64550
      %7502 = vst.msk [vmem:[%s278 - $0x6] sm:$0xc0] %vm7501, %v7358
      %vm7503 = vcmask 64544
      %7504 = vst.msk [vmem:[%s278 + $0x2] sm:$0xff] %vm7503, %v7360
      %vm7505 = vcmask 62496
      %7506 = vst.msk [vmem:[%s278 + $0xa] sm:$0x3f] %vm7505, %v7362
      %7507 = vst.msk [vmem:[%s278 + $0xa] sm:$0xc0] %vm7501, %v7364
      %7508 = vst.msk [vmem:[%s278 + $0x12] sm:$0xff] %vm7503, %v7366
      %7509 = vst.msk [vmem:[%s278 + $0x1a] sm:$0x3f] %vm7505, %v7368
      %7510 = vst.msk [vmem:[%s278 + $0x1a] sm:$0xc0] %vm7501, %v7370
      %7511 = vst.msk [vmem:[%s278 + $0x22] sm:$0xff] %vm7503, %v7372
      %7512 = vst.msk [vmem:[%s278 + $0x2a] sm:$0x3f] %vm7505, %v7374
      %7513 = vst.msk [vmem:[%s278 + $0x2a] sm:$0xc0] %vm7501, %v7376
      %7514 = vst.msk [vmem:[%s278 + $0x32] sm:$0xff] %vm7503, %v7378
      %7515 = vst.msk [vmem:[%s278 + $0x3a] sm:$0x3f] %vm7505, %v7380
      %7516 = vst.msk [vmem:[%s278 + $0x3a] sm:$0xc0] %vm7501, %v7382
      %7517 = vst.msk [vmem:[%s278 + $0x42] sm:$0xff] %vm7503, %v7384
      %7518 = vst.msk [vmem:[%s278 + $0x4a] sm:$0x3f] %vm7505, %v7386
      %7519 = vst.msk [vmem:[%s278 + $0x4a] sm:$0xc0] %vm7501, %v7388
      %7520 = vst.msk [vmem:[%s278 + $0x52] sm:$0xff] %vm7503, %v7390
      %7521 = vst.msk [vmem:[%s278 + $0x5a] sm:$0x3f] %vm7505, %v7392
      %7522 = vst.msk [vmem:[%s278 + $0x5a] sm:$0xc0] %vm7501, %v7394
      %7523 = vst.msk [vmem:[%s278 + $0x62] sm:$0xff] %vm7503, %v7396
      %7524 = vst.msk [vmem:[%s278 + $0x6a] sm:$0x3f] %vm7505, %v7398
      %7525 = vst.msk [vmem:[%s278 + $0x6a] sm:$0xc0] %vm7501, %v7400
      %7526 = vst.msk [vmem:[%s278 + $0x72] sm:$0xff] %vm7503, %v7402
      %7527 = vst.msk [vmem:[%s278 + $0x7a] sm:$0x3f] %vm7505, %v7404
      %7528 = vst.msk [vmem:[%s278 + $0x7a] sm:$0xc0] %vm7501, %v7406
      %7529 = vst.msk [vmem:[%s278 + $0x82] sm:$0xff] %vm7503, %v7408
      %7530 = vst.msk [vmem:[%s278 + $0x8a] sm:$0x3f] %vm7505, %v7410
      %7531 = vst.msk [vmem:[%s278 + $0x8a] sm:$0xc0] %vm7501, %v7412
      %7532 = vst.msk [vmem:[%s278 + $0x92] sm:$0xff] %vm7503, %v7414
      %7533 = vst.msk [vmem:[%s278 + $0x9a] sm:$0x3f] %vm7505, %v7416
      %7534 = vst.msk [vmem:[%s278 + $0x9a] sm:$0xc0] %vm7501, %v7418
      %7535 = vst.msk [vmem:[%s278 + $0xa2] sm:$0xff] %vm7503, %v7420
      %7536 = vst.msk [vmem:[%s278 + $0xaa] sm:$0x3f] %vm7505, %v7422
      %7537 = vst.msk [vmem:[%s278 + $0xaa] sm:$0xc0] %vm7501, %v7424
      %7538 = vst.msk [vmem:[%s278 + $0xb2] sm:$0xff] %vm7503, %v7426
      %7539 = vst.msk [vmem:[%s278 + $0xba] sm:$0x3f] %vm7505, %v7428
      %7540 = vst.msk [vmem:[%s278 + $0xba] sm:$0xc0] %vm7501, %v7430
      %7541 = vst.msk [vmem:[%s278 + $0xc2] sm:$0xff] %vm7503, %v7432
      %7542 = vst.msk [vmem:[%s278 + $0xca] sm:$0x3f] %vm7505, %v7434
      %7543 = vst.msk [vmem:[%s278 + $0xca] sm:$0xc0] %vm7501, %v7436
      %7544 = vst.msk [vmem:[%s278 + $0xd2] sm:$0xff] %vm7503, %v7438
      %7545 = vst.msk [vmem:[%s278 + $0xda] sm:$0x3f] %vm7505, %v7440
      %7546 = vst.msk [vmem:[%s278 + $0xda] sm:$0xc0] %vm7501, %v7442
      %7547 = vst.msk [vmem:[%s278 + $0xe2] sm:$0xff] %vm7503, %v7444
      %7548 = vst.msk [vmem:[%s278 + $0xea] sm:$0x3f] %vm7505, %v7446
      %7549 = vst.msk [vmem:[%s278 + $0xea] sm:$0xc0] %vm7501, %v7448
      %7550 = vst.msk [vmem:[%s278 + $0xf2] sm:$0xff] %vm7503, %v7450
      %7551 = vst.msk [vmem:[%s278 + $0xfa] sm:$0x3f] %vm7505, %v7452
      %p7552 = scmp.lt.s32.totalorder %s18, 1
      %s7553 = scalar_select %p7552, %s18, 1
      %s7554 = smul.addr %s7553, 32
      %s7555 = smul.addr %s7554, 8
      %s7556 = scalar_lea.vmem %s7, %s7555
      // Predicated region
      $region49: #{tpu_custom_call.1} parent=47 // pred_check
        %p7557 = pneg %p188
      $region50: #{tpu_custom_call.1} parent=47 // pred_check_branch
        %7559 = sbr.rel (%p7557) target = $region52
      $region51: #{tpu_custom_call.1} parent=47 // pred_region
        _
      $region52: #{tpu_custom_call.1} parent=47 // pred_fallthru
        _
    $region48: #{tpu_custom_call.1} parent=5 // pred_fallthru
      _
    %p7560 = scmp.le.s32.totalorder 2, %s13
    // Predicated region
    $region53: #{tpu_custom_call.1} parent=5 // pred_check
      %p7561 = pneg %p7560
    $region54: #{tpu_custom_call.1} parent=5 // pred_check_branch
      %7563 = sbr.rel (%p7561) target = $region56
    $region55: #{tpu_custom_call.1} parent=5 // pred_region
      %s7564 = ssub.s32 %s13, 2
      // Predicated region
      $region57: #{tpu_custom_call.1} parent=55 // pred_check
        %p7565 = pneg %p194
      $region58: #{tpu_custom_call.1} parent=55 // pred_check_branch
        %7567 = sbr.rel (%p7565) target = $region60
      $region59: #{tpu_custom_call.1} parent=55 // pred_region
        %p7568 = scmp.lt.s32.totalorder %s19, 1
        %s7569 = scalar_select %p7568, %s19, 1
        %s7570 = smul.addr %s7569, 32
        %s7571 = smul.addr %s7570, 8
        %s7572 = scalar_lea.vmem %s7, %s7571
      $region60: #{tpu_custom_call.1} parent=55 // pred_fallthru
        _
    $region56: #{tpu_custom_call.1} parent=5 // pred_fallthru
      _
  $region6: #{tpu_custom_call.1} parent=0 // loop_footer
    %s17 = sadd.s32 1, %s13
  $region7: #{tpu_custom_call.1} parent=0 // loop_footer_branch
    %12 = sbr.rel target = $region3
  $region8: #{tpu_custom_call.1} parent=0 // loop_exit
    _

</llo_original>
